<compile_context>
chip_gen: v7x
topology: tpu7x:2x2x1
jax: 0.10.0
libtpu: 0.0.40
codegen_flags: <defaults>
</compile_context>

<pallas_src>
import functools
import math

import jax
import jax.numpy as jnp
from jax.experimental import pallas as pl
from jax.experimental.pallas import tpu as pltpu


def encoder_layer_kernel(x_ref, mask_ref,
                         wqkv_ref, bqkv_ref, hmask_ref,
                         wd_ref, w1_ref, b1_ref, w2_ref, hp_ref,
                         o_ref,
                         *, n_heads, mxu_dtype):
    Bt, S, E = x_ref.shape
    H = wd_ref.shape[0]
    dh = H // n_heads
    R = Bt * S
    f32 = jnp.float32
    scale = f32(1.0 / math.sqrt(dh))

    # --- fused, lane-dense Q/K/V projections: ONE (R,E) @ (E,H) matmul each ---
    xr = x_ref[...].reshape(R, E).astype(mxu_dtype)
    bqkv = bqkv_ref[...]                                            # (3, H) f32
    q3 = (jnp.dot(xr, wqkv_ref[0], preferred_element_type=f32)
          + bqkv[0:1, :]).reshape(Bt, S, H).astype(mxu_dtype)
    k3 = (jnp.dot(xr, wqkv_ref[1], preferred_element_type=f32)
          + bqkv[1:2, :]).reshape(Bt, S, H).astype(mxu_dtype)
    v3 = (jnp.dot(xr, wqkv_ref[2], preferred_element_type=f32)
          + bqkv[2:3, :]).reshape(Bt, S, H).astype(mxu_dtype)

    # --- mask bias (matches AttentionHead.compute_weights, is_decoder=False) ---
    b0 = pl.program_id(0) * Bt
    m = mask_ref[pl.ds(b0, Bt), :]                                  # (Bt, S) f32
    mq = m.reshape(Bt, S, 1)
    mk = m.reshape(Bt, 1, S)
    att_mat = mq * mk
    pad_mat = (1.0 - mq) * (1.0 - mk)
    score_bias = (1.0 - att_mat - pad_mat) * f32(-100000.0)          # (Bt, S, S)

    # --- all heads, lane-dense 3-D einsums (no lane slices, no masked stores) ---
    attn = jnp.zeros((Bt, S, H), dtype=f32)
    for h in range(n_heads):
        hm = hmask_ref[h:h + 1, :].reshape(1, 1, H)     # 0/1 lane mask for head h
        s = jnp.einsum('bqc,bkc->bqk', q3 * hm, k3,
                       preferred_element_type=f32) * scale + score_bias
        s = s - jnp.max(s, axis=-1, keepdims=True)
        p = jnp.exp(s)
        p = p * pl.reciprocal(jnp.sum(p, axis=-1, keepdims=True), approx=True)
        attn = attn + jnp.einsum('bqk,bkc->bqc', p.astype(mxu_dtype), v3 * hm,
                                 preferred_element_type=f32)

    hp = hp_ref[...]                         # (6, H) f32: bd, b2, g1, be1, g2, be2
    bd, b2 = hp[0:1, :], hp[1:2, :]
    g1, be1 = hp[2:3, :], hp[3:4, :]
    g2, be2 = hp[4:5, :], hp[5:6, :]

    # --- multi-head output projection ---
    y = jnp.dot(attn.reshape(R, H).astype(mxu_dtype), wd_ref[...],
                preferred_element_type=f32) + bd

    def layer_norm(z, g, b):
        mu = jnp.mean(z, axis=-1, keepdims=True)
        var = jnp.mean((z - mu) * (z - mu), axis=-1, keepdims=True)
        return (z - mu) * jax.lax.rsqrt(var + f32(1e-5)) * g + b

    # x = x + layer_norm_1(x)   (residual around the LN, as in the PyTorch module)
    y = y + layer_norm(y, g1, be1)

    # FeedForward: Linear -> GELU(exact erf) -> Linear -> Dropout(identity, eval)
    h1 = jnp.dot(y.astype(mxu_dtype), w1_ref[...],
                 preferred_element_type=f32) + b1_ref[...]
    gelu = 0.5 * h1 * (1.0 + jax.lax.erf(h1 * f32(1.0 / math.sqrt(2.0))))
    y = y + jnp.dot(gelu.astype(mxu_dtype), w2_ref[...],
                    preferred_element_type=f32) + b2

    # final layer_norm_2  (output kept f32; could be bf16 if downstream accepts it)
    o_ref[...] = layer_norm(y, g2, be2).reshape(Bt, S, H).astype(o_ref.dtype)


def _pick_batch_block(B, S, target_rows=512, min_grid=2):
    """Largest divisor bt of B with bt*S <= target_rows while keeping at least
    min_grid grid steps (so the parallel axis can feed both v7x TensorCores)."""
    cap = max(1, target_rows // S)
    need = min(min_grid, B)
    best = 1
    for cand in range(1, B + 1):
        if B % cand == 0 and cand <= cap and (B // cand) >= need:
            best = cand
    return best


def _vmem_limit_bytes():
    """Scoped-VMEM limit sized from the actual chip (v5e/v6e: 128 MiB, v7x: 64
    MiB) instead of a hard-coded constant; leaves headroom for the compiler."""
    try:
        cap = int(pltpu.get_tpu_info().vmem_capacity_bytes)
    except Exception:
        cap = 64 * 1024 * 1024
    return max(32 * 1024 * 1024, min(cap - 16 * 1024 * 1024, (cap * 3) // 4))


def transformer_encoder_layer(x, attention_mask, params, *, n_heads,
                              batch_block=None, mxu_dtype=jnp.bfloat16):
    (wqkv, bqkv, wd, w1, b1, w2, hp) = params
    B, S, E = x.shape
    H = wd.shape[0]
    I = w1.shape[1]
    dh = H // n_heads
    assert H % n_heads == 0

    bt = batch_block if batch_block is not None else _pick_batch_block(B, S)
    assert B % bt == 0
    grid = (B // bt,)

    # MXU operands in mxu_dtype (bf16 default); LN/softmax/GELU/bias math in f32.
    wqkv_m = wqkv.astype(mxu_dtype)
    wd_m = wd.astype(mxu_dtype)
    w1_m = w1.astype(mxu_dtype)
    w2_m = w2.astype(mxu_dtype)

    # per-head 0/1 lane masks (n_heads, H): row h has ones on head h's dh columns
    head_masks = jnp.repeat(jnp.eye(n_heads, dtype=jnp.float32),
                            dh, axis=1).astype(mxu_dtype)

    mask2 = attention_mask.astype(jnp.float32)          # (B, S)

    # advisory cost estimate for XLA scheduling
    R = B * S
    wbytes = 2 if mxu_dtype == jnp.bfloat16 else 4
    flops = (2 * R * E * H * 3                           # qkv projections
             + 2 * B * n_heads * S * S * H * 2           # scores + context (masked)
             + 2 * R * H * H                             # attn output dense
             + 2 * R * H * I * 2)                        # ffn
    transcendentals = B * n_heads * S * S + R * I + 2 * R
    bytes_accessed = (wbytes * (wqkv.size + wd.size + w1.size + w2.size)
                      + 4 * (x.size + mask2.size + bqkv.size + b1.size
                             + hp.size + R * H))
    cost = pl.CostEstimate(flops=int(flops), transcendentals=int(transcendentals),
                           bytes_accessed=int(bytes_accessed))

    kernel = functools.partial(encoder_layer_kernel,
                               n_heads=n_heads, mxu_dtype=mxu_dtype)

    def build(single_buffer_weights):
        def const(shape):
            kw = {}
            if single_buffer_weights:
                # constant-index weights never re-DMA -> a second pipeline buffer
                # is pure VMEM waste (matters on v7x's 64 MiB VMEM)
                kw["pipeline_mode"] = pl.Buffered(1)
            return pl.BlockSpec(shape, lambda *_: (0,) * len(shape), **kw)

        return pl.pallas_call(
            kernel,
            out_shape=jax.ShapeDtypeStruct((B, S, H), jnp.float32),
            grid_spec=pltpu.PrefetchScalarGridSpec(
                num_scalar_prefetch=0,
                grid=grid,
                in_specs=[
                    pl.BlockSpec((bt, S, E), lambda b: (b, 0, 0)),   # x block
                    const((B, S)),          # full attention mask (sliced in-kernel)
                    const((3, E, H)),       # fused qkv weights (mxu dtype)
                    const((3, H)),          # fused qkv biases (f32)
                    const((n_heads, H)),    # per-head lane masks
                    const((H, H)),          # attn output dense weight
                    const((H, I)),          # ffn layer_1 weight
                    const((1, I)),          # ffn layer_1 bias
                    const((I, H)),          # ffn layer_2 weight
                    const((6, H)),          # packed: bd, b2, ln1 g/b, ln2 g/b
                ],
                out_specs=pl.BlockSpec((bt, S, H), lambda b: (b, 0, 0)),
            ),
            compiler_params=pltpu.CompilerParams(
                dimension_semantics=("parallel",),
                vmem_limit_bytes=_vmem_limit_bytes(),
            ),
            cost_estimate=cost,
        )

    args = (x, mask2, wqkv_m, bqkv, head_masks, wd_m, w1_m, b1, w2_m, hp)
    try:
        return jax.block_until_ready(build(True)(*args))
    except Exception:
        # pipeline_mode=pl.Buffered(1) not supported on this build/path -> fall
        # back to default double buffering (correctness unaffected).
        return build(False)(*args)


def reference_jax(x, attention_mask, params, n_heads):
    """Pure-JAX f32 reference mirroring the PyTorch module (eval mode)."""
    (wqkv, bqkv, wd, w1, b1, w2, hp) = params
    wq, wk, wv = wqkv[0], wqkv[1], wqkv[2]
    bq, bk, bv = bqkv[0], bqkv[1], bqkv[2]
    bd, b2, g1, be1, g2, be2 = (hp[0], hp[1], hp[2], hp[3], hp[4], hp[5])
    H = wd.shape[0]
    dh = H // n_heads

    m = attention_mask.astype(jnp.float32)
    att_mat = m[:, :, None] * m[:, None, :]
    pad = 1.0 - m
    pad_mat = pad[:, :, None] * pad[:, None, :]
    bias = (1.0 - att_mat - pad_mat) * (-100000.0)

    q = x @ wq + bq
    k = x @ wk + bk
    v = x @ wv + bv
    heads = []
    for h in range(n_heads):
        sl = slice(h * dh, (h + 1) * dh)
        s = jnp.einsum('bqd,bkd->bqk', q[..., sl], k[..., sl]) / math.sqrt(dh) + bias
        w_ = jax.nn.softmax(s, axis=-1)
        heads.append(jnp.einsum('bqk,bkd->bqd', w_, v[..., sl]))
    attn = jnp.concatenate(heads, axis=-1)
    y = attn @ wd + bd

    def ln(z, g, b):
        mu = z.mean(-1, keepdims=True)
        var = ((z - mu) ** 2).mean(-1, keepdims=True)
        return (z - mu) / jnp.sqrt(var + 1e-5) * g + b

    y = y + ln(y, g1, be1)
    h1 = y @ w1 + b1
    gelu = 0.5 * h1 * (1.0 + jax.lax.erf(h1 / jnp.sqrt(2.0)))
    y = y + (gelu @ w2 + b2)
    return ln(y, g2, be2)


def make_params(key, emb_dim, hidden_dim, n_heads, intermediate_dim):
    ks = jax.random.split(key, 12)
    f32 = jnp.float32

    def w(k, shape, scale=0.05):
        return jax.random.normal(k, shape, dtype=f32) * scale

    wqkv = w(ks[0], (3, emb_dim, hidden_dim))
    bqkv = w(ks[1], (3, hidden_dim), 0.02)
    wd = w(ks[2], (hidden_dim, hidden_dim))
    w1 = w(ks[3], (hidden_dim, intermediate_dim))
    b1 = w(ks[4], (1, intermediate_dim), 0.02)
    w2 = w(ks[5], (intermediate_dim, hidden_dim))
    bd = w(ks[6], (1, hidden_dim), 0.02)
    b2 = w(ks[7], (1, hidden_dim), 0.02)
    g1 = 1.0 + w(ks[8], (1, hidden_dim), 0.01)
    be1 = w(ks[9], (1, hidden_dim), 0.01)
    g2 = 1.0 + w(ks[10], (1, hidden_dim), 0.01)
    be2 = w(ks[11], (1, hidden_dim), 0.01)
    hp = jnp.concatenate([bd, b2, g1, be1, g2, be2], axis=0)   # (6, H)
    return (wqkv, bqkv, wd, w1, b1, w2, hp)


if __name__ == "__main__":
    B, S = 2, 8
    emb_dim, hidden_dim, n_heads, intermediate_dim = 32, 32, 4, 64

    key = jax.random.PRNGKey(0)
    kx, kp = jax.random.split(key)
    x = jax.random.normal(kx, (B, S, emb_dim), dtype=jnp.float32)

    # attention mask: batch 0 fully valid, batch 1 has 2 padded trailing positions
    attention_mask = jnp.array(
        [[1.0] * S,
         [1.0] * (S - 2) + [0.0] * 2], dtype=jnp.float32)

    params = make_params(kp, emb_dim, hidden_dim, n_heads, intermediate_dim)
    ref = reference_jax(x, attention_mask, params, n_heads)

    # 1) f32 MXU operands: tight structural/numerical validation (tolerance
    #    covers the approximate-reciprocal softmax normalization).
    out_f32 = transformer_encoder_layer(x, attention_mask, params,
                                        n_heads=n_heads, mxu_dtype=jnp.float32)
    out_f32 = jax.block_until_ready(out_f32)
    assert out_f32.shape == (B, S, hidden_dim)
    diff_f32 = float(jnp.max(jnp.abs(out_f32 - ref)))
    assert diff_f32 < 5e-3, f"f32 max abs diff {diff_f32}"

    # 2) default bf16 MXU operands (production path): coarse sanity bound vs the
    #    f32 reference, reflecting bf16 operand rounding amplified by the LayerNorms.
    out_bf16 = transformer_encoder_layer(x, attention_mask, params, n_heads=n_heads)
    out_bf16 = jax.block_until_ready(out_bf16)
    assert out_bf16.shape == (B, S, hidden_dim)
    diff_bf16 = float(jnp.max(jnp.abs(out_bf16 - ref)))
    assert diff_bf16 < 2e-1, f"bf16 max abs diff {diff_bf16}"

    print("KERNEL_OK")
</pallas_src>

<mosaic_0001>
module attributes {stable_mosaic.version = 11 : i64} {
  func.func @encoder_layer_kernel(%arg0: i32, %arg1: memref<1x8x32xf32, #tpu.memory_space<vmem>>, %arg2: memref<2x8xf32, #tpu.memory_space<vmem>>, %arg3: memref<3x32x32xf32, #tpu.memory_space<vmem>>, %arg4: memref<3x32xf32, #tpu.memory_space<vmem>>, %arg5: memref<4x32xf32, #tpu.memory_space<vmem>>, %arg6: memref<32x32xf32, #tpu.memory_space<vmem>>, %arg7: memref<32x64xf32, #tpu.memory_space<vmem>>, %arg8: memref<1x64xf32, #tpu.memory_space<vmem>>, %arg9: memref<64x32xf32, #tpu.memory_space<vmem>>, %arg10: memref<6x32xf32, #tpu.memory_space<vmem>>, %arg11: memref<1x8x32xf32, #tpu.memory_space<vmem>>) attributes {dimension_semantics = [#tpu.dimension_semantics<parallel>], iteration_bounds = array<i64: 2>, scalar_prefetch = 0 : i64, scratch_operands = 0 : i64, tpu.core_type = #tpu.core_type<tc>, window_params = [{transform_indices = @transform_0, window_bounds = array<i64: 1, 8, 32>}, {pipeline_mode = #tpu.pipeline_mode<synchronous>, transform_indices = @transform_1, window_bounds = array<i64: 2, 8>}, {pipeline_mode = #tpu.pipeline_mode<synchronous>, transform_indices = @transform_2, window_bounds = array<i64: 3, 32, 32>}, {pipeline_mode = #tpu.pipeline_mode<synchronous>, transform_indices = @transform_3, window_bounds = array<i64: 3, 32>}, {pipeline_mode = #tpu.pipeline_mode<synchronous>, transform_indices = @transform_4, window_bounds = array<i64: 4, 32>}, {pipeline_mode = #tpu.pipeline_mode<synchronous>, transform_indices = @transform_5, window_bounds = array<i64: 32, 32>}, {pipeline_mode = #tpu.pipeline_mode<synchronous>, transform_indices = @transform_6, window_bounds = array<i64: 32, 64>}, {pipeline_mode = #tpu.pipeline_mode<synchronous>, transform_indices = @transform_7, window_bounds = array<i64: 1, 64>}, {pipeline_mode = #tpu.pipeline_mode<synchronous>, transform_indices = @transform_8, window_bounds = array<i64: 64, 32>}, {pipeline_mode = #tpu.pipeline_mode<synchronous>, transform_indices = @transform_9, window_bounds = array<i64: 6, 32>}, {transform_indices = @transform_10, window_bounds = array<i64: 1, 8, 32>}]} {
    %c0 = arith.constant 0 : index
    %c0_0 = arith.constant 0 : index
    %c0_1 = arith.constant 0 : index
    %0 = vector.load %arg1[%c0, %c0_0, %c0_1] : memref<1x8x32xf32, #tpu.memory_space<vmem>>, vector<1x8x32xf32>
    %1 = vector.shape_cast %0 : vector<1x8x32xf32> to vector<8x32xf32>
    %c0_2 = arith.constant 0 : index
    %c0_3 = arith.constant 0 : index
    %2 = vector.load %arg4[%c0_2, %c0_3] : memref<3x32xf32, #tpu.memory_space<vmem>>, vector<3x32xf32>
    %c0_4 = arith.constant 0 : index
    %c0_5 = arith.constant 0 : index
    %c0_6 = arith.constant 0 : index
    %3 = vector.load %arg3[%c0_4, %c0_5, %c0_6] : memref<3x32x32xf32, #tpu.memory_space<vmem>>, vector<1x32x32xf32>
    %4 = vector.shape_cast %3 : vector<1x32x32xf32> to vector<32x32xf32>
    %cst = arith.constant dense<0.000000e+00> : vector<8x32xf32>
    %5 = tpu.matmul %1, %4, %cst {dimension_numbers = #tpu.dot_dimension_numbers<[1], [0], [0], [1], [0, 0, 1, 1], [], []>} : vector<8x32xf32>, vector<32x32xf32>, vector<8x32xf32> -> vector<8x32xf32>
    %6 = vector.extract_strided_slice %2 {offsets = [0, 0], sizes = [1, 32], strides = [1, 1]} : vector<3x32xf32> to vector<1x32xf32>
    %7 = vector.broadcast %6 : vector<1x32xf32> to vector<8x32xf32>
    %8 = arith.addf %5, %7 : vector<8x32xf32>
    %9 = vector.shape_cast %8 : vector<8x32xf32> to vector<1x8x32xf32>
    %c1 = arith.constant 1 : index
    %c0_7 = arith.constant 0 : index
    %c0_8 = arith.constant 0 : index
    %10 = vector.load %arg3[%c1, %c0_7, %c0_8] : memref<3x32x32xf32, #tpu.memory_space<vmem>>, vector<1x32x32xf32>
    %11 = vector.shape_cast %10 : vector<1x32x32xf32> to vector<32x32xf32>
    %cst_9 = arith.constant dense<0.000000e+00> : vector<8x32xf32>
    %12 = tpu.matmul %1, %11, %cst_9 {dimension_numbers = #tpu.dot_dimension_numbers<[1], [0], [0], [1], [0, 0, 1, 1], [], []>} : vector<8x32xf32>, vector<32x32xf32>, vector<8x32xf32> -> vector<8x32xf32>
    %13 = vector.extract_strided_slice %2 {offsets = [1, 0], sizes = [1, 32], strides = [1, 1]} : vector<3x32xf32> to vector<1x32xf32>
    %14 = vector.broadcast %13 : vector<1x32xf32> to vector<8x32xf32>
    %15 = arith.addf %12, %14 : vector<8x32xf32>
    %16 = vector.shape_cast %15 : vector<8x32xf32> to vector<1x8x32xf32>
    %c2 = arith.constant 2 : index
    %c0_10 = arith.constant 0 : index
    %c0_11 = arith.constant 0 : index
    %17 = vector.load %arg3[%c2, %c0_10, %c0_11] : memref<3x32x32xf32, #tpu.memory_space<vmem>>, vector<1x32x32xf32>
    %18 = vector.shape_cast %17 : vector<1x32x32xf32> to vector<32x32xf32>
    %cst_12 = arith.constant dense<0.000000e+00> : vector<8x32xf32>
    %19 = tpu.matmul %1, %18, %cst_12 {dimension_numbers = #tpu.dot_dimension_numbers<[1], [0], [0], [1], [0, 0, 1, 1], [], []>} : vector<8x32xf32>, vector<32x32xf32>, vector<8x32xf32> -> vector<8x32xf32>
    %20 = vector.extract_strided_slice %2 {offsets = [2, 0], sizes = [1, 32], strides = [1, 1]} : vector<3x32xf32> to vector<1x32xf32>
    %21 = vector.broadcast %20 : vector<1x32xf32> to vector<8x32xf32>
    %22 = arith.addf %19, %21 : vector<8x32xf32>
    %23 = vector.shape_cast %22 : vector<8x32xf32> to vector<1x8x32xf32>
    %c1_i32 = arith.constant 1 : i32
    %24 = arith.muli %arg0, %c1_i32 : i32
    %25 = arith.index_cast %24 : i32 to index
    %c0_13 = arith.constant 0 : index
    %26 = vector.load %arg2[%25, %c0_13] : memref<2x8xf32, #tpu.memory_space<vmem>>, vector<1x8xf32>
    %27 = vector.shape_cast %26 : vector<1x8xf32> to vector<1x8x1xf32>
    %28 = vector.shape_cast %26 : vector<1x8xf32> to vector<1x1x8xf32>
    %29 = vector.broadcast %27 : vector<1x8x1xf32> to vector<1x8x8xf32>
    %30 = vector.broadcast %28 : vector<1x1x8xf32> to vector<1x8x8xf32>
    %31 = arith.mulf %29, %30 : vector<1x8x8xf32>
    %cst_14 = arith.constant 1.000000e+00 : f32
    %32 = vector.broadcast %cst_14 : f32 to vector<1x8x1xf32>
    %33 = arith.subf %32, %27 : vector<1x8x1xf32>
    %cst_15 = arith.constant 1.000000e+00 : f32
    %34 = vector.broadcast %cst_15 : f32 to vector<1x1x8xf32>
    %35 = arith.subf %34, %28 : vector<1x1x8xf32>
    %36 = vector.broadcast %33 : vector<1x8x1xf32> to vector<1x8x8xf32>
    %37 = vector.broadcast %35 : vector<1x1x8xf32> to vector<1x8x8xf32>
    %38 = arith.mulf %36, %37 : vector<1x8x8xf32>
    %cst_16 = arith.constant 1.000000e+00 : f32
    %39 = vector.broadcast %cst_16 : f32 to vector<1x8x8xf32>
    %40 = arith.subf %39, %31 : vector<1x8x8xf32>
    %41 = arith.subf %40, %38 : vector<1x8x8xf32>
    %cst_17 = arith.constant -1.000000e+05 : f32
    %42 = vector.broadcast %cst_17 : f32 to vector<1x8x8xf32>
    %43 = arith.mulf %41, %42 : vector<1x8x8xf32>
    %cst_18 = arith.constant 0.000000e+00 : f32
    %44 = vector.broadcast %cst_18 : f32 to vector<1x8x32xf32>
    %c0_19 = arith.constant 0 : index
    %c0_20 = arith.constant 0 : index
    %45 = vector.load %arg5[%c0_19, %c0_20] : memref<4x32xf32, #tpu.memory_space<vmem>>, vector<1x32xf32>
    %46 = vector.shape_cast %45 : vector<1x32xf32> to vector<1x1x32xf32>
    %47 = vector.broadcast %46 : vector<1x1x32xf32> to vector<1x8x32xf32>
    %48 = arith.mulf %9, %47 : vector<1x8x32xf32>
    "tpu.trace_start"() <{level = 10 : i32, message = "bqc,bkc->bqk"}> : () -> ()
    %cst_21 = arith.constant dense<0.000000e+00> : vector<1x8x8xf32>
    %49 = tpu.matmul %48, %16, %cst_21 {dimension_numbers = #tpu.dot_dimension_numbers<[2], [2], [1], [1], [0, 0, 0, 1, 1, 1], [0], [0]>} : vector<1x8x32xf32>, vector<1x8x32xf32>, vector<1x8x8xf32> -> vector<1x8x8xf32>
    "tpu.trace_stop"() : () -> ()
    %cst_22 = arith.constant 0.353553385 : f32
    %50 = vector.broadcast %cst_22 : f32 to vector<1x8x8xf32>
    %51 = arith.mulf %49, %50 : vector<1x8x8xf32>
    %52 = arith.addf %51, %43 : vector<1x8x8xf32>
    %cst_23 = arith.constant dense<0xFF800000> : vector<1x8xf32>
    %53 = vector.multi_reduction <maximumf>, %52, %cst_23 [2] : vector<1x8x8xf32> to vector<1x8xf32>
    %54 = vector.shape_cast %53 : vector<1x8xf32> to vector<1x8x1xf32>
    %55 = vector.broadcast %54 : vector<1x8x1xf32> to vector<1x8x8xf32>
    %56 = arith.subf %52, %55 : vector<1x8x8xf32>
    %57 = math.exp %56 : vector<1x8x8xf32>
    %cst_24 = arith.constant dense<0.000000e+00> : vector<1x8xf32>
    %58 = vector.multi_reduction <add>, %57, %cst_24 [2] : vector<1x8x8xf32> to vector<1x8xf32>
    %59 = vector.shape_cast %58 : vector<1x8xf32> to vector<1x8x1xf32>
    %60 = tpu.reciprocal %59 {approx = true} : vector<1x8x1xf32> -> vector<1x8x1xf32>
    %61 = vector.broadcast %60 : vector<1x8x1xf32> to vector<1x8x8xf32>
    %62 = arith.mulf %57, %61 : vector<1x8x8xf32>
    %63 = vector.broadcast %46 : vector<1x1x32xf32> to vector<1x8x32xf32>
    %64 = arith.mulf %23, %63 : vector<1x8x32xf32>
    "tpu.trace_start"() <{level = 10 : i32, message = "bqk,bkc->bqc"}> : () -> ()
    %cst_25 = arith.constant dense<0.000000e+00> : vector<1x8x32xf32>
    %65 = tpu.matmul %62, %64, %cst_25 {dimension_numbers = #tpu.dot_dimension_numbers<[2], [1], [1], [2], [0, 0, 0, 1, 1, 2], [0], [0]>} : vector<1x8x8xf32>, vector<1x8x32xf32>, vector<1x8x32xf32> -> vector<1x8x32xf32>
    "tpu.trace_stop"() : () -> ()
    %66 = arith.addf %44, %65 : vector<1x8x32xf32>
    %c1_26 = arith.constant 1 : index
    %c0_27 = arith.constant 0 : index
    %67 = vector.load %arg5[%c1_26, %c0_27] : memref<4x32xf32, #tpu.memory_space<vmem>>, vector<1x32xf32>
    %68 = vector.shape_cast %67 : vector<1x32xf32> to vector<1x1x32xf32>
    %69 = vector.broadcast %68 : vector<1x1x32xf32> to vector<1x8x32xf32>
    %70 = arith.mulf %9, %69 : vector<1x8x32xf32>
    "tpu.trace_start"() <{level = 10 : i32, message = "bqc,bkc->bqk"}> : () -> ()
    %cst_28 = arith.constant dense<0.000000e+00> : vector<1x8x8xf32>
    %71 = tpu.matmul %70, %16, %cst_28 {dimension_numbers = #tpu.dot_dimension_numbers<[2], [2], [1], [1], [0, 0, 0, 1, 1, 1], [0], [0]>} : vector<1x8x32xf32>, vector<1x8x32xf32>, vector<1x8x8xf32> -> vector<1x8x8xf32>
    "tpu.trace_stop"() : () -> ()
    %cst_29 = arith.constant 0.353553385 : f32
    %72 = vector.broadcast %cst_29 : f32 to vector<1x8x8xf32>
    %73 = arith.mulf %71, %72 : vector<1x8x8xf32>
    %74 = arith.addf %73, %43 : vector<1x8x8xf32>
    %cst_30 = arith.constant dense<0xFF800000> : vector<1x8xf32>
    %75 = vector.multi_reduction <maximumf>, %74, %cst_30 [2] : vector<1x8x8xf32> to vector<1x8xf32>
    %76 = vector.shape_cast %75 : vector<1x8xf32> to vector<1x8x1xf32>
    %77 = vector.broadcast %76 : vector<1x8x1xf32> to vector<1x8x8xf32>
    %78 = arith.subf %74, %77 : vector<1x8x8xf32>
    %79 = math.exp %78 : vector<1x8x8xf32>
    %cst_31 = arith.constant dense<0.000000e+00> : vector<1x8xf32>
    %80 = vector.multi_reduction <add>, %79, %cst_31 [2] : vector<1x8x8xf32> to vector<1x8xf32>
    %81 = vector.shape_cast %80 : vector<1x8xf32> to vector<1x8x1xf32>
    %82 = tpu.reciprocal %81 {approx = true} : vector<1x8x1xf32> -> vector<1x8x1xf32>
    %83 = vector.broadcast %82 : vector<1x8x1xf32> to vector<1x8x8xf32>
    %84 = arith.mulf %79, %83 : vector<1x8x8xf32>
    %85 = vector.broadcast %68 : vector<1x1x32xf32> to vector<1x8x32xf32>
    %86 = arith.mulf %23, %85 : vector<1x8x32xf32>
    "tpu.trace_start"() <{level = 10 : i32, message = "bqk,bkc->bqc"}> : () -> ()
    %cst_32 = arith.constant dense<0.000000e+00> : vector<1x8x32xf32>
    %87 = tpu.matmul %84, %86, %cst_32 {dimension_numbers = #tpu.dot_dimension_numbers<[2], [1], [1], [2], [0, 0, 0, 1, 1, 2], [0], [0]>} : vector<1x8x8xf32>, vector<1x8x32xf32>, vector<1x8x32xf32> -> vector<1x8x32xf32>
    "tpu.trace_stop"() : () -> ()
    %88 = arith.addf %66, %87 : vector<1x8x32xf32>
    %c2_33 = arith.constant 2 : index
    %c0_34 = arith.constant 0 : index
    %89 = vector.load %arg5[%c2_33, %c0_34] : memref<4x32xf32, #tpu.memory_space<vmem>>, vector<1x32xf32>
    %90 = vector.shape_cast %89 : vector<1x32xf32> to vector<1x1x32xf32>
    %91 = vector.broadcast %90 : vector<1x1x32xf32> to vector<1x8x32xf32>
    %92 = arith.mulf %9, %91 : vector<1x8x32xf32>
    "tpu.trace_start"() <{level = 10 : i32, message = "bqc,bkc->bqk"}> : () -> ()
    %cst_35 = arith.constant dense<0.000000e+00> : vector<1x8x8xf32>
    %93 = tpu.matmul %92, %16, %cst_35 {dimension_numbers = #tpu.dot_dimension_numbers<[2], [2], [1], [1], [0, 0, 0, 1, 1, 1], [0], [0]>} : vector<1x8x32xf32>, vector<1x8x32xf32>, vector<1x8x8xf32> -> vector<1x8x8xf32>
    "tpu.trace_stop"() : () -> ()
    %cst_36 = arith.constant 0.353553385 : f32
    %94 = vector.broadcast %cst_36 : f32 to vector<1x8x8xf32>
    %95 = arith.mulf %93, %94 : vector<1x8x8xf32>
    %96 = arith.addf %95, %43 : vector<1x8x8xf32>
    %cst_37 = arith.constant dense<0xFF800000> : vector<1x8xf32>
    %97 = vector.multi_reduction <maximumf>, %96, %cst_37 [2] : vector<1x8x8xf32> to vector<1x8xf32>
    %98 = vector.shape_cast %97 : vector<1x8xf32> to vector<1x8x1xf32>
    %99 = vector.broadcast %98 : vector<1x8x1xf32> to vector<1x8x8xf32>
    %100 = arith.subf %96, %99 : vector<1x8x8xf32>
    %101 = math.exp %100 : vector<1x8x8xf32>
    %cst_38 = arith.constant dense<0.000000e+00> : vector<1x8xf32>
    %102 = vector.multi_reduction <add>, %101, %cst_38 [2] : vector<1x8x8xf32> to vector<1x8xf32>
    %103 = vector.shape_cast %102 : vector<1x8xf32> to vector<1x8x1xf32>
    %104 = tpu.reciprocal %103 {approx = true} : vector<1x8x1xf32> -> vector<1x8x1xf32>
    %105 = vector.broadcast %104 : vector<1x8x1xf32> to vector<1x8x8xf32>
    %106 = arith.mulf %101, %105 : vector<1x8x8xf32>
    %107 = vector.broadcast %90 : vector<1x1x32xf32> to vector<1x8x32xf32>
    %108 = arith.mulf %23, %107 : vector<1x8x32xf32>
    "tpu.trace_start"() <{level = 10 : i32, message = "bqk,bkc->bqc"}> : () -> ()
    %cst_39 = arith.constant dense<0.000000e+00> : vector<1x8x32xf32>
    %109 = tpu.matmul %106, %108, %cst_39 {dimension_numbers = #tpu.dot_dimension_numbers<[2], [1], [1], [2], [0, 0, 0, 1, 1, 2], [0], [0]>} : vector<1x8x8xf32>, vector<1x8x32xf32>, vector<1x8x32xf32> -> vector<1x8x32xf32>
    "tpu.trace_stop"() : () -> ()
    %110 = arith.addf %88, %109 : vector<1x8x32xf32>
    %c3 = arith.constant 3 : index
    %c0_40 = arith.constant 0 : index
    %111 = vector.load %arg5[%c3, %c0_40] : memref<4x32xf32, #tpu.memory_space<vmem>>, vector<1x32xf32>
    %112 = vector.shape_cast %111 : vector<1x32xf32> to vector<1x1x32xf32>
    %113 = vector.broadcast %112 : vector<1x1x32xf32> to vector<1x8x32xf32>
    %114 = arith.mulf %9, %113 : vector<1x8x32xf32>
    "tpu.trace_start"() <{level = 10 : i32, message = "bqc,bkc->bqk"}> : () -> ()
    %cst_41 = arith.constant dense<0.000000e+00> : vector<1x8x8xf32>
    %115 = tpu.matmul %114, %16, %cst_41 {dimension_numbers = #tpu.dot_dimension_numbers<[2], [2], [1], [1], [0, 0, 0, 1, 1, 1], [0], [0]>} : vector<1x8x32xf32>, vector<1x8x32xf32>, vector<1x8x8xf32> -> vector<1x8x8xf32>
    "tpu.trace_stop"() : () -> ()
    %cst_42 = arith.constant 0.353553385 : f32
    %116 = vector.broadcast %cst_42 : f32 to vector<1x8x8xf32>
    %117 = arith.mulf %115, %116 : vector<1x8x8xf32>
    %118 = arith.addf %117, %43 : vector<1x8x8xf32>
    %cst_43 = arith.constant dense<0xFF800000> : vector<1x8xf32>
    %119 = vector.multi_reduction <maximumf>, %118, %cst_43 [2] : vector<1x8x8xf32> to vector<1x8xf32>
    %120 = vector.shape_cast %119 : vector<1x8xf32> to vector<1x8x1xf32>
    %121 = vector.broadcast %120 : vector<1x8x1xf32> to vector<1x8x8xf32>
    %122 = arith.subf %118, %121 : vector<1x8x8xf32>
    %123 = math.exp %122 : vector<1x8x8xf32>
    %cst_44 = arith.constant dense<0.000000e+00> : vector<1x8xf32>
    %124 = vector.multi_reduction <add>, %123, %cst_44 [2] : vector<1x8x8xf32> to vector<1x8xf32>
    %125 = vector.shape_cast %124 : vector<1x8xf32> to vector<1x8x1xf32>
    %126 = tpu.reciprocal %125 {approx = true} : vector<1x8x1xf32> -> vector<1x8x1xf32>
    %127 = vector.broadcast %126 : vector<1x8x1xf32> to vector<1x8x8xf32>
    %128 = arith.mulf %123, %127 : vector<1x8x8xf32>
    %129 = vector.broadcast %112 : vector<1x1x32xf32> to vector<1x8x32xf32>
    %130 = arith.mulf %23, %129 : vector<1x8x32xf32>
    "tpu.trace_start"() <{level = 10 : i32, message = "bqk,bkc->bqc"}> : () -> ()
    %cst_45 = arith.constant dense<0.000000e+00> : vector<1x8x32xf32>
    %131 = tpu.matmul %128, %130, %cst_45 {dimension_numbers = #tpu.dot_dimension_numbers<[2], [1], [1], [2], [0, 0, 0, 1, 1, 2], [0], [0]>} : vector<1x8x8xf32>, vector<1x8x32xf32>, vector<1x8x32xf32> -> vector<1x8x32xf32>
    "tpu.trace_stop"() : () -> ()
    %132 = arith.addf %110, %131 : vector<1x8x32xf32>
    %c0_46 = arith.constant 0 : index
    %c0_47 = arith.constant 0 : index
    %133 = vector.load %arg10[%c0_46, %c0_47] : memref<6x32xf32, #tpu.memory_space<vmem>>, vector<6x32xf32>
    %134 = vector.extract_strided_slice %133 {offsets = [0, 0], sizes = [1, 32], strides = [1, 1]} : vector<6x32xf32> to vector<1x32xf32>
    %135 = vector.extract_strided_slice %133 {offsets = [1, 0], sizes = [1, 32], strides = [1, 1]} : vector<6x32xf32> to vector<1x32xf32>
    %136 = vector.extract_strided_slice %133 {offsets = [2, 0], sizes = [1, 32], strides = [1, 1]} : vector<6x32xf32> to vector<1x32xf32>
    %137 = vector.extract_strided_slice %133 {offsets = [3, 0], sizes = [1, 32], strides = [1, 1]} : vector<6x32xf32> to vector<1x32xf32>
    %138 = vector.extract_strided_slice %133 {offsets = [4, 0], sizes = [1, 32], strides = [1, 1]} : vector<6x32xf32> to vector<1x32xf32>
    %139 = vector.extract_strided_slice %133 {offsets = [5, 0], sizes = [1, 32], strides = [1, 1]} : vector<6x32xf32> to vector<1x32xf32>
    %140 = vector.shape_cast %132 : vector<1x8x32xf32> to vector<8x32xf32>
    %c0_48 = arith.constant 0 : index
    %c0_49 = arith.constant 0 : index
    %141 = vector.load %arg6[%c0_48, %c0_49] : memref<32x32xf32, #tpu.memory_space<vmem>>, vector<32x32xf32>
    %cst_50 = arith.constant dense<0.000000e+00> : vector<8x32xf32>
    %142 = tpu.matmul %140, %141, %cst_50 {dimension_numbers = #tpu.dot_dimension_numbers<[1], [0], [0], [1], [0, 0, 1, 1], [], []>} : vector<8x32xf32>, vector<32x32xf32>, vector<8x32xf32> -> vector<8x32xf32>
    %143 = vector.broadcast %134 : vector<1x32xf32> to vector<8x32xf32>
    %144 = arith.addf %142, %143 : vector<8x32xf32>
    %cst_51 = arith.constant dense<0.000000e+00> : vector<8xf32>
    %145 = vector.multi_reduction <add>, %144, %cst_51 [1] : vector<8x32xf32> to vector<8xf32>
    %146 = vector.shape_cast %145 : vector<8xf32> to vector<8x1xf32>
    %cst_52 = arith.constant 3.200000e+01 : f32
    %147 = vector.broadcast %cst_52 : f32 to vector<8x1xf32>
    %148 = arith.divf %146, %147 : vector<8x1xf32>
    %149 = vector.broadcast %148 : vector<8x1xf32> to vector<8x32xf32>
    %150 = arith.subf %144, %149 : vector<8x32xf32>
    %151 = vector.broadcast %148 : vector<8x1xf32> to vector<8x32xf32>
    %152 = arith.subf %144, %151 : vector<8x32xf32>
    %153 = arith.mulf %150, %152 : vector<8x32xf32>
    %cst_53 = arith.constant dense<0.000000e+00> : vector<8xf32>
    %154 = vector.multi_reduction <add>, %153, %cst_53 [1] : vector<8x32xf32> to vector<8xf32>
    %155 = vector.shape_cast %154 : vector<8xf32> to vector<8x1xf32>
    %cst_54 = arith.constant 3.200000e+01 : f32
    %156 = vector.broadcast %cst_54 : f32 to vector<8x1xf32>
    %157 = arith.divf %155, %156 : vector<8x1xf32>
    %158 = vector.broadcast %148 : vector<8x1xf32> to vector<8x32xf32>
    %159 = arith.subf %144, %158 : vector<8x32xf32>
    %cst_55 = arith.constant 9.99999974E-6 : f32
    %160 = vector.broadcast %cst_55 : f32 to vector<8x1xf32>
    %161 = arith.addf %157, %160 : vector<8x1xf32>
    %162 = math.rsqrt %161 : vector<8x1xf32>
    %163 = vector.broadcast %162 : vector<8x1xf32> to vector<8x32xf32>
    %164 = arith.mulf %159, %163 : vector<8x32xf32>
    %165 = vector.broadcast %136 : vector<1x32xf32> to vector<8x32xf32>
    %166 = arith.mulf %164, %165 : vector<8x32xf32>
    %167 = vector.broadcast %137 : vector<1x32xf32> to vector<8x32xf32>
    %168 = arith.addf %166, %167 : vector<8x32xf32>
    %169 = arith.addf %144, %168 : vector<8x32xf32>
    %c0_56 = arith.constant 0 : index
    %c0_57 = arith.constant 0 : index
    %170 = vector.load %arg7[%c0_56, %c0_57] : memref<32x64xf32, #tpu.memory_space<vmem>>, vector<32x64xf32>
    %cst_58 = arith.constant dense<0.000000e+00> : vector<8x64xf32>
    %171 = tpu.matmul %169, %170, %cst_58 {dimension_numbers = #tpu.dot_dimension_numbers<[1], [0], [0], [1], [0, 0, 1, 1], [], []>} : vector<8x32xf32>, vector<32x64xf32>, vector<8x64xf32> -> vector<8x64xf32>
    %c0_59 = arith.constant 0 : index
    %c0_60 = arith.constant 0 : index
    %172 = vector.load %arg8[%c0_59, %c0_60] : memref<1x64xf32, #tpu.memory_space<vmem>>, vector<1x64xf32>
    %173 = vector.broadcast %172 : vector<1x64xf32> to vector<8x64xf32>
    %174 = arith.addf %171, %173 : vector<8x64xf32>
    %cst_61 = arith.constant 5.000000e-01 : f32
    %175 = vector.broadcast %cst_61 : f32 to vector<8x64xf32>
    %176 = arith.mulf %175, %174 : vector<8x64xf32>
    %cst_62 = arith.constant 0.707106769 : f32
    %177 = vector.broadcast %cst_62 : f32 to vector<8x64xf32>
    %178 = arith.mulf %174, %177 : vector<8x64xf32>
    %179 = math.erf %178 : vector<8x64xf32>
    %cst_63 = arith.constant 1.000000e+00 : f32
    %180 = vector.broadcast %cst_63 : f32 to vector<8x64xf32>
    %181 = arith.addf %180, %179 : vector<8x64xf32>
    %182 = arith.mulf %176, %181 : vector<8x64xf32>
    %c0_64 = arith.constant 0 : index
    %c0_65 = arith.constant 0 : index
    %183 = vector.load %arg9[%c0_64, %c0_65] : memref<64x32xf32, #tpu.memory_space<vmem>>, vector<64x32xf32>
    %cst_66 = arith.constant dense<0.000000e+00> : vector<8x32xf32>
    %184 = tpu.matmul %182, %183, %cst_66 {dimension_numbers = #tpu.dot_dimension_numbers<[1], [0], [0], [1], [0, 0, 1, 1], [], []>} : vector<8x64xf32>, vector<64x32xf32>, vector<8x32xf32> -> vector<8x32xf32>
    %185 = arith.addf %169, %184 : vector<8x32xf32>
    %186 = vector.broadcast %135 : vector<1x32xf32> to vector<8x32xf32>
    %187 = arith.addf %185, %186 : vector<8x32xf32>
    %cst_67 = arith.constant dense<0.000000e+00> : vector<8xf32>
    %188 = vector.multi_reduction <add>, %187, %cst_67 [1] : vector<8x32xf32> to vector<8xf32>
    %189 = vector.shape_cast %188 : vector<8xf32> to vector<8x1xf32>
    %cst_68 = arith.constant 3.200000e+01 : f32
    %190 = vector.broadcast %cst_68 : f32 to vector<8x1xf32>
    %191 = arith.divf %189, %190 : vector<8x1xf32>
    %192 = vector.broadcast %191 : vector<8x1xf32> to vector<8x32xf32>
    %193 = arith.subf %187, %192 : vector<8x32xf32>
    %194 = vector.broadcast %191 : vector<8x1xf32> to vector<8x32xf32>
    %195 = arith.subf %187, %194 : vector<8x32xf32>
    %196 = arith.mulf %193, %195 : vector<8x32xf32>
    %cst_69 = arith.constant dense<0.000000e+00> : vector<8xf32>
    %197 = vector.multi_reduction <add>, %196, %cst_69 [1] : vector<8x32xf32> to vector<8xf32>
    %198 = vector.shape_cast %197 : vector<8xf32> to vector<8x1xf32>
    %cst_70 = arith.constant 3.200000e+01 : f32
    %199 = vector.broadcast %cst_70 : f32 to vector<8x1xf32>
    %200 = arith.divf %198, %199 : vector<8x1xf32>
    %201 = vector.broadcast %191 : vector<8x1xf32> to vector<8x32xf32>
    %202 = arith.subf %187, %201 : vector<8x32xf32>
    %cst_71 = arith.constant 9.99999974E-6 : f32
    %203 = vector.broadcast %cst_71 : f32 to vector<8x1xf32>
    %204 = arith.addf %200, %203 : vector<8x1xf32>
    %205 = math.rsqrt %204 : vector<8x1xf32>
    %206 = vector.broadcast %205 : vector<8x1xf32> to vector<8x32xf32>
    %207 = arith.mulf %202, %206 : vector<8x32xf32>
    %208 = vector.broadcast %138 : vector<1x32xf32> to vector<8x32xf32>
    %209 = arith.mulf %207, %208 : vector<8x32xf32>
    %210 = vector.broadcast %139 : vector<1x32xf32> to vector<8x32xf32>
    %211 = arith.addf %209, %210 : vector<8x32xf32>
    %212 = vector.shape_cast %211 : vector<8x32xf32> to vector<1x8x32xf32>
    %c0_72 = arith.constant 0 : index
    %c0_73 = arith.constant 0 : index
    %c0_74 = arith.constant 0 : index
    %213 = vector.load %arg11[%c0_72, %c0_73, %c0_74] : memref<1x8x32xf32, #tpu.memory_space<vmem>>, vector<1x8x32xf32>
    tpu.vector_store %arg11[%c0_72, %c0_73, %c0_74], %212 {strides = array<i32>} : memref<1x8x32xf32, #tpu.memory_space<vmem>>, vector<1x8x32xf32>,
    return
  }
  func.func @transform_0(%arg0: i32) -> (i32, i32, i32) {
    %c0_i32 = arith.constant 0 : i32
    %c0_i32_0 = arith.constant 0 : i32
    %c0_i32_1 = arith.constant 0 : i32
    return %arg0, %c0_i32, %c0_i32_0 : i32, i32, i32
  }
  func.func @transform_1(%arg0: i32) -> (i32, i32) {
    %c0_i32 = arith.constant 0 : i32
    %c0_i32_0 = arith.constant 0 : i32
    %c0_i32_1 = arith.constant 0 : i32
    return %c0_i32, %c0_i32_0 : i32, i32
  }
  func.func @transform_2(%arg0: i32) -> (i32, i32, i32) {
    %c0_i32 = arith.constant 0 : i32
    %c0_i32_0 = arith.constant 0 : i32
    %c0_i32_1 = arith.constant 0 : i32
    %c0_i32_2 = arith.constant 0 : i32
    return %c0_i32, %c0_i32_0, %c0_i32_1 : i32, i32, i32
  }
  func.func @transform_3(%arg0: i32) -> (i32, i32) {
    %c0_i32 = arith.constant 0 : i32
    %c0_i32_0 = arith.constant 0 : i32
    %c0_i32_1 = arith.constant 0 : i32
    return %c0_i32, %c0_i32_0 : i32, i32
  }
  func.func @transform_4(%arg0: i32) -> (i32, i32) {
    %c0_i32 = arith.constant 0 : i32
    %c0_i32_0 = arith.constant 0 : i32
    %c0_i32_1 = arith.constant 0 : i32
    return %c0_i32, %c0_i32_0 : i32, i32
  }
  func.func @transform_5(%arg0: i32) -> (i32, i32) {
    %c0_i32 = arith.constant 0 : i32
    %c0_i32_0 = arith.constant 0 : i32
    %c0_i32_1 = arith.constant 0 : i32
    return %c0_i32, %c0_i32_0 : i32, i32
  }
  func.func @transform_6(%arg0: i32) -> (i32, i32) {
    %c0_i32 = arith.constant 0 : i32
    %c0_i32_0 = arith.constant 0 : i32
    %c0_i32_1 = arith.constant 0 : i32
    return %c0_i32, %c0_i32_0 : i32, i32
  }
  func.func @transform_7(%arg0: i32) -> (i32, i32) {
    %c0_i32 = arith.constant 0 : i32
    %c0_i32_0 = arith.constant 0 : i32
    %c0_i32_1 = arith.constant 0 : i32
    return %c0_i32, %c0_i32_0 : i32, i32
  }
  func.func @transform_8(%arg0: i32) -> (i32, i32) {
    %c0_i32 = arith.constant 0 : i32
    %c0_i32_0 = arith.constant 0 : i32
    %c0_i32_1 = arith.constant 0 : i32
    return %c0_i32, %c0_i32_0 : i32, i32
  }
  func.func @transform_9(%arg0: i32) -> (i32, i32) {
    %c0_i32 = arith.constant 0 : i32
    %c0_i32_0 = arith.constant 0 : i32
    %c0_i32_1 = arith.constant 0 : i32
    return %c0_i32, %c0_i32_0 : i32, i32
  }
  func.func @transform_10(%arg0: i32) -> (i32, i32, i32) {
    %c0_i32 = arith.constant 0 : i32
    %c0_i32_0 = arith.constant 0 : i32
    %c0_i32_1 = arith.constant 0 : i32
    return %arg0, %c0_i32, %c0_i32_0 : i32, i32, i32
  }
}

module attributes {stable_mosaic.version = 11 : i64} {
  func.func @encoder_layer_kernel(%arg0: i32, %arg1: memref<1x8x32xf32, #tpu.memory_space<vmem>>, %arg2: memref<2x8xf32, #tpu.memory_space<vmem>>, %arg3: memref<3x32x32xf32, #tpu.memory_space<vmem>>, %arg4: memref<3x32xf32, #tpu.memory_space<vmem>>, %arg5: memref<4x32xf32, #tpu.memory_space<vmem>>, %arg6: memref<32x32xf32, #tpu.memory_space<vmem>>, %arg7: memref<32x64xf32, #tpu.memory_space<vmem>>, %arg8: memref<1x64xf32, #tpu.memory_space<vmem>>, %arg9: memref<64x32xf32, #tpu.memory_space<vmem>>, %arg10: memref<6x32xf32, #tpu.memory_space<vmem>>, %arg11: memref<1x8x32xf32, #tpu.memory_space<vmem>>) attributes {dimension_semantics = [#tpu.dimension_semantics<parallel>], iteration_bounds = array<i64: 2>, scalar_prefetch = 0 : i64, scratch_operands = 0 : i64, tpu.core_type = #tpu.core_type<tc>, window_params = [{transform_indices = @transform_0, window_bounds = array<i64: 1, 8, 32>}, {pipeline_mode = #tpu.pipeline_mode<synchronous>, transform_indices = @transform_1, window_bounds = array<i64: 2, 8>}, {pipeline_mode = #tpu.pipeline_mode<synchronous>, transform_indices = @transform_2, window_bounds = array<i64: 3, 32, 32>}, {pipeline_mode = #tpu.pipeline_mode<synchronous>, transform_indices = @transform_3, window_bounds = array<i64: 3, 32>}, {pipeline_mode = #tpu.pipeline_mode<synchronous>, transform_indices = @transform_4, window_bounds = array<i64: 4, 32>}, {pipeline_mode = #tpu.pipeline_mode<synchronous>, transform_indices = @transform_5, window_bounds = array<i64: 32, 32>}, {pipeline_mode = #tpu.pipeline_mode<synchronous>, transform_indices = @transform_6, window_bounds = array<i64: 32, 64>}, {pipeline_mode = #tpu.pipeline_mode<synchronous>, transform_indices = @transform_7, window_bounds = array<i64: 1, 64>}, {pipeline_mode = #tpu.pipeline_mode<synchronous>, transform_indices = @transform_8, window_bounds = array<i64: 64, 32>}, {pipeline_mode = #tpu.pipeline_mode<synchronous>, transform_indices = @transform_9, window_bounds = array<i64: 6, 32>}, {transform_indices = @transform_10, window_bounds = array<i64: 1, 8, 32>}]} {
    %c0 = arith.constant 0 : index
    %c0_0 = arith.constant 0 : index
    %c0_1 = arith.constant 0 : index
    %0 = vector.load %arg1[%c0, %c0_0, %c0_1] : memref<1x8x32xf32, #tpu.memory_space<vmem>>, vector<1x8x32xf32>
    %1 = vector.shape_cast %0 : vector<1x8x32xf32> to vector<8x32xf32>
    %c0_2 = arith.constant 0 : index
    %c0_3 = arith.constant 0 : index
    %2 = vector.load %arg4[%c0_2, %c0_3] : memref<3x32xf32, #tpu.memory_space<vmem>>, vector<3x32xf32>
    %c0_4 = arith.constant 0 : index
    %c0_5 = arith.constant 0 : index
    %c0_6 = arith.constant 0 : index
    %3 = vector.load %arg3[%c0_4, %c0_5, %c0_6] : memref<3x32x32xf32, #tpu.memory_space<vmem>>, vector<1x32x32xf32>
    %4 = vector.shape_cast %3 : vector<1x32x32xf32> to vector<32x32xf32>
    %cst = arith.constant dense<0.000000e+00> : vector<8x32xf32>
    %5 = tpu.matmul %1, %4, %cst {dimension_numbers = #tpu.dot_dimension_numbers<[1], [0], [0], [1], [0, 0, 1, 1], [], []>} : vector<8x32xf32>, vector<32x32xf32>, vector<8x32xf32> -> vector<8x32xf32>
    %6 = vector.extract_strided_slice %2 {offsets = [0, 0], sizes = [1, 32], strides = [1, 1]} : vector<3x32xf32> to vector<1x32xf32>
    %7 = vector.broadcast %6 : vector<1x32xf32> to vector<8x32xf32>
    %8 = arith.addf %5, %7 : vector<8x32xf32>
    %9 = vector.shape_cast %8 : vector<8x32xf32> to vector<1x8x32xf32>
    %c1 = arith.constant 1 : index
    %c0_7 = arith.constant 0 : index
    %c0_8 = arith.constant 0 : index
    %10 = vector.load %arg3[%c1, %c0_7, %c0_8] : memref<3x32x32xf32, #tpu.memory_space<vmem>>, vector<1x32x32xf32>
    %11 = vector.shape_cast %10 : vector<1x32x32xf32> to vector<32x32xf32>
    %cst_9 = arith.constant dense<0.000000e+00> : vector<8x32xf32>
    %12 = tpu.matmul %1, %11, %cst_9 {dimension_numbers = #tpu.dot_dimension_numbers<[1], [0], [0], [1], [0, 0, 1, 1], [], []>} : vector<8x32xf32>, vector<32x32xf32>, vector<8x32xf32> -> vector<8x32xf32>
    %13 = vector.extract_strided_slice %2 {offsets = [1, 0], sizes = [1, 32], strides = [1, 1]} : vector<3x32xf32> to vector<1x32xf32>
    %14 = vector.broadcast %13 : vector<1x32xf32> to vector<8x32xf32>
    %15 = arith.addf %12, %14 : vector<8x32xf32>
    %16 = vector.shape_cast %15 : vector<8x32xf32> to vector<1x8x32xf32>
    %c2 = arith.constant 2 : index
    %c0_10 = arith.constant 0 : index
    %c0_11 = arith.constant 0 : index
    %17 = vector.load %arg3[%c2, %c0_10, %c0_11] : memref<3x32x32xf32, #tpu.memory_space<vmem>>, vector<1x32x32xf32>
    %18 = vector.shape_cast %17 : vector<1x32x32xf32> to vector<32x32xf32>
    %cst_12 = arith.constant dense<0.000000e+00> : vector<8x32xf32>
    %19 = tpu.matmul %1, %18, %cst_12 {dimension_numbers = #tpu.dot_dimension_numbers<[1], [0], [0], [1], [0, 0, 1, 1], [], []>} : vector<8x32xf32>, vector<32x32xf32>, vector<8x32xf32> -> vector<8x32xf32>
    %20 = vector.extract_strided_slice %2 {offsets = [2, 0], sizes = [1, 32], strides = [1, 1]} : vector<3x32xf32> to vector<1x32xf32>
    %21 = vector.broadcast %20 : vector<1x32xf32> to vector<8x32xf32>
    %22 = arith.addf %19, %21 : vector<8x32xf32>
    %23 = vector.shape_cast %22 : vector<8x32xf32> to vector<1x8x32xf32>
    %c1_i32 = arith.constant 1 : i32
    %24 = arith.muli %arg0, %c1_i32 : i32
    %25 = arith.index_cast %24 : i32 to index
    %c0_13 = arith.constant 0 : index
    %26 = vector.load %arg2[%25, %c0_13] : memref<2x8xf32, #tpu.memory_space<vmem>>, vector<1x8xf32>
    %27 = vector.shape_cast %26 : vector<1x8xf32> to vector<1x8x1xf32>
    %28 = vector.shape_cast %26 : vector<1x8xf32> to vector<1x1x8xf32>
    %29 = vector.broadcast %27 : vector<1x8x1xf32> to vector<1x8x8xf32>
    %30 = vector.broadcast %28 : vector<1x1x8xf32> to vector<1x8x8xf32>
    %31 = arith.mulf %29, %30 : vector<1x8x8xf32>
    %cst_14 = arith.constant 1.000000e+00 : f32
    %32 = vector.broadcast %cst_14 : f32 to vector<1x8x1xf32>
    %33 = arith.subf %32, %27 : vector<1x8x1xf32>
    %cst_15 = arith.constant 1.000000e+00 : f32
    %34 = vector.broadcast %cst_15 : f32 to vector<1x1x8xf32>
    %35 = arith.subf %34, %28 : vector<1x1x8xf32>
    %36 = vector.broadcast %33 : vector<1x8x1xf32> to vector<1x8x8xf32>
    %37 = vector.broadcast %35 : vector<1x1x8xf32> to vector<1x8x8xf32>
    %38 = arith.mulf %36, %37 : vector<1x8x8xf32>
    %cst_16 = arith.constant 1.000000e+00 : f32
    %39 = vector.broadcast %cst_16 : f32 to vector<1x8x8xf32>
    %40 = arith.subf %39, %31 : vector<1x8x8xf32>
    %41 = arith.subf %40, %38 : vector<1x8x8xf32>
    %cst_17 = arith.constant -1.000000e+05 : f32
    %42 = vector.broadcast %cst_17 : f32 to vector<1x8x8xf32>
    %43 = arith.mulf %41, %42 : vector<1x8x8xf32>
    %cst_18 = arith.constant 0.000000e+00 : f32
    %44 = vector.broadcast %cst_18 : f32 to vector<1x8x32xf32>
    %c0_19 = arith.constant 0 : index
    %c0_20 = arith.constant 0 : index
    %45 = vector.load %arg5[%c0_19, %c0_20] : memref<4x32xf32, #tpu.memory_space<vmem>>, vector<1x32xf32>
    %46 = vector.shape_cast %45 : vector<1x32xf32> to vector<1x1x32xf32>
    %47 = vector.broadcast %46 : vector<1x1x32xf32> to vector<1x8x32xf32>
    %48 = arith.mulf %9, %47 : vector<1x8x32xf32>
    "tpu.trace_start"() <{level = 10 : i32, message = "bqc,bkc->bqk"}> : () -> ()
    %cst_21 = arith.constant dense<0.000000e+00> : vector<1x8x8xf32>
    %49 = tpu.matmul %48, %16, %cst_21 {dimension_numbers = #tpu.dot_dimension_numbers<[2], [2], [1], [1], [0, 0, 0, 1, 1, 1], [0], [0]>} : vector<1x8x32xf32>, vector<1x8x32xf32>, vector<1x8x8xf32> -> vector<1x8x8xf32>
    "tpu.trace_stop"() : () -> ()
    %cst_22 = arith.constant 0.353553385 : f32
    %50 = vector.broadcast %cst_22 : f32 to vector<1x8x8xf32>
    %51 = arith.mulf %49, %50 : vector<1x8x8xf32>
    %52 = arith.addf %51, %43 : vector<1x8x8xf32>
    %cst_23 = arith.constant dense<0xFF800000> : vector<1x8xf32>
    %53 = vector.multi_reduction <maximumf>, %52, %cst_23 [2] : vector<1x8x8xf32> to vector<1x8xf32>
    %54 = vector.shape_cast %53 : vector<1x8xf32> to vector<1x8x1xf32>
    %55 = vector.broadcast %54 : vector<1x8x1xf32> to vector<1x8x8xf32>
    %56 = arith.subf %52, %55 : vector<1x8x8xf32>
    %57 = math.exp %56 : vector<1x8x8xf32>
    %cst_24 = arith.constant dense<0.000000e+00> : vector<1x8xf32>
    %58 = vector.multi_reduction <add>, %57, %cst_24 [2] : vector<1x8x8xf32> to vector<1x8xf32>
    %59 = vector.shape_cast %58 : vector<1x8xf32> to vector<1x8x1xf32>
    %60 = tpu.reciprocal %59 {approx = true} : vector<1x8x1xf32> -> vector<1x8x1xf32>
    %61 = vector.broadcast %60 : vector<1x8x1xf32> to vector<1x8x8xf32>
    %62 = arith.mulf %57, %61 : vector<1x8x8xf32>
    %63 = vector.broadcast %46 : vector<1x1x32xf32> to vector<1x8x32xf32>
    %64 = arith.mulf %23, %63 : vector<1x8x32xf32>
    "tpu.trace_start"() <{level = 10 : i32, message = "bqk,bkc->bqc"}> : () -> ()
    %cst_25 = arith.constant dense<0.000000e+00> : vector<1x8x32xf32>
    %65 = tpu.matmul %62, %64, %cst_25 {dimension_numbers = #tpu.dot_dimension_numbers<[2], [1], [1], [2], [0, 0, 0, 1, 1, 2], [0], [0]>} : vector<1x8x8xf32>, vector<1x8x32xf32>, vector<1x8x32xf32> -> vector<1x8x32xf32>
    "tpu.trace_stop"() : () -> ()
    %66 = arith.addf %44, %65 : vector<1x8x32xf32>
    %c1_26 = arith.constant 1 : index
    %c0_27 = arith.constant 0 : index
    %67 = vector.load %arg5[%c1_26, %c0_27] : memref<4x32xf32, #tpu.memory_space<vmem>>, vector<1x32xf32>
    %68 = vector.shape_cast %67 : vector<1x32xf32> to vector<1x1x32xf32>
    %69 = vector.broadcast %68 : vector<1x1x32xf32> to vector<1x8x32xf32>
    %70 = arith.mulf %9, %69 : vector<1x8x32xf32>
    "tpu.trace_start"() <{level = 10 : i32, message = "bqc,bkc->bqk"}> : () -> ()
    %cst_28 = arith.constant dense<0.000000e+00> : vector<1x8x8xf32>
    %71 = tpu.matmul %70, %16, %cst_28 {dimension_numbers = #tpu.dot_dimension_numbers<[2], [2], [1], [1], [0, 0, 0, 1, 1, 1], [0], [0]>} : vector<1x8x32xf32>, vector<1x8x32xf32>, vector<1x8x8xf32> -> vector<1x8x8xf32>
    "tpu.trace_stop"() : () -> ()
    %cst_29 = arith.constant 0.353553385 : f32
    %72 = vector.broadcast %cst_29 : f32 to vector<1x8x8xf32>
    %73 = arith.mulf %71, %72 : vector<1x8x8xf32>
    %74 = arith.addf %73, %43 : vector<1x8x8xf32>
    %cst_30 = arith.constant dense<0xFF800000> : vector<1x8xf32>
    %75 = vector.multi_reduction <maximumf>, %74, %cst_30 [2] : vector<1x8x8xf32> to vector<1x8xf32>
    %76 = vector.shape_cast %75 : vector<1x8xf32> to vector<1x8x1xf32>
    %77 = vector.broadcast %76 : vector<1x8x1xf32> to vector<1x8x8xf32>
    %78 = arith.subf %74, %77 : vector<1x8x8xf32>
    %79 = math.exp %78 : vector<1x8x8xf32>
    %cst_31 = arith.constant dense<0.000000e+00> : vector<1x8xf32>
    %80 = vector.multi_reduction <add>, %79, %cst_31 [2] : vector<1x8x8xf32> to vector<1x8xf32>
    %81 = vector.shape_cast %80 : vector<1x8xf32> to vector<1x8x1xf32>
    %82 = tpu.reciprocal %81 {approx = true} : vector<1x8x1xf32> -> vector<1x8x1xf32>
    %83 = vector.broadcast %82 : vector<1x8x1xf32> to vector<1x8x8xf32>
    %84 = arith.mulf %79, %83 : vector<1x8x8xf32>
    %85 = vector.broadcast %68 : vector<1x1x32xf32> to vector<1x8x32xf32>
    %86 = arith.mulf %23, %85 : vector<1x8x32xf32>
    "tpu.trace_start"() <{level = 10 : i32, message = "bqk,bkc->bqc"}> : () -> ()
    %cst_32 = arith.constant dense<0.000000e+00> : vector<1x8x32xf32>
    %87 = tpu.matmul %84, %86, %cst_32 {dimension_numbers = #tpu.dot_dimension_numbers<[2], [1], [1], [2], [0, 0, 0, 1, 1, 2], [0], [0]>} : vector<1x8x8xf32>, vector<1x8x32xf32>, vector<1x8x32xf32> -> vector<1x8x32xf32>
    "tpu.trace_stop"() : () -> ()
    %88 = arith.addf %66, %87 : vector<1x8x32xf32>
    %c2_33 = arith.constant 2 : index
    %c0_34 = arith.constant 0 : index
    %89 = vector.load %arg5[%c2_33, %c0_34] : memref<4x32xf32, #tpu.memory_space<vmem>>, vector<1x32xf32>
    %90 = vector.shape_cast %89 : vector<1x32xf32> to vector<1x1x32xf32>
    %91 = vector.broadcast %90 : vector<1x1x32xf32> to vector<1x8x32xf32>
    %92 = arith.mulf %9, %91 : vector<1x8x32xf32>
    "tpu.trace_start"() <{level = 10 : i32, message = "bqc,bkc->bqk"}> : () -> ()
    %cst_35 = arith.constant dense<0.000000e+00> : vector<1x8x8xf32>
    %93 = tpu.matmul %92, %16, %cst_35 {dimension_numbers = #tpu.dot_dimension_numbers<[2], [2], [1], [1], [0, 0, 0, 1, 1, 1], [0], [0]>} : vector<1x8x32xf32>, vector<1x8x32xf32>, vector<1x8x8xf32> -> vector<1x8x8xf32>
    "tpu.trace_stop"() : () -> ()
    %cst_36 = arith.constant 0.353553385 : f32
    %94 = vector.broadcast %cst_36 : f32 to vector<1x8x8xf32>
    %95 = arith.mulf %93, %94 : vector<1x8x8xf32>
    %96 = arith.addf %95, %43 : vector<1x8x8xf32>
    %cst_37 = arith.constant dense<0xFF800000> : vector<1x8xf32>
    %97 = vector.multi_reduction <maximumf>, %96, %cst_37 [2] : vector<1x8x8xf32> to vector<1x8xf32>
    %98 = vector.shape_cast %97 : vector<1x8xf32> to vector<1x8x1xf32>
    %99 = vector.broadcast %98 : vector<1x8x1xf32> to vector<1x8x8xf32>
    %100 = arith.subf %96, %99 : vector<1x8x8xf32>
    %101 = math.exp %100 : vector<1x8x8xf32>
    %cst_38 = arith.constant dense<0.000000e+00> : vector<1x8xf32>
    %102 = vector.multi_reduction <add>, %101, %cst_38 [2] : vector<1x8x8xf32> to vector<1x8xf32>
    %103 = vector.shape_cast %102 : vector<1x8xf32> to vector<1x8x1xf32>
    %104 = tpu.reciprocal %103 {approx = true} : vector<1x8x1xf32> -> vector<1x8x1xf32>
    %105 = vector.broadcast %104 : vector<1x8x1xf32> to vector<1x8x8xf32>
    %106 = arith.mulf %101, %105 : vector<1x8x8xf32>
    %107 = vector.broadcast %90 : vector<1x1x32xf32> to vector<1x8x32xf32>
    %108 = arith.mulf %23, %107 : vector<1x8x32xf32>
    "tpu.trace_start"() <{level = 10 : i32, message = "bqk,bkc->bqc"}> : () -> ()
    %cst_39 = arith.constant dense<0.000000e+00> : vector<1x8x32xf32>
    %109 = tpu.matmul %106, %108, %cst_39 {dimension_numbers = #tpu.dot_dimension_numbers<[2], [1], [1], [2], [0, 0, 0, 1, 1, 2], [0], [0]>} : vector<1x8x8xf32>, vector<1x8x32xf32>, vector<1x8x32xf32> -> vector<1x8x32xf32>
    "tpu.trace_stop"() : () -> ()
    %110 = arith.addf %88, %109 : vector<1x8x32xf32>
    %c3 = arith.constant 3 : index
    %c0_40 = arith.constant 0 : index
    %111 = vector.load %arg5[%c3, %c0_40] : memref<4x32xf32, #tpu.memory_space<vmem>>, vector<1x32xf32>
    %112 = vector.shape_cast %111 : vector<1x32xf32> to vector<1x1x32xf32>
    %113 = vector.broadcast %112 : vector<1x1x32xf32> to vector<1x8x32xf32>
    %114 = arith.mulf %9, %113 : vector<1x8x32xf32>
    "tpu.trace_start"() <{level = 10 : i32, message = "bqc,bkc->bqk"}> : () -> ()
    %cst_41 = arith.constant dense<0.000000e+00> : vector<1x8x8xf32>
    %115 = tpu.matmul %114, %16, %cst_41 {dimension_numbers = #tpu.dot_dimension_numbers<[2], [2], [1], [1], [0, 0, 0, 1, 1, 1], [0], [0]>} : vector<1x8x32xf32>, vector<1x8x32xf32>, vector<1x8x8xf32> -> vector<1x8x8xf32>
    "tpu.trace_stop"() : () -> ()
    %cst_42 = arith.constant 0.353553385 : f32
    %116 = vector.broadcast %cst_42 : f32 to vector<1x8x8xf32>
    %117 = arith.mulf %115, %116 : vector<1x8x8xf32>
    %118 = arith.addf %117, %43 : vector<1x8x8xf32>
    %cst_43 = arith.constant dense<0xFF800000> : vector<1x8xf32>
    %119 = vector.multi_reduction <maximumf>, %118, %cst_43 [2] : vector<1x8x8xf32> to vector<1x8xf32>
    %120 = vector.shape_cast %119 : vector<1x8xf32> to vector<1x8x1xf32>
    %121 = vector.broadcast %120 : vector<1x8x1xf32> to vector<1x8x8xf32>
    %122 = arith.subf %118, %121 : vector<1x8x8xf32>
    %123 = math.exp %122 : vector<1x8x8xf32>
    %cst_44 = arith.constant dense<0.000000e+00> : vector<1x8xf32>
    %124 = vector.multi_reduction <add>, %123, %cst_44 [2] : vector<1x8x8xf32> to vector<1x8xf32>
    %125 = vector.shape_cast %124 : vector<1x8xf32> to vector<1x8x1xf32>
    %126 = tpu.reciprocal %125 {approx = true} : vector<1x8x1xf32> -> vector<1x8x1xf32>
    %127 = vector.broadcast %126 : vector<1x8x1xf32> to vector<1x8x8xf32>
    %128 = arith.mulf %123, %127 : vector<1x8x8xf32>
    %129 = vector.broadcast %112 : vector<1x1x32xf32> to vector<1x8x32xf32>
    %130 = arith.mulf %23, %129 : vector<1x8x32xf32>
    "tpu.trace_start"() <{level = 10 : i32, message = "bqk,bkc->bqc"}> : () -> ()
    %cst_45 = arith.constant dense<0.000000e+00> : vector<1x8x32xf32>
    %131 = tpu.matmul %128, %130, %cst_45 {dimension_numbers = #tpu.dot_dimension_numbers<[2], [1], [1], [2], [0, 0, 0, 1, 1, 2], [0], [0]>} : vector<1x8x8xf32>, vector<1x8x32xf32>, vector<1x8x32xf32> -> vector<1x8x32xf32>
    "tpu.trace_stop"() : () -> ()
    %132 = arith.addf %110, %131 : vector<1x8x32xf32>
    %c0_46 = arith.constant 0 : index
    %c0_47 = arith.constant 0 : index
    %133 = vector.load %arg10[%c0_46, %c0_47] : memref<6x32xf32, #tpu.memory_space<vmem>>, vector<6x32xf32>
    %134 = vector.extract_strided_slice %133 {offsets = [0, 0], sizes = [1, 32], strides = [1, 1]} : vector<6x32xf32> to vector<1x32xf32>
    %135 = vector.extract_strided_slice %133 {offsets = [1, 0], sizes = [1, 32], strides = [1, 1]} : vector<6x32xf32> to vector<1x32xf32>
    %136 = vector.extract_strided_slice %133 {offsets = [2, 0], sizes = [1, 32], strides = [1, 1]} : vector<6x32xf32> to vector<1x32xf32>
    %137 = vector.extract_strided_slice %133 {offsets = [3, 0], sizes = [1, 32], strides = [1, 1]} : vector<6x32xf32> to vector<1x32xf32>
    %138 = vector.extract_strided_slice %133 {offsets = [4, 0], sizes = [1, 32], strides = [1, 1]} : vector<6x32xf32> to vector<1x32xf32>
    %139 = vector.extract_strided_slice %133 {offsets = [5, 0], sizes = [1, 32], strides = [1, 1]} : vector<6x32xf32> to vector<1x32xf32>
    %140 = vector.shape_cast %132 : vector<1x8x32xf32> to vector<8x32xf32>
    %c0_48 = arith.constant 0 : index
    %c0_49 = arith.constant 0 : index
    %141 = vector.load %arg6[%c0_48, %c0_49] : memref<32x32xf32, #tpu.memory_space<vmem>>, vector<32x32xf32>
    %cst_50 = arith.constant dense<0.000000e+00> : vector<8x32xf32>
    %142 = tpu.matmul %140, %141, %cst_50 {dimension_numbers = #tpu.dot_dimension_numbers<[1], [0], [0], [1], [0, 0, 1, 1], [], []>} : vector<8x32xf32>, vector<32x32xf32>, vector<8x32xf32> -> vector<8x32xf32>
    %143 = vector.broadcast %134 : vector<1x32xf32> to vector<8x32xf32>
    %144 = arith.addf %142, %143 : vector<8x32xf32>
    %cst_51 = arith.constant dense<0.000000e+00> : vector<8xf32>
    %145 = vector.multi_reduction <add>, %144, %cst_51 [1] : vector<8x32xf32> to vector<8xf32>
    %146 = vector.shape_cast %145 : vector<8xf32> to vector<8x1xf32>
    %cst_52 = arith.constant 3.200000e+01 : f32
    %147 = vector.broadcast %cst_52 : f32 to vector<8x1xf32>
    %148 = arith.divf %146, %147 : vector<8x1xf32>
    %149 = vector.broadcast %148 : vector<8x1xf32> to vector<8x32xf32>
    %150 = arith.subf %144, %149 : vector<8x32xf32>
    %151 = vector.broadcast %148 : vector<8x1xf32> to vector<8x32xf32>
    %152 = arith.subf %144, %151 : vector<8x32xf32>
    %153 = arith.mulf %150, %152 : vector<8x32xf32>
    %cst_53 = arith.constant dense<0.000000e+00> : vector<8xf32>
    %154 = vector.multi_reduction <add>, %153, %cst_53 [1] : vector<8x32xf32> to vector<8xf32>
    %155 = vector.shape_cast %154 : vector<8xf32> to vector<8x1xf32>
    %cst_54 = arith.constant 3.200000e+01 : f32
    %156 = vector.broadcast %cst_54 : f32 to vector<8x1xf32>
    %157 = arith.divf %155, %156 : vector<8x1xf32>
    %158 = vector.broadcast %148 : vector<8x1xf32> to vector<8x32xf32>
    %159 = arith.subf %144, %158 : vector<8x32xf32>
    %cst_55 = arith.constant 9.99999974E-6 : f32
    %160 = vector.broadcast %cst_55 : f32 to vector<8x1xf32>
    %161 = arith.addf %157, %160 : vector<8x1xf32>
    %162 = math.rsqrt %161 : vector<8x1xf32>
    %163 = vector.broadcast %162 : vector<8x1xf32> to vector<8x32xf32>
    %164 = arith.mulf %159, %163 : vector<8x32xf32>
    %165 = vector.broadcast %136 : vector<1x32xf32> to vector<8x32xf32>
    %166 = arith.mulf %164, %165 : vector<8x32xf32>
    %167 = vector.broadcast %137 : vector<1x32xf32> to vector<8x32xf32>
    %168 = arith.addf %166, %167 : vector<8x32xf32>
    %169 = arith.addf %144, %168 : vector<8x32xf32>
    %c0_56 = arith.constant 0 : index
    %c0_57 = arith.constant 0 : index
    %170 = vector.load %arg7[%c0_56, %c0_57] : memref<32x64xf32, #tpu.memory_space<vmem>>, vector<32x64xf32>
    %cst_58 = arith.constant dense<0.000000e+00> : vector<8x64xf32>
    %171 = tpu.matmul %169, %170, %cst_58 {dimension_numbers = #tpu.dot_dimension_numbers<[1], [0], [0], [1], [0, 0, 1, 1], [], []>} : vector<8x32xf32>, vector<32x64xf32>, vector<8x64xf32> -> vector<8x64xf32>
    %c0_59 = arith.constant 0 : index
    %c0_60 = arith.constant 0 : index
    %172 = vector.load %arg8[%c0_59, %c0_60] : memref<1x64xf32, #tpu.memory_space<vmem>>, vector<1x64xf32>
    %173 = vector.broadcast %172 : vector<1x64xf32> to vector<8x64xf32>
    %174 = arith.addf %171, %173 : vector<8x64xf32>
    %cst_61 = arith.constant 5.000000e-01 : f32
    %175 = vector.broadcast %cst_61 : f32 to vector<8x64xf32>
    %176 = arith.mulf %175, %174 : vector<8x64xf32>
    %cst_62 = arith.constant 0.707106769 : f32
    %177 = vector.broadcast %cst_62 : f32 to vector<8x64xf32>
    %178 = arith.mulf %174, %177 : vector<8x64xf32>
    %179 = math.erf %178 : vector<8x64xf32>
    %cst_63 = arith.constant 1.000000e+00 : f32
    %180 = vector.broadcast %cst_63 : f32 to vector<8x64xf32>
    %181 = arith.addf %180, %179 : vector<8x64xf32>
    %182 = arith.mulf %176, %181 : vector<8x64xf32>
    %c0_64 = arith.constant 0 : index
    %c0_65 = arith.constant 0 : index
    %183 = vector.load %arg9[%c0_64, %c0_65] : memref<64x32xf32, #tpu.memory_space<vmem>>, vector<64x32xf32>
    %cst_66 = arith.constant dense<0.000000e+00> : vector<8x32xf32>
    %184 = tpu.matmul %182, %183, %cst_66 {dimension_numbers = #tpu.dot_dimension_numbers<[1], [0], [0], [1], [0, 0, 1, 1], [], []>} : vector<8x64xf32>, vector<64x32xf32>, vector<8x32xf32> -> vector<8x32xf32>
    %185 = arith.addf %169, %184 : vector<8x32xf32>
    %186 = vector.broadcast %135 : vector<1x32xf32> to vector<8x32xf32>
    %187 = arith.addf %185, %186 : vector<8x32xf32>
    %cst_67 = arith.constant dense<0.000000e+00> : vector<8xf32>
    %188 = vector.multi_reduction <add>, %187, %cst_67 [1] : vector<8x32xf32> to vector<8xf32>
    %189 = vector.shape_cast %188 : vector<8xf32> to vector<8x1xf32>
    %cst_68 = arith.constant 3.200000e+01 : f32
    %190 = vector.broadcast %cst_68 : f32 to vector<8x1xf32>
    %191 = arith.divf %189, %190 : vector<8x1xf32>
    %192 = vector.broadcast %191 : vector<8x1xf32> to vector<8x32xf32>
    %193 = arith.subf %187, %192 : vector<8x32xf32>
    %194 = vector.broadcast %191 : vector<8x1xf32> to vector<8x32xf32>
    %195 = arith.subf %187, %194 : vector<8x32xf32>
    %196 = arith.mulf %193, %195 : vector<8x32xf32>
    %cst_69 = arith.constant dense<0.000000e+00> : vector<8xf32>
    %197 = vector.multi_reduction <add>, %196, %cst_69 [1] : vector<8x32xf32> to vector<8xf32>
    %198 = vector.shape_cast %197 : vector<8xf32> to vector<8x1xf32>
    %cst_70 = arith.constant 3.200000e+01 : f32
    %199 = vector.broadcast %cst_70 : f32 to vector<8x1xf32>
    %200 = arith.divf %198, %199 : vector<8x1xf32>
    %201 = vector.broadcast %191 : vector<8x1xf32> to vector<8x32xf32>
    %202 = arith.subf %187, %201 : vector<8x32xf32>
    %cst_71 = arith.constant 9.99999974E-6 : f32
    %203 = vector.broadcast %cst_71 : f32 to vector<8x1xf32>
    %204 = arith.addf %200, %203 : vector<8x1xf32>
    %205 = math.rsqrt %204 : vector<8x1xf32>
    %206 = vector.broadcast %205 : vector<8x1xf32> to vector<8x32xf32>
    %207 = arith.mulf %202, %206 : vector<8x32xf32>
    %208 = vector.broadcast %138 : vector<1x32xf32> to vector<8x32xf32>
    %209 = arith.mulf %207, %208 : vector<8x32xf32>
    %210 = vector.broadcast %139 : vector<1x32xf32> to vector<8x32xf32>
    %211 = arith.addf %209, %210 : vector<8x32xf32>
    %212 = vector.shape_cast %211 : vector<8x32xf32> to vector<1x8x32xf32>
    %c0_72 = arith.constant 0 : index
    %c0_73 = arith.constant 0 : index
    %c0_74 = arith.constant 0 : index
    %213 = vector.load %arg11[%c0_72, %c0_73, %c0_74] : memref<1x8x32xf32, #tpu.memory_space<vmem>>, vector<1x8x32xf32>
    tpu.vector_store %arg11[%c0_72, %c0_73, %c0_74], %212 {strides = array<i32>} : memref<1x8x32xf32, #tpu.memory_space<vmem>>, vector<1x8x32xf32>,
    return
  }
  func.func @transform_0(%arg0: i32) -> (i32, i32, i32) {
    %c0_i32 = arith.constant 0 : i32
    %c0_i32_0 = arith.constant 0 : i32
    %c0_i32_1 = arith.constant 0 : i32
    return %arg0, %c0_i32, %c0_i32_0 : i32, i32, i32
  }
  func.func @transform_1(%arg0: i32) -> (i32, i32) {
    %c0_i32 = arith.constant 0 : i32
    %c0_i32_0 = arith.constant 0 : i32
    %c0_i32_1 = arith.constant 0 : i32
    return %c0_i32, %c0_i32_0 : i32, i32
  }
  func.func @transform_2(%arg0: i32) -> (i32, i32, i32) {
    %c0_i32 = arith.constant 0 : i32
    %c0_i32_0 = arith.constant 0 : i32
    %c0_i32_1 = arith.constant 0 : i32
    %c0_i32_2 = arith.constant 0 : i32
    return %c0_i32, %c0_i32_0, %c0_i32_1 : i32, i32, i32
  }
  func.func @transform_3(%arg0: i32) -> (i32, i32) {
    %c0_i32 = arith.constant 0 : i32
    %c0_i32_0 = arith.constant 0 : i32
    %c0_i32_1 = arith.constant 0 : i32
    return %c0_i32, %c0_i32_0 : i32, i32
  }
  func.func @transform_4(%arg0: i32) -> (i32, i32) {
    %c0_i32 = arith.constant 0 : i32
    %c0_i32_0 = arith.constant 0 : i32
    %c0_i32_1 = arith.constant 0 : i32
    return %c0_i32, %c0_i32_0 : i32, i32
  }
  func.func @transform_5(%arg0: i32) -> (i32, i32) {
    %c0_i32 = arith.constant 0 : i32
    %c0_i32_0 = arith.constant 0 : i32
    %c0_i32_1 = arith.constant 0 : i32
    return %c0_i32, %c0_i32_0 : i32, i32
  }
  func.func @transform_6(%arg0: i32) -> (i32, i32) {
    %c0_i32 = arith.constant 0 : i32
    %c0_i32_0 = arith.constant 0 : i32
    %c0_i32_1 = arith.constant 0 : i32
    return %c0_i32, %c0_i32_0 : i32, i32
  }
  func.func @transform_7(%arg0: i32) -> (i32, i32) {
    %c0_i32 = arith.constant 0 : i32
    %c0_i32_0 = arith.constant 0 : i32
    %c0_i32_1 = arith.constant 0 : i32
    return %c0_i32, %c0_i32_0 : i32, i32
  }
  func.func @transform_8(%arg0: i32) -> (i32, i32) {
    %c0_i32 = arith.constant 0 : i32
    %c0_i32_0 = arith.constant 0 : i32
    %c0_i32_1 = arith.constant 0 : i32
    return %c0_i32, %c0_i32_0 : i32, i32
  }
  func.func @transform_9(%arg0: i32) -> (i32, i32) {
    %c0_i32 = arith.constant 0 : i32
    %c0_i32_0 = arith.constant 0 : i32
    %c0_i32_1 = arith.constant 0 : i32
    return %c0_i32, %c0_i32_0 : i32, i32
  }
  func.func @transform_10(%arg0: i32) -> (i32, i32, i32) {
    %c0_i32 = arith.constant 0 : i32
    %c0_i32_0 = arith.constant 0 : i32
    %c0_i32_1 = arith.constant 0 : i32
    return %arg0, %c0_i32, %c0_i32_0 : i32, i32, i32
  }
}

</mosaic_0001>

<llo_original>
// kernel: tpu_custom_call.1
$region0: #{tpu_custom_call.1}
  #allocation0 [shape = 'u32[]', space=smem, size = 0x4, offset = 0x4, fixed_abs, tag = 'smem constant byte address 0x4 - core index']
  #allocation1 [shape = 'u32[144,128]{1,0:T(1,128)}', space=vmem, size = 0x12000, scoped, tag = 'internal scratch']
  %s0 = inlined_call_operand.hbm [shape: f32[2,8,32], index: 0, kind: input, shape index: {}]
  %s1 = inlined_call_operand.vmem [shape: f32[2,8], index: 1, kind: input, shape index: {}]
  %s2 = inlined_call_operand.vmem [shape: f32[3,32,32], index: 2, kind: input, shape index: {}]
  %s3 = inlined_call_operand.hbm [shape: f32[3,32], index: 3, kind: input, shape index: {}]
  %s4 = inlined_call_operand.vmem [shape: f32[4,32], index: 4, kind: input, shape index: {}]
  %s5 = inlined_call_operand.hbm [shape: f32[32,32], index: 5, kind: input, shape index: {}]
  %s6 = inlined_call_operand.hbm [shape: f32[32,64], index: 6, kind: input, shape index: {}]
  %s7 = inlined_call_operand.vmem [shape: f32[1,64], index: 7, kind: input, shape index: {}]
  %s8 = inlined_call_operand.vmem [shape: f32[64,32], index: 8, kind: input, shape index: {}]
  %s9 = inlined_call_operand.vmem [shape: f32[6,32], index: 9, kind: input, shape index: {}]
  %s10 = inlined_call_operand.hbm [shape: f32[2,8,32], index: 10, kind: output, shape index: {}]
  %s11 = sld [smem:[#allocation0]]
  $region89: #{tpu_custom_call.1} parent=0
    _
  %s13 = ssub.s32 1, %s11
  %s14 = scalar_select 0, %s13, %s11
  $region1: #{tpu_custom_call.1} parent=0
    #allocation2 [shape = 'u8[8192]{0}', space=vmem, size = 0x2000, scoped, tag = 'input window, operand 0']
    #allocation3 [shape = 's32[2]{0}', space=sflag, size = 0x8, scoped, tag = 'scoped memory for tpu_custom_call.1']
    #allocation4 [shape = 's32[2]{0}', space=sflag, size = 0x8, scoped, tag = 'scoped memory for tpu_custom_call.1']
    #allocation5 [shape = 'u8[2048]{0}', space=vmem, size = 0x800, scoped, tag = 'input window, operand 3, single buffered']
    #allocation6 [shape = 's32[1]{0}', space=sflag, size = 0x4, scoped, tag = 'scoped memory for tpu_custom_call.1']
    #allocation7 [shape = 'u8[16384]{0}', space=vmem, size = 0x4000, scoped, tag = 'input window, operand 5, single buffered']
    #allocation8 [shape = 'u8[16384]{0}', space=vmem, size = 0x4000, scoped, tag = 'input window, operand 6, single buffered']
    #allocation9 [shape = 's32[1]{0}', space=sflag, size = 0x4, scoped, tag = 'scoped memory for tpu_custom_call.1']
    #allocation10 [shape = 'u8[8192]{0}', space=vmem, size = 0x2000, scoped, tag = 'output window, operand 0']
    %15 = vsyncpa [#allocation3], 0
    %s16 = scalar_lea.sflag [#allocation3], 1
    %17 = vsyncpa %s16, 0
    %18 = vsyncpa [#allocation6], 0
    %19 = vsyncpa [#allocation9], 0
    %20 = vsyncpa [#allocation4], 0
    %s21 = scalar_lea.sflag [#allocation4], 1
    %22 = vsyncpa %s21, 0
    loop: start=0, step=1, limit=4
    $region2: #{tpu_custom_call.1} parent=1 // loop_pre_header
      _
    $region3: #{tpu_custom_call.1} parent=1 // loop_header
      %s24 = sphi 0, %s28
      %p25 = scmp.ge.s32.totalorder %s24, 4
      %s34 = sphi 0, %s36
      %s37 = sphi 0, %s34
      %s38 = sphi 0, %s37
      %s54 = sphi 0, %s38
      %s58 = sphi 0, %s58
      %s60 = sphi 0, %s58
      %s61 = sphi 0, %s60
      %s75 = sphi 0, %s61
      %s79 = sphi 0, %s79
      %s81 = sphi 0, %s79
      %s82 = sphi 0, %s81
      %s96 = sphi 0, %s82
      %s100 = sphi 0, %s100
      %s102 = sphi 0, %s100
      %s103 = sphi 0, %s102
      %s117 = sphi 0, %s103
      %s121 = sphi 0, %s121
      %s123 = sphi 0, %s121
      %s124 = sphi 0, %s123
      %s138 = sphi 0, %s124
      %s142 = sphi 0, %s142
      %s144 = sphi 0, %s142
      %s145 = sphi 0, %s144
      %s159 = sphi 0, %s145
      %s163 = sphi 0, %s163
      %s165 = sphi 0, %s163
      %s166 = sphi 0, %s165
      %s180 = sphi 0, %s166
      %s184 = sphi 0, %s184
      %s186 = sphi 0, %s184
      %s187 = sphi 0, %s186
      %s201 = sphi 0, %s187
      %s205 = sphi 0, %s205
      %s207 = sphi 0, %s205
      %s208 = sphi 0, %s207
      %s222 = sphi 0, %s208
      %s226 = sphi 0, %s226
      %s228 = sphi 0, %s226
      %s229 = sphi 0, %s228
      %s243 = sphi 0, %s229
      %s249 = sphi 0, %s251
      %s252 = sphi 0, %s249
      %s253 = sphi 0, %s252
      %s269 = sphi 0, %s253
    $region4: #{tpu_custom_call.1} parent=1 // loop_header_branch
      %27 = sbr.rel (%p25) target = $region8
    $region5: #{tpu_custom_call.1} parent=1 // loop_body
      %s29 = ssub.s32 %s24, 1
      %s30 = ssub.s32 %s24, 2
      %s31 = sadd.s32 %s24, 1
      %s32 = ssub.s32 %s24, %s31
      %p33 = scmp.eq.s32.totalorder %s32, 0
      %s35 = sadd.s32 %s34, 1
      %s36 = scalar_select %p33, %s34, %s35
      %p39 = pneg %p33
      %p40 = scmp.eq.s32.totalorder %s24, 1
      %p41 = por %p39, %p40
      %p42 = scmp.ne.s32.totalorder %s34, %s37
      %p43 = scmp.eq.s32.totalorder %s24, 0
      %p44 = por %p42, %p43
      %p45 = scmp.ne.s32.totalorder %s34, %s37
      %p46 = scmp.eq.s32.totalorder %s29, 1
      %p47 = por %p45, %p46
      %p48 = scmp.ne.s32.totalorder %s37, %s38
      %p49 = scmp.eq.s32.totalorder %s29, 0
      %p50 = por %p48, %p49
      %p51 = scmp.ne.s32.totalorder %s37, %s38
      %p52 = scmp.eq.s32.totalorder %s30, 1
      %p53 = por %p51, %p52
      %p55 = scmp.ne.s32.totalorder %s38, %s54
      %p56 = scmp.eq.s32.totalorder %s30, 0
      %p57 = por %p55, %p56
      %s59 = sadd.s32 %s58, 1
      %p62 = scmp.eq.s32.totalorder %s24, 1
      %p63 = scmp.ne.s32.totalorder %s58, %s60
      %p64 = scmp.eq.s32.totalorder %s24, 0
      %p65 = por %p63, %p64
      %p66 = scmp.ne.s32.totalorder %s58, %s60
      %p67 = scmp.eq.s32.totalorder %s29, 1
      %p68 = por %p66, %p67
      %p69 = scmp.ne.s32.totalorder %s60, %s61
      %p70 = scmp.eq.s32.totalorder %s29, 0
      %p71 = por %p69, %p70
      %p72 = scmp.ne.s32.totalorder %s60, %s61
      %p73 = scmp.eq.s32.totalorder %s30, 1
      %p74 = por %p72, %p73
      %p76 = scmp.ne.s32.totalorder %s61, %s75
      %p77 = scmp.eq.s32.totalorder %s30, 0
      %p78 = por %p76, %p77
      %s80 = sadd.s32 %s79, 1
      %p83 = scmp.eq.s32.totalorder %s24, 1
      %p84 = scmp.ne.s32.totalorder %s79, %s81
      %p85 = scmp.eq.s32.totalorder %s24, 0
      %p86 = por %p84, %p85
      %p87 = scmp.ne.s32.totalorder %s79, %s81
      %p88 = scmp.eq.s32.totalorder %s29, 1
      %p89 = por %p87, %p88
      %p90 = scmp.ne.s32.totalorder %s81, %s82
      %p91 = scmp.eq.s32.totalorder %s29, 0
      %p92 = por %p90, %p91
      %p93 = scmp.ne.s32.totalorder %s81, %s82
      %p94 = scmp.eq.s32.totalorder %s30, 1
      %p95 = por %p93, %p94
      %p97 = scmp.ne.s32.totalorder %s82, %s96
      %p98 = scmp.eq.s32.totalorder %s30, 0
      %p99 = por %p97, %p98
      %s101 = sadd.s32 %s100, 1
      %p104 = scmp.eq.s32.totalorder %s24, 1
      %p105 = scmp.ne.s32.totalorder %s100, %s102
      %p106 = scmp.eq.s32.totalorder %s24, 0
      %p107 = por %p105, %p106
      %p108 = scmp.ne.s32.totalorder %s100, %s102
      %p109 = scmp.eq.s32.totalorder %s29, 1
      %p110 = por %p108, %p109
      %p111 = scmp.ne.s32.totalorder %s102, %s103
      %p112 = scmp.eq.s32.totalorder %s29, 0
      %p113 = por %p111, %p112
      %p114 = scmp.ne.s32.totalorder %s102, %s103
      %p115 = scmp.eq.s32.totalorder %s30, 1
      %p116 = por %p114, %p115
      %p118 = scmp.ne.s32.totalorder %s103, %s117
      %p119 = scmp.eq.s32.totalorder %s30, 0
      %p120 = por %p118, %p119
      %s122 = sadd.s32 %s121, 1
      %p125 = scmp.eq.s32.totalorder %s24, 1
      %p126 = scmp.ne.s32.totalorder %s121, %s123
      %p127 = scmp.eq.s32.totalorder %s24, 0
      %p128 = por %p126, %p127
      %p129 = scmp.ne.s32.totalorder %s121, %s123
      %p130 = scmp.eq.s32.totalorder %s29, 1
      %p131 = por %p129, %p130
      %p132 = scmp.ne.s32.totalorder %s123, %s124
      %p133 = scmp.eq.s32.totalorder %s29, 0
      %p134 = por %p132, %p133
      %p135 = scmp.ne.s32.totalorder %s123, %s124
      %p136 = scmp.eq.s32.totalorder %s30, 1
      %p137 = por %p135, %p136
      %p139 = scmp.ne.s32.totalorder %s124, %s138
      %p140 = scmp.eq.s32.totalorder %s30, 0
      %p141 = por %p139, %p140
      %s143 = sadd.s32 %s142, 1
      %p146 = scmp.eq.s32.totalorder %s24, 1
      %p147 = scmp.ne.s32.totalorder %s142, %s144
      %p148 = scmp.eq.s32.totalorder %s24, 0
      %p149 = por %p147, %p148
      %p150 = scmp.ne.s32.totalorder %s142, %s144
      %p151 = scmp.eq.s32.totalorder %s29, 1
      %p152 = por %p150, %p151
      %p153 = scmp.ne.s32.totalorder %s144, %s145
      %p154 = scmp.eq.s32.totalorder %s29, 0
      %p155 = por %p153, %p154
      %p156 = scmp.ne.s32.totalorder %s144, %s145
      %p157 = scmp.eq.s32.totalorder %s30, 1
      %p158 = por %p156, %p157
      %p160 = scmp.ne.s32.totalorder %s145, %s159
      %p161 = scmp.eq.s32.totalorder %s30, 0
      %p162 = por %p160, %p161
      %s164 = sadd.s32 %s163, 1
      %p167 = scmp.eq.s32.totalorder %s24, 1
      %p168 = scmp.ne.s32.totalorder %s163, %s165
      %p169 = scmp.eq.s32.totalorder %s24, 0
      %p170 = por %p168, %p169
      %p171 = scmp.ne.s32.totalorder %s163, %s165
      %p172 = scmp.eq.s32.totalorder %s29, 1
      %p173 = por %p171, %p172
      %p174 = scmp.ne.s32.totalorder %s165, %s166
      %p175 = scmp.eq.s32.totalorder %s29, 0
      %p176 = por %p174, %p175
      %p177 = scmp.ne.s32.totalorder %s165, %s166
      %p178 = scmp.eq.s32.totalorder %s30, 1
      %p179 = por %p177, %p178
      %p181 = scmp.ne.s32.totalorder %s166, %s180
      %p182 = scmp.eq.s32.totalorder %s30, 0
      %p183 = por %p181, %p182
      %s185 = sadd.s32 %s184, 1
      %p188 = scmp.eq.s32.totalorder %s24, 1
      %p189 = scmp.ne.s32.totalorder %s184, %s186
      %p190 = scmp.eq.s32.totalorder %s24, 0
      %p191 = por %p189, %p190
      %p192 = scmp.ne.s32.totalorder %s184, %s186
      %p193 = scmp.eq.s32.totalorder %s29, 1
      %p194 = por %p192, %p193
      %p195 = scmp.ne.s32.totalorder %s186, %s187
      %p196 = scmp.eq.s32.totalorder %s29, 0
      %p197 = por %p195, %p196
      %p198 = scmp.ne.s32.totalorder %s186, %s187
      %p199 = scmp.eq.s32.totalorder %s30, 1
      %p200 = por %p198, %p199
      %p202 = scmp.ne.s32.totalorder %s187, %s201
      %p203 = scmp.eq.s32.totalorder %s30, 0
      %p204 = por %p202, %p203
      %s206 = sadd.s32 %s205, 1
      %p209 = scmp.eq.s32.totalorder %s24, 1
      %p210 = scmp.ne.s32.totalorder %s205, %s207
      %p211 = scmp.eq.s32.totalorder %s24, 0
      %p212 = por %p210, %p211
      %p213 = scmp.ne.s32.totalorder %s205, %s207
      %p214 = scmp.eq.s32.totalorder %s29, 1
      %p215 = por %p213, %p214
      %p216 = scmp.ne.s32.totalorder %s207, %s208
      %p217 = scmp.eq.s32.totalorder %s29, 0
      %p218 = por %p216, %p217
      %p219 = scmp.ne.s32.totalorder %s207, %s208
      %p220 = scmp.eq.s32.totalorder %s30, 1
      %p221 = por %p219, %p220
      %p223 = scmp.ne.s32.totalorder %s208, %s222
      %p224 = scmp.eq.s32.totalorder %s30, 0
      %p225 = por %p223, %p224
      %s227 = sadd.s32 %s226, 1
      %p230 = scmp.eq.s32.totalorder %s24, 1
      %p231 = scmp.ne.s32.totalorder %s226, %s228
      %p232 = scmp.eq.s32.totalorder %s24, 0
      %p233 = por %p231, %p232
      %p234 = scmp.ne.s32.totalorder %s226, %s228
      %p235 = scmp.eq.s32.totalorder %s29, 1
      %p236 = por %p234, %p235
      %p237 = scmp.ne.s32.totalorder %s228, %s229
      %p238 = scmp.eq.s32.totalorder %s29, 0
      %p239 = por %p237, %p238
      %p240 = scmp.ne.s32.totalorder %s228, %s229
      %p241 = scmp.eq.s32.totalorder %s30, 1
      %p242 = por %p240, %p241
      %p244 = scmp.ne.s32.totalorder %s229, %s243
      %p245 = scmp.eq.s32.totalorder %s30, 0
      %p246 = por %p244, %p245
      %s247 = ssub.s32 %s24, %s31
      %p248 = scmp.eq.s32.totalorder %s247, 0
      %s250 = sadd.s32 %s249, 1
      %s251 = scalar_select %p248, %s249, %s250
      %p254 = pneg %p248
      %p255 = scmp.eq.s32.totalorder %s24, 1
      %p256 = por %p254, %p255
      %p257 = scmp.ne.s32.totalorder %s249, %s252
      %p258 = scmp.eq.s32.totalorder %s24, 0
      %p259 = por %p257, %p258
      %p260 = scmp.ne.s32.totalorder %s249, %s252
      %p261 = scmp.eq.s32.totalorder %s29, 1
      %p262 = por %p260, %p261
      %p263 = scmp.ne.s32.totalorder %s252, %s253
      %p264 = scmp.eq.s32.totalorder %s29, 0
      %p265 = por %p263, %p264
      %p266 = scmp.ne.s32.totalorder %s252, %s253
      %p267 = scmp.eq.s32.totalorder %s30, 1
      %p268 = por %p266, %p267
      %p270 = scmp.ne.s32.totalorder %s253, %s269
      %p271 = scmp.eq.s32.totalorder %s30, 0
      %p272 = por %p270, %p271
      %p273 = scmp.le.s32.totalorder 1, %s24
      %p274 = scmp.lt.s32.totalorder %s24, 3
      %p275 = pnand %p273, %p274
      %p276 = pneg %p275
      // Predicated region
      $region9: #{tpu_custom_call.1} parent=5 // pred_check
        _
      $region10: #{tpu_custom_call.1} parent=5 // pred_check_branch
        %278 = sbr.rel (%p275) target = $region12
      $region11: #{tpu_custom_call.1} parent=5 // pred_region
        %s279 = ssub.s32 %s24, 1
        // Predicated region
        $region13: #{tpu_custom_call.1} parent=11 // pred_check
          %p280 = pneg %p71
        $region14: #{tpu_custom_call.1} parent=11 // pred_check_branch
          %282 = sbr.rel (%p280) target = $region16
        $region15: #{tpu_custom_call.1} parent=11 // pred_region
          _
        $region16: #{tpu_custom_call.1} parent=11 // pred_fallthru
          _
        // Predicated region
        $region17: #{tpu_custom_call.1} parent=11 // pred_check
          %p283 = pneg %p92
        $region18: #{tpu_custom_call.1} parent=11 // pred_check_branch
          %285 = sbr.rel (%p283) target = $region20
        $region19: #{tpu_custom_call.1} parent=11 // pred_region
          _
        $region20: #{tpu_custom_call.1} parent=11 // pred_fallthru
          _
        // Predicated region
        $region21: #{tpu_custom_call.1} parent=11 // pred_check
          %p286 = pneg %p113
        $region22: #{tpu_custom_call.1} parent=11 // pred_check_branch
          %288 = sbr.rel (%p286) target = $region24
        $region23: #{tpu_custom_call.1} parent=11 // pred_region
          %s290 = ssub.s32 64, 64
          %291 = vsyncadd [#allocation6], %s290
          %s293 = sshll.u32 [#allocation5], 4
          %s294 = int_to_ptr.vmem [resolvable:$true] %s293
          %296 = dma.hbm_to_vmem [thread:$0]  %s3, 64, %s294, [#allocation6]
        $region24: #{tpu_custom_call.1} parent=11 // pred_fallthru
          _
        // Predicated region
        $region25: #{tpu_custom_call.1} parent=11 // pred_check
          %p297 = pneg %p134
        $region26: #{tpu_custom_call.1} parent=11 // pred_check_branch
          %299 = sbr.rel (%p297) target = $region28
        $region27: #{tpu_custom_call.1} parent=11 // pred_region
          _
        $region28: #{tpu_custom_call.1} parent=11 // pred_fallthru
          _
        // Predicated region
        $region29: #{tpu_custom_call.1} parent=11 // pred_check
          %p300 = pneg %p155
        $region30: #{tpu_custom_call.1} parent=11 // pred_check_branch
          %302 = sbr.rel (%p300) target = $region32
        $region31: #{tpu_custom_call.1} parent=11 // pred_region
          %s304 = ssub.s32 512, 512
          %305 = vsyncadd [#allocation6], %s304
          %s306 = sshll.u32 [#allocation7], 4
          %s307 = int_to_ptr.vmem [resolvable:$true] %s306
          %312 = dma.hbm_to_vmem [thread:$0]  %s5, 512, %s307, [#allocation6], 128, 128, 8
        $region32: #{tpu_custom_call.1} parent=11 // pred_fallthru
          _
        // Predicated region
        $region33: #{tpu_custom_call.1} parent=11 // pred_check
          %p313 = pneg %p176
        $region34: #{tpu_custom_call.1} parent=11 // pred_check_branch
          %315 = sbr.rel (%p313) target = $region36
        $region35: #{tpu_custom_call.1} parent=11 // pred_region
          %s317 = ssub.s32 512, 512
          %318 = vsyncadd [#allocation9], %s317
          %s319 = sshll.u32 [#allocation8], 4
          %s320 = int_to_ptr.vmem [resolvable:$true] %s319
          %325 = dma.hbm_to_vmem [thread:$0]  %s6, 512, %s320, [#allocation9], 128, 128, 8
        $region36: #{tpu_custom_call.1} parent=11 // pred_fallthru
          _
        // Predicated region
        $region37: #{tpu_custom_call.1} parent=11 // pred_check
          %p326 = pneg %p197
        $region38: #{tpu_custom_call.1} parent=11 // pred_check_branch
          %328 = sbr.rel (%p326) target = $region40
        $region39: #{tpu_custom_call.1} parent=11 // pred_region
          _
        $region40: #{tpu_custom_call.1} parent=11 // pred_fallthru
          _
        // Predicated region
        $region41: #{tpu_custom_call.1} parent=11 // pred_check
          %p329 = pneg %p218
        $region42: #{tpu_custom_call.1} parent=11 // pred_check_branch
          %331 = sbr.rel (%p329) target = $region44
        $region43: #{tpu_custom_call.1} parent=11 // pred_region
          _
        $region44: #{tpu_custom_call.1} parent=11 // pred_fallthru
          _
        // Predicated region
        $region45: #{tpu_custom_call.1} parent=11 // pred_check
          %p332 = pneg %p239
        $region46: #{tpu_custom_call.1} parent=11 // pred_check_branch
          %334 = sbr.rel (%p332) target = $region48
        $region47: #{tpu_custom_call.1} parent=11 // pred_region
          _
        $region48: #{tpu_custom_call.1} parent=11 // pred_fallthru
          _
      $region12: #{tpu_custom_call.1} parent=5 // pred_fallthru
        _
      %p335 = scmp.lt.s32.totalorder %s24, 2
      // Predicated region
      $region49: #{tpu_custom_call.1} parent=5 // pred_check
        %p336 = pneg %p335
      $region50: #{tpu_custom_call.1} parent=5 // pred_check_branch
        %338 = sbr.rel (%p336) target = $region52
      $region51: #{tpu_custom_call.1} parent=5 // pred_region
        // Predicated region
        $region53: #{tpu_custom_call.1} parent=51 // pred_check
          %p339 = pneg %p44
        $region54: #{tpu_custom_call.1} parent=51 // pred_check_branch
          %341 = sbr.rel (%p339) target = $region56
        $region55: #{tpu_custom_call.1} parent=51 // pred_region
          %s342 = sand.u32 %s34, 1
          %s343 = scalar_lea.sflag [#allocation3], %s342
          %s344 = sand.u32 %s34, 1
          %s345 = smul.addr %s344, 8
          %s346 = scalar_lea.vmem [#allocation2], %s345
          %s348 = ssub.s32 128, 128
          %349 = vsyncadd %s343, %s348
          %s350 = smul.addr %s24, 128
          %s351 = scalar_lea.hbm %s0, %s350
          %s353 = sshll.u32 %s346, 4
          %s354 = int_to_ptr.vmem [resolvable:$true] %s353
          %356 = dma.hbm_to_vmem [thread:$0]  %s351, 128, %s354, %s343
        $region56: #{tpu_custom_call.1} parent=51 // pred_fallthru
          _
      $region52: #{tpu_custom_call.1} parent=5 // pred_fallthru
        _
      %p357 = scmp.le.s32.totalorder 1, %s24
      %p358 = scmp.lt.s32.totalorder %s24, 3
      %p359 = pnand %p357, %p358
      %p360 = pneg %p359
      // Predicated region
      $region57: #{tpu_custom_call.1} parent=5 // pred_check
        _
      $region58: #{tpu_custom_call.1} parent=5 // pred_check_branch
        %362 = sbr.rel (%p359) target = $region60
      $region59: #{tpu_custom_call.1} parent=5 // pred_region
        %s363 = ssub.s32 %s24, 1
        %s364 = sand.u32 %s37, 1
        %s365 = scalar_lea.sflag [#allocation3], %s364
        %s366 = sand.u32 %s37, 1
        %s367 = smul.addr %s366, 8
        %s368 = scalar_lea.vmem [#allocation2], %s367
        // Predicated region
        $region61: #{tpu_custom_call.1} parent=59 // pred_check
          %p369 = pneg %p50
        $region62: #{tpu_custom_call.1} parent=59 // pred_check_branch
          %371 = sbr.rel (%p369) target = $region64
        $region63: #{tpu_custom_call.1} parent=59 // pred_region
          %372 = dma.done %s365, 128
        $region64: #{tpu_custom_call.1} parent=59 // pred_fallthru
          _
        // Predicated region
        $region65: #{tpu_custom_call.1} parent=59 // pred_check
          %p373 = pneg %p113
        $region66: #{tpu_custom_call.1} parent=59 // pred_check_branch
          %375 = sbr.rel (%p373) target = $region68
        $region67: #{tpu_custom_call.1} parent=59 // pred_region
          %376 = dma.done [#allocation6], 64
        $region68: #{tpu_custom_call.1} parent=59 // pred_fallthru
          _
        // Predicated region
        $region69: #{tpu_custom_call.1} parent=59 // pred_check
          %p377 = pneg %p155
        $region70: #{tpu_custom_call.1} parent=59 // pred_check_branch
          %379 = sbr.rel (%p377) target = $region72
        $region71: #{tpu_custom_call.1} parent=59 // pred_region
          %380 = dma.done [#allocation6], 512
        $region72: #{tpu_custom_call.1} parent=59 // pred_fallthru
          _
        // Predicated region
        $region73: #{tpu_custom_call.1} parent=59 // pred_check
          %p381 = pneg %p176
        $region74: #{tpu_custom_call.1} parent=59 // pred_check_branch
          %383 = sbr.rel (%p381) target = $region76
        $region75: #{tpu_custom_call.1} parent=59 // pred_region
          %384 = dma.done [#allocation9], 512
        $region76: #{tpu_custom_call.1} parent=59 // pred_fallthru
          _
        %s385 = sand.u32 %s37, 1
        %s386 = scalar_lea.sflag [#allocation3], %s385
        %s387 = sand.u32 %s37, 1
        %s388 = smul.addr %s387, 8
        %s389 = scalar_lea.vmem [#allocation2], %s388
        %p390 = pneg %p50
        %p391 = pneg %p47
        %p392 = pneg %p71
        %p393 = pneg %p68
        %p394 = pneg %p92
        %p395 = pneg %p89
        %p396 = pneg %p113
        %p397 = pneg %p110
        %p398 = pneg %p134
        %p399 = pneg %p131
        %p400 = pneg %p155
        %p401 = pneg %p152
        %p402 = pneg %p176
        %p403 = pneg %p173
        %p404 = pneg %p197
        %p405 = pneg %p194
        %p406 = pneg %p218
        %p407 = pneg %p215
        %p408 = pneg %p239
        %p409 = pneg %p236
        %p410 = pneg %p265
        %p411 = pneg %p262
        %s412 = sand.u32 %s252, 1
        %s413 = scalar_lea.sflag [#allocation4], %s412
        %s414 = sand.u32 %s252, 1
        %s415 = smul.addr %s414, 8
        %s416 = scalar_lea.vmem [#allocation10], %s415
        %v417 = vld [vmem:[%s368] sm:$0xff]
        %v418 = vld [vmem:[#allocation5] sm:$0x7]
        %v419 = vld [vmem:[%s2] sm:$0xff]
        %v420 = vld [vmem:[%s2 + $0x8] sm:$0xff]
        %v421 = vld [vmem:[%s2 + $0x10] sm:$0xff]
        %v422 = vld [vmem:[%s2 + $0x18] sm:$0xff]
        %v423 = vlaneseq
        %v424 = vshrl.u32 %v423, 7
        %v425 = vsub.s32 0, %v424
        %v426 = vrot.slane %v418, %v425
        %vm427 = vcmask 261120
        %v429 = vsel %vm427, %v417, 0
        %431 = vmatprep.subr.mxu0 0.0
        %432 = vmatpush1.msra.mxu0 %v419
        %433 = vmatprep.subr.mxu0 0.0
        %434 = vmatpush1.msra.mxu0 %v420
        %435 = vmatprep.subr.mxu0 0.0
        %436 = vmatpush1.msra.mxu0 %v421
        %437 = vmatprep.subr.mxu0 0.0
        %438 = vmatpush1.msra.mxu0 %v422
        %439 = vmatprep.subr.mxu0 0.0
        %440 = vmatpush1.msra.mxu0 0.0
        %441 = vmatprep.subr.mxu0 0.0
        %442 = vmatpush1.msra.mxu0 0.0
        %443 = vmatprep.subr.mxu0 0.0
        %444 = vmatpush1.msra.mxu0 0.0
        %445 = vmatprep.subr.mxu0 0.0
        %446 = vmatpush1.msra.mxu0 0.0
        %447 = vmatprep.subr.mxu0 0.0
        %448 = vmatpush1.msra.mxu0 0.0
        %449 = vmatprep.subr.mxu0 0.0
        %450 = vmatpush1.msra.mxu0 0.0
        %451 = vmatprep.subr.mxu0 0.0
        %452 = vmatpush1.msra.mxu0 0.0
        %453 = vmatprep.subr.mxu0 0.0
        %454 = vmatpush1.msra.mxu0 0.0
        %455 = vmatprep.subr.mxu0 0.0
        %456 = vmatpush1.msra.mxu0 0.0
        %457 = vmatprep.subr.mxu0 0.0
        %458 = vmatpush1.msra.mxu0 0.0
        %459 = vmatprep.subr.mxu0 0.0
        %460 = vmatpush1.msra.mxu0 0.0
        %461 = vmatprep.subr.mxu0 0.0
        %462 = vmatpush1.msra.mxu0 0.0
        %463 = vmatprep.subr.mxu0 0.0
        %464 = vmatpush1.msra.mxu0 0.0
        %465 = vmatprep.subr.mxu0 0.0
        %466 = vmatpush1.msra.mxu0 0.0
        %467 = vmatprep.subr.mxu0 0.0
        %468 = vmatpush1.msra.mxu0 0.0
        %469 = vmatprep.subr.mxu0 0.0
        %470 = vmatpush1.msra.mxu0 0.0
        %471 = vmatprep.subr.mxu0 0.0
        %472 = vmatpush1.msra.mxu0 0.0
        %473 = vmatprep.subr.mxu0 0.0
        %474 = vmatpush1.msra.mxu0 0.0
        %475 = vmatprep.subr.mxu0 0.0
        %476 = vmatpush1.msra.mxu0 0.0
        %477 = vmatprep.subr.mxu0 0.0
        %478 = vmatpush1.msra.mxu0 0.0
        %479 = vmatprep.subr.mxu0 0.0
        %480 = vmatpush1.msra.mxu0 0.0
        %481 = vmatprep.subr.mxu0 0.0
        %482 = vmatpush1.msra.mxu0 0.0
        %483 = vmatprep.subr.mxu0 0.0
        %484 = vmatpush1.msra.mxu0 0.0
        %485 = vmatprep.subr.mxu0 0.0
        %486 = vmatpush1.msra.mxu0 0.0
        %487 = vmatprep.subr.mxu0 0.0
        %488 = vmatpush1.msra.mxu0 0.0
        %489 = vmatprep.subr.mxu0 0.0
        %490 = vmatpush1.msra.mxu0 0.0
        %491 = vmatprep.subr.mxu0 0.0
        %492 = vmatpush1.msra.mxu0 0.0
        %493 = vmatprep.subr.mxu0 0.0
        %494 = vmatpush1.msra.mxu0 0.0
        %495 = vmatprep.mubr.f32.mxu0 0.0
        %496 = vmatmul.mubr.f32.gmra.mrb[0].mxu0 %v429
        %v497 = vpop.f32.mrb[0].mxu0
        %v498 = vadd.f32 %v426, %v497
        %v499 = vpop.f32.mrb[0].mxu0
        %500 = vdwg.mxu0
        %s501 = scalar_lea.vmem %s2, 32
        %v502 = vld [vmem:[%s501] sm:$0xff]
        %v503 = vld [vmem:[%s501 + $0x8] sm:$0xff]
        %v504 = vld [vmem:[%s501 + $0x10] sm:$0xff]
        %v505 = vld [vmem:[%s501 + $0x18] sm:$0xff]
        %v506 = vlaneseq
        %v507 = vshrl.u32 %v506, 7
        %v508 = vsub.s32 1, %v507
        %v509 = vrot.slane %v418, %v508
        %510 = vmatprep.subr.mxu0 0.0
        %511 = vmatpush1.msra.mxu0 %v502
        %512 = vmatprep.subr.mxu0 0.0
        %513 = vmatpush1.msra.mxu0 %v503
        %514 = vmatprep.subr.mxu0 0.0
        %515 = vmatpush1.msra.mxu0 %v504
        %516 = vmatprep.subr.mxu0 0.0
        %517 = vmatpush1.msra.mxu0 %v505
        %518 = vmatprep.subr.mxu0 0.0
        %519 = vmatpush1.msra.mxu0 0.0
        %520 = vmatprep.subr.mxu0 0.0
        %521 = vmatpush1.msra.mxu0 0.0
        %522 = vmatprep.subr.mxu0 0.0
        %523 = vmatpush1.msra.mxu0 0.0
        %524 = vmatprep.subr.mxu0 0.0
        %525 = vmatpush1.msra.mxu0 0.0
        %526 = vmatprep.subr.mxu0 0.0
        %527 = vmatpush1.msra.mxu0 0.0
        %528 = vmatprep.subr.mxu0 0.0
        %529 = vmatpush1.msra.mxu0 0.0
        %530 = vmatprep.subr.mxu0 0.0
        %531 = vmatpush1.msra.mxu0 0.0
        %532 = vmatprep.subr.mxu0 0.0
        %533 = vmatpush1.msra.mxu0 0.0
        %534 = vmatprep.subr.mxu0 0.0
        %535 = vmatpush1.msra.mxu0 0.0
        %536 = vmatprep.subr.mxu0 0.0
        %537 = vmatpush1.msra.mxu0 0.0
        %538 = vmatprep.subr.mxu0 0.0
        %539 = vmatpush1.msra.mxu0 0.0
        %540 = vmatprep.subr.mxu0 0.0
        %541 = vmatpush1.msra.mxu0 0.0
        %542 = vmatprep.subr.mxu0 0.0
        %543 = vmatpush1.msra.mxu0 0.0
        %544 = vmatprep.subr.mxu0 0.0
        %545 = vmatpush1.msra.mxu0 0.0
        %546 = vmatprep.subr.mxu0 0.0
        %547 = vmatpush1.msra.mxu0 0.0
        %548 = vmatprep.subr.mxu0 0.0
        %549 = vmatpush1.msra.mxu0 0.0
        %550 = vmatprep.subr.mxu0 0.0
        %551 = vmatpush1.msra.mxu0 0.0
        %552 = vmatprep.subr.mxu0 0.0
        %553 = vmatpush1.msra.mxu0 0.0
        %554 = vmatprep.subr.mxu0 0.0
        %555 = vmatpush1.msra.mxu0 0.0
        %556 = vmatprep.subr.mxu0 0.0
        %557 = vmatpush1.msra.mxu0 0.0
        %558 = vmatprep.subr.mxu0 0.0
        %559 = vmatpush1.msra.mxu0 0.0
        %560 = vmatprep.subr.mxu0 0.0
        %561 = vmatpush1.msra.mxu0 0.0
        %562 = vmatprep.subr.mxu0 0.0
        %563 = vmatpush1.msra.mxu0 0.0
        %564 = vmatprep.subr.mxu0 0.0
        %565 = vmatpush1.msra.mxu0 0.0
        %566 = vmatprep.subr.mxu0 0.0
        %567 = vmatpush1.msra.mxu0 0.0
        %568 = vmatprep.subr.mxu0 0.0
        %569 = vmatpush1.msra.mxu0 0.0
        %570 = vmatprep.subr.mxu0 0.0
        %571 = vmatpush1.msra.mxu0 0.0
        %572 = vmatprep.subr.mxu0 0.0
        %573 = vmatpush1.msra.mxu0 0.0
        %574 = vmatprep.mubr.f32.mxu0 0.0
        %575 = vmatmul.mubr.f32.gmra.mrb[0].mxu0 %v429
        %v576 = vpop.f32.mrb[0].mxu0
        %v577 = vadd.f32 %v509, %v576
        %v578 = vpop.f32.mrb[0].mxu0
        %579 = vdwg.mxu0
        %s580 = scalar_lea.vmem %s2, 64
        %v581 = vld [vmem:[%s580] sm:$0xff]
        %v582 = vld [vmem:[%s580 + $0x8] sm:$0xff]
        %v583 = vld [vmem:[%s580 + $0x10] sm:$0xff]
        %v584 = vld [vmem:[%s580 + $0x18] sm:$0xff]
        %v585 = vlaneseq
        %v586 = vshrl.u32 %v585, 7
        %v587 = vsub.s32 2, %v586
        %v588 = vrot.slane %v418, %v587
        %589 = vmatprep.subr.mxu0 0.0
        %590 = vmatpush1.msra.mxu0 %v581
        %591 = vmatprep.subr.mxu0 0.0
        %592 = vmatpush1.msra.mxu0 %v582
        %593 = vmatprep.subr.mxu0 0.0
        %594 = vmatpush1.msra.mxu0 %v583
        %595 = vmatprep.subr.mxu0 0.0
        %596 = vmatpush1.msra.mxu0 %v584
        %597 = vmatprep.subr.mxu0 0.0
        %598 = vmatpush1.msra.mxu0 0.0
        %599 = vmatprep.subr.mxu0 0.0
        %600 = vmatpush1.msra.mxu0 0.0
        %601 = vmatprep.subr.mxu0 0.0
        %602 = vmatpush1.msra.mxu0 0.0
        %603 = vmatprep.subr.mxu0 0.0
        %604 = vmatpush1.msra.mxu0 0.0
        %605 = vmatprep.subr.mxu0 0.0
        %606 = vmatpush1.msra.mxu0 0.0
        %607 = vmatprep.subr.mxu0 0.0
        %608 = vmatpush1.msra.mxu0 0.0
        %609 = vmatprep.subr.mxu0 0.0
        %610 = vmatpush1.msra.mxu0 0.0
        %611 = vmatprep.subr.mxu0 0.0
        %612 = vmatpush1.msra.mxu0 0.0
        %613 = vmatprep.subr.mxu0 0.0
        %614 = vmatpush1.msra.mxu0 0.0
        %615 = vmatprep.subr.mxu0 0.0
        %616 = vmatpush1.msra.mxu0 0.0
        %617 = vmatprep.subr.mxu0 0.0
        %618 = vmatpush1.msra.mxu0 0.0
        %619 = vmatprep.subr.mxu0 0.0
        %620 = vmatpush1.msra.mxu0 0.0
        %621 = vmatprep.subr.mxu0 0.0
        %622 = vmatpush1.msra.mxu0 0.0
        %623 = vmatprep.subr.mxu0 0.0
        %624 = vmatpush1.msra.mxu0 0.0
        %625 = vmatprep.subr.mxu0 0.0
        %626 = vmatpush1.msra.mxu0 0.0
        %627 = vmatprep.subr.mxu0 0.0
        %628 = vmatpush1.msra.mxu0 0.0
        %629 = vmatprep.subr.mxu0 0.0
        %630 = vmatpush1.msra.mxu0 0.0
        %631 = vmatprep.subr.mxu0 0.0
        %632 = vmatpush1.msra.mxu0 0.0
        %633 = vmatprep.subr.mxu0 0.0
        %634 = vmatpush1.msra.mxu0 0.0
        %635 = vmatprep.subr.mxu0 0.0
        %636 = vmatpush1.msra.mxu0 0.0
        %637 = vmatprep.subr.mxu0 0.0
        %638 = vmatpush1.msra.mxu0 0.0
        %639 = vmatprep.subr.mxu0 0.0
        %640 = vmatpush1.msra.mxu0 0.0
        %641 = vmatprep.subr.mxu0 0.0
        %642 = vmatpush1.msra.mxu0 0.0
        %643 = vmatprep.subr.mxu0 0.0
        %644 = vmatpush1.msra.mxu0 0.0
        %645 = vmatprep.subr.mxu0 0.0
        %646 = vmatpush1.msra.mxu0 0.0
        %647 = vmatprep.subr.mxu0 0.0
        %648 = vmatpush1.msra.mxu0 0.0
        %649 = vmatprep.subr.mxu0 0.0
        %650 = vmatpush1.msra.mxu0 0.0
        %651 = vmatprep.subr.mxu0 0.0
        %652 = vmatpush1.msra.mxu0 0.0
        %653 = vmatprep.mubr.f32.mxu0 0.0
        %654 = vmatmul.mubr.f32.gmra.mrb[0].mxu0 %v429
        %v655 = vpop.f32.mrb[0].mxu0
        %v656 = vadd.f32 %v588, %v655
        %v657 = vpop.f32.mrb[0].mxu0
        %658 = vdwg.mxu0
        %s659 = scalar_lea.vmem %s1, %s29
        %v660 = vld [vmem:[%s659] sm:$0x1]
        %v661 = vlaneseq
        %v662 = vshrl.u32 %v661, 7
        %v663 = vsub.s32 0, %v662
        %v664 = vrot.slane %v660, %v663
        %666 = vbcast.lane.b32.xlu0 %v664, 256
        %v667 = vpop.permute.xlu0 %666
        %v668 = vmul.f32 %v667, %v664
        %v669 = vsub.f32 1.0, %v667
        %v670 = vsub.f32 1.0, %v660
        %v671 = vlaneseq
        %v672 = vshrl.u32 %v671, 7
        %v673 = vsub.s32 0, %v672
        %v674 = vrot.slane %v670, %v673
        %v675 = vmul.f32 %v669, %v674
        %v676 = vsub.f32 1.0, %v668
        %v677 = vsub.f32 %v676, %v675
        %v678 = vmul.f32 %v677, -100000.0
        %v679 = vld [vmem:[%s4] sm:$0x1]
        %v680 = vlaneseq
        %v681 = vshrl.u32 %v680, 7
        %v682 = vsub.s32 0, %v681
        %v683 = vrot.slane %v679, %v682
        %v684 = vmul.f32 %v498, %v683
        %v686 = vsel %vm427, %v684, 0
        %v689 = vsel %vm427, %v577, 0
        %691 = vmatprep.subr.mxu0 0.0
        %692 = vmatpush1.xpose.msra.mxu0 %v689
        %693 = vmatprep.subr.mxu0 0.0
        %694 = vmatpush1.xpose.msra.mxu0 0.0
        %695 = vmatprep.subr.mxu0 0.0
        %696 = vmatpush1.xpose.msra.mxu0 0.0
        %697 = vmatprep.subr.mxu0 0.0
        %698 = vmatpush1.xpose.msra.mxu0 0.0
        %699 = vmatprep.subr.mxu0 0.0
        %700 = vmatpush1.xpose.msra.mxu0 0.0
        %701 = vmatprep.subr.mxu0 0.0
        %702 = vmatpush1.xpose.msra.mxu0 0.0
        %703 = vmatprep.subr.mxu0 0.0
        %704 = vmatpush1.xpose.msra.mxu0 0.0
        %705 = vmatprep.subr.mxu0 0.0
        %706 = vmatpush1.xpose.msra.mxu0 0.0
        %707 = vmatprep.subr.mxu0 0.0
        %708 = vmatpush1.xpose.msra.mxu0 0.0
        %709 = vmatprep.subr.mxu0 0.0
        %710 = vmatpush1.xpose.msra.mxu0 0.0
        %711 = vmatprep.subr.mxu0 0.0
        %712 = vmatpush1.xpose.msra.mxu0 0.0
        %713 = vmatprep.subr.mxu0 0.0
        %714 = vmatpush1.xpose.msra.mxu0 0.0
        %715 = vmatprep.subr.mxu0 0.0
        %716 = vmatpush1.xpose.msra.mxu0 0.0
        %717 = vmatprep.subr.mxu0 0.0
        %718 = vmatpush1.xpose.msra.mxu0 0.0
        %719 = vmatprep.subr.mxu0 0.0
        %720 = vmatpush1.xpose.msra.mxu0 0.0
        %721 = vmatprep.subr.mxu0 0.0
        %722 = vmatpush1.xpose.msra.mxu0 0.0
        %723 = vmatprep.subr.mxu0 0.0
        %724 = vmatpush1.xpose.msra.mxu0 0.0
        %725 = vmatprep.subr.mxu0 0.0
        %726 = vmatpush1.xpose.msra.mxu0 0.0
        %727 = vmatprep.subr.mxu0 0.0
        %728 = vmatpush1.xpose.msra.mxu0 0.0
        %729 = vmatprep.subr.mxu0 0.0
        %730 = vmatpush1.xpose.msra.mxu0 0.0
        %731 = vmatprep.subr.mxu0 0.0
        %732 = vmatpush1.xpose.msra.mxu0 0.0
        %733 = vmatprep.subr.mxu0 0.0
        %734 = vmatpush1.xpose.msra.mxu0 0.0
        %735 = vmatprep.subr.mxu0 0.0
        %736 = vmatpush1.xpose.msra.mxu0 0.0
        %737 = vmatprep.subr.mxu0 0.0
        %738 = vmatpush1.xpose.msra.mxu0 0.0
        %739 = vmatprep.subr.mxu0 0.0
        %740 = vmatpush1.xpose.msra.mxu0 0.0
        %741 = vmatprep.subr.mxu0 0.0
        %742 = vmatpush1.xpose.msra.mxu0 0.0
        %743 = vmatprep.subr.mxu0 0.0
        %744 = vmatpush1.xpose.msra.mxu0 0.0
        %745 = vmatprep.subr.mxu0 0.0
        %746 = vmatpush1.xpose.msra.mxu0 0.0
        %747 = vmatprep.subr.mxu0 0.0
        %748 = vmatpush1.xpose.msra.mxu0 0.0
        %749 = vmatprep.subr.mxu0 0.0
        %750 = vmatpush1.xpose.msra.mxu0 0.0
        %751 = vmatprep.subr.mxu0 0.0
        %752 = vmatpush1.xpose.msra.mxu0 0.0
        %753 = vmatprep.subr.mxu0 0.0
        %754 = vmatpush1.xpose.msra.mxu0 0.0
        %755 = vmatprep.mubr.f32.mxu0 0.0
        %756 = vmatmul.mubr.f32.gmra.mrb[0].mxu0 %v686
        %v757 = vpop.f32.mrb[0].mxu0
        %v758 = vadd.f32 0.0, %v757
        %v759 = vpop.f32.mrb[0].mxu0
        %760 = vdwg.mxu0
        %v761 = vmul.f32 %v758, 0.35355338
        %v762 = vadd.f32 %v761, %v678
        %vm763 = vcmask 64512
        %v764 = vsel %vm763, %v762, -inf
        %765 = vmax.xlane.f32.xlu0 %v764
        %v766 = vpop.xlane.xlu0 %765
        %v767 = vsub.f32 %v762, %v766
        %v768 = vmul.f32 %v767, 1.442695
        %v769 = vpow.pop %v768
        %v770 = vsel %vm763, %v769, 0.0
        %771 = vadd.xlane.f32.xlu0 %v770
        %v772 = vpop.xlane.xlu0 %771
        %v773 = vrcp.pop %v772
        %v774 = vmul.f32 %v769, %v773
        %v775 = vmul.f32 %v656, %v683
        %v776 = vld [vmem:[%s4 + $0x1] sm:$0x1]
        %v777 = vlaneseq
        %v778 = vshrl.u32 %v777, 7
        %v779 = vsub.s32 0, %v778
        %v780 = vrot.slane %v776, %v779
        %v781 = vmul.f32 %v498, %v780
        %v783 = vsel %vm427, %v781, 0
        %785 = vmatprep.subr.mxu0 0.0
        %786 = vmatpush1.xpose.msra.mxu0 %v689
        %787 = vmatprep.subr.mxu0 0.0
        %788 = vmatpush1.xpose.msra.mxu0 0.0
        %789 = vmatprep.subr.mxu0 0.0
        %790 = vmatpush1.xpose.msra.mxu0 0.0
        %791 = vmatprep.subr.mxu0 0.0
        %792 = vmatpush1.xpose.msra.mxu0 0.0
        %793 = vmatprep.subr.mxu0 0.0
        %794 = vmatpush1.xpose.msra.mxu0 0.0
        %795 = vmatprep.subr.mxu0 0.0
        %796 = vmatpush1.xpose.msra.mxu0 0.0
        %797 = vmatprep.subr.mxu0 0.0
        %798 = vmatpush1.xpose.msra.mxu0 0.0
        %799 = vmatprep.subr.mxu0 0.0
        %800 = vmatpush1.xpose.msra.mxu0 0.0
        %801 = vmatprep.subr.mxu0 0.0
        %802 = vmatpush1.xpose.msra.mxu0 0.0
        %803 = vmatprep.subr.mxu0 0.0
        %804 = vmatpush1.xpose.msra.mxu0 0.0
        %805 = vmatprep.subr.mxu0 0.0
        %806 = vmatpush1.xpose.msra.mxu0 0.0
        %807 = vmatprep.subr.mxu0 0.0
        %808 = vmatpush1.xpose.msra.mxu0 0.0
        %809 = vmatprep.subr.mxu0 0.0
        %810 = vmatpush1.xpose.msra.mxu0 0.0
        %811 = vmatprep.subr.mxu0 0.0
        %812 = vmatpush1.xpose.msra.mxu0 0.0
        %813 = vmatprep.subr.mxu0 0.0
        %814 = vmatpush1.xpose.msra.mxu0 0.0
        %815 = vmatprep.subr.mxu0 0.0
        %816 = vmatpush1.xpose.msra.mxu0 0.0
        %817 = vmatprep.subr.mxu0 0.0
        %818 = vmatpush1.xpose.msra.mxu0 0.0
        %819 = vmatprep.subr.mxu0 0.0
        %820 = vmatpush1.xpose.msra.mxu0 0.0
        %821 = vmatprep.subr.mxu0 0.0
        %822 = vmatpush1.xpose.msra.mxu0 0.0
        %823 = vmatprep.subr.mxu0 0.0
        %824 = vmatpush1.xpose.msra.mxu0 0.0
        %825 = vmatprep.subr.mxu0 0.0
        %826 = vmatpush1.xpose.msra.mxu0 0.0
        %827 = vmatprep.subr.mxu0 0.0
        %828 = vmatpush1.xpose.msra.mxu0 0.0
        %829 = vmatprep.subr.mxu0 0.0
        %830 = vmatpush1.xpose.msra.mxu0 0.0
        %831 = vmatprep.subr.mxu0 0.0
        %832 = vmatpush1.xpose.msra.mxu0 0.0
        %833 = vmatprep.subr.mxu0 0.0
        %834 = vmatpush1.xpose.msra.mxu0 0.0
        %835 = vmatprep.subr.mxu0 0.0
        %836 = vmatpush1.xpose.msra.mxu0 0.0
        %837 = vmatprep.subr.mxu0 0.0
        %838 = vmatpush1.xpose.msra.mxu0 0.0
        %839 = vmatprep.subr.mxu0 0.0
        %840 = vmatpush1.xpose.msra.mxu0 0.0
        %841 = vmatprep.subr.mxu0 0.0
        %842 = vmatpush1.xpose.msra.mxu0 0.0
        %843 = vmatprep.subr.mxu0 0.0
        %844 = vmatpush1.xpose.msra.mxu0 0.0
        %845 = vmatprep.subr.mxu0 0.0
        %846 = vmatpush1.xpose.msra.mxu0 0.0
        %847 = vmatprep.subr.mxu0 0.0
        %848 = vmatpush1.xpose.msra.mxu0 0.0
        %849 = vmatprep.mubr.f32.mxu0 0.0
        %850 = vmatmul.mubr.f32.gmra.mrb[0].mxu0 %v783
        %v851 = vpop.f32.mrb[0].mxu0
        %v852 = vadd.f32 0.0, %v851
        %v853 = vpop.f32.mrb[0].mxu0
        %854 = vdwg.mxu0
        %v855 = vmul.f32 %v852, 0.35355338
        %v856 = vadd.f32 %v855, %v678
        %v857 = vsel %vm763, %v856, -inf
        %858 = vmax.xlane.f32.xlu0 %v857
        %v859 = vpop.xlane.xlu0 %858
        %v860 = vsub.f32 %v856, %v859
        %v861 = vmul.f32 %v860, 1.442695
        %v862 = vpow.pop %v861
        %v863 = vsel %vm763, %v862, 0.0
        %864 = vadd.xlane.f32.xlu0 %v863
        %v865 = vpop.xlane.xlu0 %864
        %v866 = vrcp.pop %v865
        %v867 = vmul.f32 %v862, %v866
        %v868 = vmul.f32 %v656, %v780
        %v870 = vsel %vm763, %v867, 0
        %872 = vmatprep.subr.mxu0 0.0
        %873 = vmatpush1.msra.mxu0 %v868
        %874 = vmatprep.subr.mxu0 0.0
        %875 = vmatpush1.msra.mxu0 0.0
        %876 = vmatprep.subr.mxu0 0.0
        %877 = vmatpush1.msra.mxu0 0.0
        %878 = vmatprep.subr.mxu0 0.0
        %879 = vmatpush1.msra.mxu0 0.0
        %880 = vmatprep.subr.mxu0 0.0
        %881 = vmatpush1.msra.mxu0 0.0
        %882 = vmatprep.subr.mxu0 0.0
        %883 = vmatpush1.msra.mxu0 0.0
        %884 = vmatprep.subr.mxu0 0.0
        %885 = vmatpush1.msra.mxu0 0.0
        %886 = vmatprep.subr.mxu0 0.0
        %887 = vmatpush1.msra.mxu0 0.0
        %888 = vmatprep.subr.mxu0 0.0
        %889 = vmatpush1.msra.mxu0 0.0
        %890 = vmatprep.subr.mxu0 0.0
        %891 = vmatpush1.msra.mxu0 0.0
        %892 = vmatprep.subr.mxu0 0.0
        %893 = vmatpush1.msra.mxu0 0.0
        %894 = vmatprep.subr.mxu0 0.0
        %895 = vmatpush1.msra.mxu0 0.0
        %896 = vmatprep.subr.mxu0 0.0
        %897 = vmatpush1.msra.mxu0 0.0
        %898 = vmatprep.subr.mxu0 0.0
        %899 = vmatpush1.msra.mxu0 0.0
        %900 = vmatprep.subr.mxu0 0.0
        %901 = vmatpush1.msra.mxu0 0.0
        %902 = vmatprep.subr.mxu0 0.0
        %903 = vmatpush1.msra.mxu0 0.0
        %904 = vmatprep.subr.mxu0 0.0
        %905 = vmatpush1.msra.mxu0 0.0
        %906 = vmatprep.subr.mxu0 0.0
        %907 = vmatpush1.msra.mxu0 0.0
        %908 = vmatprep.subr.mxu0 0.0
        %909 = vmatpush1.msra.mxu0 0.0
        %910 = vmatprep.subr.mxu0 0.0
        %911 = vmatpush1.msra.mxu0 0.0
        %912 = vmatprep.subr.mxu0 0.0
        %913 = vmatpush1.msra.mxu0 0.0
        %914 = vmatprep.subr.mxu0 0.0
        %915 = vmatpush1.msra.mxu0 0.0
        %916 = vmatprep.subr.mxu0 0.0
        %917 = vmatpush1.msra.mxu0 0.0
        %918 = vmatprep.subr.mxu0 0.0
        %919 = vmatpush1.msra.mxu0 0.0
        %920 = vmatprep.subr.mxu0 0.0
        %921 = vmatpush1.msra.mxu0 0.0
        %922 = vmatprep.subr.mxu0 0.0
        %923 = vmatpush1.msra.mxu0 0.0
        %924 = vmatprep.subr.mxu0 0.0
        %925 = vmatpush1.msra.mxu0 0.0
        %926 = vmatprep.subr.mxu0 0.0
        %927 = vmatpush1.msra.mxu0 0.0
        %928 = vmatprep.subr.mxu0 0.0
        %929 = vmatpush1.msra.mxu0 0.0
        %930 = vmatprep.subr.mxu0 0.0
        %931 = vmatpush1.msra.mxu0 0.0
        %932 = vmatprep.subr.mxu0 0.0
        %933 = vmatpush1.msra.mxu0 0.0
        %934 = vmatprep.subr.mxu0 0.0
        %935 = vmatpush1.msra.mxu0 0.0
        %936 = vmatprep.mubr.f32.mxu0 0.0
        %937 = vmatmul.mubr.f32.gmra.mrb[0].mxu0 %v870
        %v938 = vpop.f32.mrb[0].mxu0
        %v939 = vadd.f32 0.0, %v938
        %v940 = vpop.f32.mrb[0].mxu0
        %941 = vdwg.mxu0
        %v943 = vsel %vm763, %v774, 0
        %945 = vmatprep.subr.mxu0 0.0
        %946 = vmatpush1.msra.mxu0 %v775
        %947 = vmatprep.subr.mxu0 0.0
        %948 = vmatpush1.msra.mxu0 0.0
        %949 = vmatprep.subr.mxu0 0.0
        %950 = vmatpush1.msra.mxu0 0.0
        %951 = vmatprep.subr.mxu0 0.0
        %952 = vmatpush1.msra.mxu0 0.0
        %953 = vmatprep.subr.mxu0 0.0
        %954 = vmatpush1.msra.mxu0 0.0
        %955 = vmatprep.subr.mxu0 0.0
        %956 = vmatpush1.msra.mxu0 0.0
        %957 = vmatprep.subr.mxu0 0.0
        %958 = vmatpush1.msra.mxu0 0.0
        %959 = vmatprep.subr.mxu0 0.0
        %960 = vmatpush1.msra.mxu0 0.0
        %961 = vmatprep.subr.mxu0 0.0
        %962 = vmatpush1.msra.mxu0 0.0
        %963 = vmatprep.subr.mxu0 0.0
        %964 = vmatpush1.msra.mxu0 0.0
        %965 = vmatprep.subr.mxu0 0.0
        %966 = vmatpush1.msra.mxu0 0.0
        %967 = vmatprep.subr.mxu0 0.0
        %968 = vmatpush1.msra.mxu0 0.0
        %969 = vmatprep.subr.mxu0 0.0
        %970 = vmatpush1.msra.mxu0 0.0
        %971 = vmatprep.subr.mxu0 0.0
        %972 = vmatpush1.msra.mxu0 0.0
        %973 = vmatprep.subr.mxu0 0.0
        %974 = vmatpush1.msra.mxu0 0.0
        %975 = vmatprep.subr.mxu0 0.0
        %976 = vmatpush1.msra.mxu0 0.0
        %977 = vmatprep.subr.mxu0 0.0
        %978 = vmatpush1.msra.mxu0 0.0
        %979 = vmatprep.subr.mxu0 0.0
        %980 = vmatpush1.msra.mxu0 0.0
        %981 = vmatprep.subr.mxu0 0.0
        %982 = vmatpush1.msra.mxu0 0.0
        %983 = vmatprep.subr.mxu0 0.0
        %984 = vmatpush1.msra.mxu0 0.0
        %985 = vmatprep.subr.mxu0 0.0
        %986 = vmatpush1.msra.mxu0 0.0
        %987 = vmatprep.subr.mxu0 0.0
        %988 = vmatpush1.msra.mxu0 0.0
        %989 = vmatprep.subr.mxu0 0.0
        %990 = vmatpush1.msra.mxu0 0.0
        %991 = vmatprep.subr.mxu0 0.0
        %992 = vmatpush1.msra.mxu0 0.0
        %993 = vmatprep.subr.mxu0 0.0
        %994 = vmatpush1.msra.mxu0 0.0
        %995 = vmatprep.subr.mxu0 0.0
        %996 = vmatpush1.msra.mxu0 0.0
        %997 = vmatprep.subr.mxu0 0.0
        %998 = vmatpush1.msra.mxu0 0.0
        %999 = vmatprep.subr.mxu0 0.0
        %1000 = vmatpush1.msra.mxu0 0.0
        %1001 = vmatprep.subr.mxu0 0.0
        %1002 = vmatpush1.msra.mxu0 0.0
        %1003 = vmatprep.subr.mxu0 0.0
        %1004 = vmatpush1.msra.mxu0 0.0
        %1005 = vmatprep.subr.mxu0 0.0
        %1006 = vmatpush1.msra.mxu0 0.0
        %1007 = vmatprep.subr.mxu0 0.0
        %1008 = vmatpush1.msra.mxu0 0.0
        %1009 = vmatprep.mubr.f32.mxu0 0.0
        %1010 = vmatmul.mubr.f32.gmra.mrb[0].mxu0 %v943
        %v1011 = vpop.f32.mrb[0].mxu0
        %v1012 = vadd.f32 %v939, %v1011
        %v1013 = vpop.f32.mrb[0].mxu0
        %1014 = vdwg.mxu0
        %v1015 = vld [vmem:[%s4 + $0x2] sm:$0x1]
        %v1016 = vlaneseq
        %v1017 = vshrl.u32 %v1016, 7
        %v1018 = vsub.s32 0, %v1017
        %v1019 = vrot.slane %v1015, %v1018
        %v1020 = vmul.f32 %v498, %v1019
        %v1022 = vsel %vm427, %v1020, 0
        %1024 = vmatprep.subr.mxu0 0.0
        %1025 = vmatpush1.xpose.msra.mxu0 %v689
        %1026 = vmatprep.subr.mxu0 0.0
        %1027 = vmatpush1.xpose.msra.mxu0 0.0
        %1028 = vmatprep.subr.mxu0 0.0
        %1029 = vmatpush1.xpose.msra.mxu0 0.0
        %1030 = vmatprep.subr.mxu0 0.0
        %1031 = vmatpush1.xpose.msra.mxu0 0.0
        %1032 = vmatprep.subr.mxu0 0.0
        %1033 = vmatpush1.xpose.msra.mxu0 0.0
        %1034 = vmatprep.subr.mxu0 0.0
        %1035 = vmatpush1.xpose.msra.mxu0 0.0
        %1036 = vmatprep.subr.mxu0 0.0
        %1037 = vmatpush1.xpose.msra.mxu0 0.0
        %1038 = vmatprep.subr.mxu0 0.0
        %1039 = vmatpush1.xpose.msra.mxu0 0.0
        %1040 = vmatprep.subr.mxu0 0.0
        %1041 = vmatpush1.xpose.msra.mxu0 0.0
        %1042 = vmatprep.subr.mxu0 0.0
        %1043 = vmatpush1.xpose.msra.mxu0 0.0
        %1044 = vmatprep.subr.mxu0 0.0
        %1045 = vmatpush1.xpose.msra.mxu0 0.0
        %1046 = vmatprep.subr.mxu0 0.0
        %1047 = vmatpush1.xpose.msra.mxu0 0.0
        %1048 = vmatprep.subr.mxu0 0.0
        %1049 = vmatpush1.xpose.msra.mxu0 0.0
        %1050 = vmatprep.subr.mxu0 0.0
        %1051 = vmatpush1.xpose.msra.mxu0 0.0
        %1052 = vmatprep.subr.mxu0 0.0
        %1053 = vmatpush1.xpose.msra.mxu0 0.0
        %1054 = vmatprep.subr.mxu0 0.0
        %1055 = vmatpush1.xpose.msra.mxu0 0.0
        %1056 = vmatprep.subr.mxu0 0.0
        %1057 = vmatpush1.xpose.msra.mxu0 0.0
        %1058 = vmatprep.subr.mxu0 0.0
        %1059 = vmatpush1.xpose.msra.mxu0 0.0
        %1060 = vmatprep.subr.mxu0 0.0
        %1061 = vmatpush1.xpose.msra.mxu0 0.0
        %1062 = vmatprep.subr.mxu0 0.0
        %1063 = vmatpush1.xpose.msra.mxu0 0.0
        %1064 = vmatprep.subr.mxu0 0.0
        %1065 = vmatpush1.xpose.msra.mxu0 0.0
        %1066 = vmatprep.subr.mxu0 0.0
        %1067 = vmatpush1.xpose.msra.mxu0 0.0
        %1068 = vmatprep.subr.mxu0 0.0
        %1069 = vmatpush1.xpose.msra.mxu0 0.0
        %1070 = vmatprep.subr.mxu0 0.0
        %1071 = vmatpush1.xpose.msra.mxu0 0.0
        %1072 = vmatprep.subr.mxu0 0.0
        %1073 = vmatpush1.xpose.msra.mxu0 0.0
        %1074 = vmatprep.subr.mxu0 0.0
        %1075 = vmatpush1.xpose.msra.mxu0 0.0
        %1076 = vmatprep.subr.mxu0 0.0
        %1077 = vmatpush1.xpose.msra.mxu0 0.0
        %1078 = vmatprep.subr.mxu0 0.0
        %1079 = vmatpush1.xpose.msra.mxu0 0.0
        %1080 = vmatprep.subr.mxu0 0.0
        %1081 = vmatpush1.xpose.msra.mxu0 0.0
        %1082 = vmatprep.subr.mxu0 0.0
        %1083 = vmatpush1.xpose.msra.mxu0 0.0
        %1084 = vmatprep.subr.mxu0 0.0
        %1085 = vmatpush1.xpose.msra.mxu0 0.0
        %1086 = vmatprep.subr.mxu0 0.0
        %1087 = vmatpush1.xpose.msra.mxu0 0.0
        %1088 = vmatprep.mubr.f32.mxu0 0.0
        %1089 = vmatmul.mubr.f32.gmra.mrb[0].mxu0 %v1022
        %v1090 = vpop.f32.mrb[0].mxu0
        %v1091 = vadd.f32 0.0, %v1090
        %v1092 = vpop.f32.mrb[0].mxu0
        %1093 = vdwg.mxu0
        %v1094 = vmul.f32 %v1091, 0.35355338
        %v1095 = vadd.f32 %v1094, %v678
        %v1096 = vsel %vm763, %v1095, -inf
        %1097 = vmax.xlane.f32.xlu0 %v1096
        %v1098 = vpop.xlane.xlu0 %1097
        %v1099 = vsub.f32 %v1095, %v1098
        %v1100 = vmul.f32 %v1099, 1.442695
        %v1101 = vpow.pop %v1100
        %v1102 = vsel %vm763, %v1101, 0.0
        %1103 = vadd.xlane.f32.xlu0 %v1102
        %v1104 = vpop.xlane.xlu0 %1103
        %v1105 = vrcp.pop %v1104
        %v1106 = vmul.f32 %v1101, %v1105
        %v1107 = vmul.f32 %v656, %v1019
        %v1109 = vsel %vm763, %v1106, 0
        %1111 = vmatprep.subr.mxu0 0.0
        %1112 = vmatpush1.msra.mxu0 %v1107
        %1113 = vmatprep.subr.mxu0 0.0
        %1114 = vmatpush1.msra.mxu0 0.0
        %1115 = vmatprep.subr.mxu0 0.0
        %1116 = vmatpush1.msra.mxu0 0.0
        %1117 = vmatprep.subr.mxu0 0.0
        %1118 = vmatpush1.msra.mxu0 0.0
        %1119 = vmatprep.subr.mxu0 0.0
        %1120 = vmatpush1.msra.mxu0 0.0
        %1121 = vmatprep.subr.mxu0 0.0
        %1122 = vmatpush1.msra.mxu0 0.0
        %1123 = vmatprep.subr.mxu0 0.0
        %1124 = vmatpush1.msra.mxu0 0.0
        %1125 = vmatprep.subr.mxu0 0.0
        %1126 = vmatpush1.msra.mxu0 0.0
        %1127 = vmatprep.subr.mxu0 0.0
        %1128 = vmatpush1.msra.mxu0 0.0
        %1129 = vmatprep.subr.mxu0 0.0
        %1130 = vmatpush1.msra.mxu0 0.0
        %1131 = vmatprep.subr.mxu0 0.0
        %1132 = vmatpush1.msra.mxu0 0.0
        %1133 = vmatprep.subr.mxu0 0.0
        %1134 = vmatpush1.msra.mxu0 0.0
        %1135 = vmatprep.subr.mxu0 0.0
        %1136 = vmatpush1.msra.mxu0 0.0
        %1137 = vmatprep.subr.mxu0 0.0
        %1138 = vmatpush1.msra.mxu0 0.0
        %1139 = vmatprep.subr.mxu0 0.0
        %1140 = vmatpush1.msra.mxu0 0.0
        %1141 = vmatprep.subr.mxu0 0.0
        %1142 = vmatpush1.msra.mxu0 0.0
        %1143 = vmatprep.subr.mxu0 0.0
        %1144 = vmatpush1.msra.mxu0 0.0
        %1145 = vmatprep.subr.mxu0 0.0
        %1146 = vmatpush1.msra.mxu0 0.0
        %1147 = vmatprep.subr.mxu0 0.0
        %1148 = vmatpush1.msra.mxu0 0.0
        %1149 = vmatprep.subr.mxu0 0.0
        %1150 = vmatpush1.msra.mxu0 0.0
        %1151 = vmatprep.subr.mxu0 0.0
        %1152 = vmatpush1.msra.mxu0 0.0
        %1153 = vmatprep.subr.mxu0 0.0
        %1154 = vmatpush1.msra.mxu0 0.0
        %1155 = vmatprep.subr.mxu0 0.0
        %1156 = vmatpush1.msra.mxu0 0.0
        %1157 = vmatprep.subr.mxu0 0.0
        %1158 = vmatpush1.msra.mxu0 0.0
        %1159 = vmatprep.subr.mxu0 0.0
        %1160 = vmatpush1.msra.mxu0 0.0
        %1161 = vmatprep.subr.mxu0 0.0
        %1162 = vmatpush1.msra.mxu0 0.0
        %1163 = vmatprep.subr.mxu0 0.0
        %1164 = vmatpush1.msra.mxu0 0.0
        %1165 = vmatprep.subr.mxu0 0.0
        %1166 = vmatpush1.msra.mxu0 0.0
        %1167 = vmatprep.subr.mxu0 0.0
        %1168 = vmatpush1.msra.mxu0 0.0
        %1169 = vmatprep.subr.mxu0 0.0
        %1170 = vmatpush1.msra.mxu0 0.0
        %1171 = vmatprep.subr.mxu0 0.0
        %1172 = vmatpush1.msra.mxu0 0.0
        %1173 = vmatprep.subr.mxu0 0.0
        %1174 = vmatpush1.msra.mxu0 0.0
        %1175 = vmatprep.mubr.f32.mxu0 0.0
        %1176 = vmatmul.mubr.f32.gmra.mrb[0].mxu0 %v1109
        %v1177 = vpop.f32.mrb[0].mxu0
        %v1178 = vadd.f32 0.0, %v1177
        %v1179 = vpop.f32.mrb[0].mxu0
        %1180 = vdwg.mxu0
        %v1181 = vadd.f32 %v1012, %v1178
        %v1182 = vld [vmem:[%s4 + $0x3] sm:$0x1]
        %v1183 = vlaneseq
        %v1184 = vshrl.u32 %v1183, 7
        %v1185 = vsub.s32 0, %v1184
        %v1186 = vrot.slane %v1182, %v1185
        %v1187 = vmul.f32 %v498, %v1186
        %v1189 = vsel %vm427, %v1187, 0
        %1191 = vmatprep.subr.mxu0 0.0
        %1192 = vmatpush1.xpose.msra.mxu0 %v689
        %1193 = vmatprep.subr.mxu0 0.0
        %1194 = vmatpush1.xpose.msra.mxu0 0.0
        %1195 = vmatprep.subr.mxu0 0.0
        %1196 = vmatpush1.xpose.msra.mxu0 0.0
        %1197 = vmatprep.subr.mxu0 0.0
        %1198 = vmatpush1.xpose.msra.mxu0 0.0
        %1199 = vmatprep.subr.mxu0 0.0
        %1200 = vmatpush1.xpose.msra.mxu0 0.0
        %1201 = vmatprep.subr.mxu0 0.0
        %1202 = vmatpush1.xpose.msra.mxu0 0.0
        %1203 = vmatprep.subr.mxu0 0.0
        %1204 = vmatpush1.xpose.msra.mxu0 0.0
        %1205 = vmatprep.subr.mxu0 0.0
        %1206 = vmatpush1.xpose.msra.mxu0 0.0
        %1207 = vmatprep.subr.mxu0 0.0
        %1208 = vmatpush1.xpose.msra.mxu0 0.0
        %1209 = vmatprep.subr.mxu0 0.0
        %1210 = vmatpush1.xpose.msra.mxu0 0.0
        %1211 = vmatprep.subr.mxu0 0.0
        %1212 = vmatpush1.xpose.msra.mxu0 0.0
        %1213 = vmatprep.subr.mxu0 0.0
        %1214 = vmatpush1.xpose.msra.mxu0 0.0
        %1215 = vmatprep.subr.mxu0 0.0
        %1216 = vmatpush1.xpose.msra.mxu0 0.0
        %1217 = vmatprep.subr.mxu0 0.0
        %1218 = vmatpush1.xpose.msra.mxu0 0.0
        %1219 = vmatprep.subr.mxu0 0.0
        %1220 = vmatpush1.xpose.msra.mxu0 0.0
        %1221 = vmatprep.subr.mxu0 0.0
        %1222 = vmatpush1.xpose.msra.mxu0 0.0
        %1223 = vmatprep.subr.mxu0 0.0
        %1224 = vmatpush1.xpose.msra.mxu0 0.0
        %1225 = vmatprep.subr.mxu0 0.0
        %1226 = vmatpush1.xpose.msra.mxu0 0.0
        %1227 = vmatprep.subr.mxu0 0.0
        %1228 = vmatpush1.xpose.msra.mxu0 0.0
        %1229 = vmatprep.subr.mxu0 0.0
        %1230 = vmatpush1.xpose.msra.mxu0 0.0
        %1231 = vmatprep.subr.mxu0 0.0
        %1232 = vmatpush1.xpose.msra.mxu0 0.0
        %1233 = vmatprep.subr.mxu0 0.0
        %1234 = vmatpush1.xpose.msra.mxu0 0.0
        %1235 = vmatprep.subr.mxu0 0.0
        %1236 = vmatpush1.xpose.msra.mxu0 0.0
        %1237 = vmatprep.subr.mxu0 0.0
        %1238 = vmatpush1.xpose.msra.mxu0 0.0
        %1239 = vmatprep.subr.mxu0 0.0
        %1240 = vmatpush1.xpose.msra.mxu0 0.0
        %1241 = vmatprep.subr.mxu0 0.0
        %1242 = vmatpush1.xpose.msra.mxu0 0.0
        %1243 = vmatprep.subr.mxu0 0.0
        %1244 = vmatpush1.xpose.msra.mxu0 0.0
        %1245 = vmatprep.subr.mxu0 0.0
        %1246 = vmatpush1.xpose.msra.mxu0 0.0
        %1247 = vmatprep.subr.mxu0 0.0
        %1248 = vmatpush1.xpose.msra.mxu0 0.0
        %1249 = vmatprep.subr.mxu0 0.0
        %1250 = vmatpush1.xpose.msra.mxu0 0.0
        %1251 = vmatprep.subr.mxu0 0.0
        %1252 = vmatpush1.xpose.msra.mxu0 0.0
        %1253 = vmatprep.subr.mxu0 0.0
        %1254 = vmatpush1.xpose.msra.mxu0 0.0
        %1255 = vmatprep.mubr.f32.mxu0 0.0
        %1256 = vmatmul.mubr.f32.gmra.mrb[0].mxu0 %v1189
        %v1257 = vpop.f32.mrb[0].mxu0
        %v1258 = vadd.f32 0.0, %v1257
        %v1259 = vpop.f32.mrb[0].mxu0
        %1260 = vdwg.mxu0
        %v1261 = vmul.f32 %v1258, 0.35355338
        %v1262 = vadd.f32 %v1261, %v678
        %v1263 = vsel %vm763, %v1262, -inf
        %1264 = vmax.xlane.f32.xlu0 %v1263
        %v1265 = vpop.xlane.xlu0 %1264
        %v1266 = vsub.f32 %v1262, %v1265
        %v1267 = vmul.f32 %v1266, 1.442695
        %v1268 = vpow.pop %v1267
        %v1269 = vsel %vm763, %v1268, 0.0
        %1270 = vadd.xlane.f32.xlu0 %v1269
        %v1271 = vpop.xlane.xlu0 %1270
        %v1272 = vrcp.pop %v1271
        %v1273 = vmul.f32 %v1268, %v1272
        %v1274 = vmul.f32 %v656, %v1186
        %v1276 = vsel %vm763, %v1273, 0
        %1278 = vmatprep.subr.mxu0 0.0
        %1279 = vmatpush1.msra.mxu0 %v1274
        %1280 = vmatprep.subr.mxu0 0.0
        %1281 = vmatpush1.msra.mxu0 0.0
        %1282 = vmatprep.subr.mxu0 0.0
        %1283 = vmatpush1.msra.mxu0 0.0
        %1284 = vmatprep.subr.mxu0 0.0
        %1285 = vmatpush1.msra.mxu0 0.0
        %1286 = vmatprep.subr.mxu0 0.0
        %1287 = vmatpush1.msra.mxu0 0.0
        %1288 = vmatprep.subr.mxu0 0.0
        %1289 = vmatpush1.msra.mxu0 0.0
        %1290 = vmatprep.subr.mxu0 0.0
        %1291 = vmatpush1.msra.mxu0 0.0
        %1292 = vmatprep.subr.mxu0 0.0
        %1293 = vmatpush1.msra.mxu0 0.0
        %1294 = vmatprep.subr.mxu0 0.0
        %1295 = vmatpush1.msra.mxu0 0.0
        %1296 = vmatprep.subr.mxu0 0.0
        %1297 = vmatpush1.msra.mxu0 0.0
        %1298 = vmatprep.subr.mxu0 0.0
        %1299 = vmatpush1.msra.mxu0 0.0
        %1300 = vmatprep.subr.mxu0 0.0
        %1301 = vmatpush1.msra.mxu0 0.0
        %1302 = vmatprep.subr.mxu0 0.0
        %1303 = vmatpush1.msra.mxu0 0.0
        %1304 = vmatprep.subr.mxu0 0.0
        %1305 = vmatpush1.msra.mxu0 0.0
        %1306 = vmatprep.subr.mxu0 0.0
        %1307 = vmatpush1.msra.mxu0 0.0
        %1308 = vmatprep.subr.mxu0 0.0
        %1309 = vmatpush1.msra.mxu0 0.0
        %1310 = vmatprep.subr.mxu0 0.0
        %1311 = vmatpush1.msra.mxu0 0.0
        %1312 = vmatprep.subr.mxu0 0.0
        %1313 = vmatpush1.msra.mxu0 0.0
        %1314 = vmatprep.subr.mxu0 0.0
        %1315 = vmatpush1.msra.mxu0 0.0
        %1316 = vmatprep.subr.mxu0 0.0
        %1317 = vmatpush1.msra.mxu0 0.0
        %1318 = vmatprep.subr.mxu0 0.0
        %1319 = vmatpush1.msra.mxu0 0.0
        %1320 = vmatprep.subr.mxu0 0.0
        %1321 = vmatpush1.msra.mxu0 0.0
        %1322 = vmatprep.subr.mxu0 0.0
        %1323 = vmatpush1.msra.mxu0 0.0
        %1324 = vmatprep.subr.mxu0 0.0
        %1325 = vmatpush1.msra.mxu0 0.0
        %1326 = vmatprep.subr.mxu0 0.0
        %1327 = vmatpush1.msra.mxu0 0.0
        %1328 = vmatprep.subr.mxu0 0.0
        %1329 = vmatpush1.msra.mxu0 0.0
        %1330 = vmatprep.subr.mxu0 0.0
        %1331 = vmatpush1.msra.mxu0 0.0
        %1332 = vmatprep.subr.mxu0 0.0
        %1333 = vmatpush1.msra.mxu0 0.0
        %1334 = vmatprep.subr.mxu0 0.0
        %1335 = vmatpush1.msra.mxu0 0.0
        %1336 = vmatprep.subr.mxu0 0.0
        %1337 = vmatpush1.msra.mxu0 0.0
        %1338 = vmatprep.subr.mxu0 0.0
        %1339 = vmatpush1.msra.mxu0 0.0
        %1340 = vmatprep.subr.mxu0 0.0
        %1341 = vmatpush1.msra.mxu0 0.0
        %1342 = vmatprep.mubr.f32.mxu0 0.0
        %1343 = vmatmul.mubr.f32.gmra.mrb[0].mxu0 %v1276
        %v1344 = vpop.f32.mrb[0].mxu0
        %v1345 = vadd.f32 0.0, %v1344
        %v1346 = vpop.f32.mrb[0].mxu0
        %1347 = vdwg.mxu0
        %v1348 = vadd.f32 %v1181, %v1345
        %v1349 = vld [vmem:[%s9] sm:$0x3f]
        %v1350 = vld [vmem:[#allocation7] sm:$0xff]
        %v1351 = vld [vmem:[#allocation7 + $0x8] sm:$0xff]
        %v1352 = vld [vmem:[#allocation7 + $0x10] sm:$0xff]
        %v1353 = vld [vmem:[#allocation7 + $0x18] sm:$0xff]
        %v1354 = vlaneseq
        %v1355 = vshrl.u32 %v1354, 7
        %v1356 = vsub.s32 0, %v1355
        %v1357 = vrot.slane %v1349, %v1356
        %v1359 = vsel %vm427, %v1348, 0
        %1361 = vmatprep.subr.mxu0 0.0
        %1362 = vmatpush1.msra.mxu0 %v1350
        %1363 = vmatprep.subr.mxu0 0.0
        %1364 = vmatpush1.msra.mxu0 %v1351
        %1365 = vmatprep.subr.mxu0 0.0
        %1366 = vmatpush1.msra.mxu0 %v1352
        %1367 = vmatprep.subr.mxu0 0.0
        %1368 = vmatpush1.msra.mxu0 %v1353
        %1369 = vmatprep.subr.mxu0 0.0
        %1370 = vmatpush1.msra.mxu0 0.0
        %1371 = vmatprep.subr.mxu0 0.0
        %1372 = vmatpush1.msra.mxu0 0.0
        %1373 = vmatprep.subr.mxu0 0.0
        %1374 = vmatpush1.msra.mxu0 0.0
        %1375 = vmatprep.subr.mxu0 0.0
        %1376 = vmatpush1.msra.mxu0 0.0
        %1377 = vmatprep.subr.mxu0 0.0
        %1378 = vmatpush1.msra.mxu0 0.0
        %1379 = vmatprep.subr.mxu0 0.0
        %1380 = vmatpush1.msra.mxu0 0.0
        %1381 = vmatprep.subr.mxu0 0.0
        %1382 = vmatpush1.msra.mxu0 0.0
        %1383 = vmatprep.subr.mxu0 0.0
        %1384 = vmatpush1.msra.mxu0 0.0
        %1385 = vmatprep.subr.mxu0 0.0
        %1386 = vmatpush1.msra.mxu0 0.0
        %1387 = vmatprep.subr.mxu0 0.0
        %1388 = vmatpush1.msra.mxu0 0.0
        %1389 = vmatprep.subr.mxu0 0.0
        %1390 = vmatpush1.msra.mxu0 0.0
        %1391 = vmatprep.subr.mxu0 0.0
        %1392 = vmatpush1.msra.mxu0 0.0
        %1393 = vmatprep.subr.mxu0 0.0
        %1394 = vmatpush1.msra.mxu0 0.0
        %1395 = vmatprep.subr.mxu0 0.0
        %1396 = vmatpush1.msra.mxu0 0.0
        %1397 = vmatprep.subr.mxu0 0.0
        %1398 = vmatpush1.msra.mxu0 0.0
        %1399 = vmatprep.subr.mxu0 0.0
        %1400 = vmatpush1.msra.mxu0 0.0
        %1401 = vmatprep.subr.mxu0 0.0
        %1402 = vmatpush1.msra.mxu0 0.0
        %1403 = vmatprep.subr.mxu0 0.0
        %1404 = vmatpush1.msra.mxu0 0.0
        %1405 = vmatprep.subr.mxu0 0.0
        %1406 = vmatpush1.msra.mxu0 0.0
        %1407 = vmatprep.subr.mxu0 0.0
        %1408 = vmatpush1.msra.mxu0 0.0
        %1409 = vmatprep.subr.mxu0 0.0
        %1410 = vmatpush1.msra.mxu0 0.0
        %1411 = vmatprep.subr.mxu0 0.0
        %1412 = vmatpush1.msra.mxu0 0.0
        %1413 = vmatprep.subr.mxu0 0.0
        %1414 = vmatpush1.msra.mxu0 0.0
        %1415 = vmatprep.subr.mxu0 0.0
        %1416 = vmatpush1.msra.mxu0 0.0
        %1417 = vmatprep.subr.mxu0 0.0
        %1418 = vmatpush1.msra.mxu0 0.0
        %1419 = vmatprep.subr.mxu0 0.0
        %1420 = vmatpush1.msra.mxu0 0.0
        %1421 = vmatprep.subr.mxu0 0.0
        %1422 = vmatpush1.msra.mxu0 0.0
        %1423 = vmatprep.subr.mxu0 0.0
        %1424 = vmatpush1.msra.mxu0 0.0
        %1425 = vmatprep.mubr.f32.mxu0 0.0
        %1426 = vmatmul.mubr.f32.gmra.mrb[0].mxu0 %v1359
        %v1427 = vpop.f32.mrb[0].mxu0
        %v1428 = vadd.f32 %v1357, %v1427
        %v1429 = vpop.f32.mrb[0].mxu0
        %1430 = vdwg.mxu0
        %v1431 = vsel %vm427, %v1428, 0.0
        %1432 = vadd.xlane.f32.xlu0 %v1431
        %v1433 = vpop.xlane.xlu0 %1432
        %v1434 = vrcp.pop 32.0
        %v1435 = vmul.f32 %v1433, %v1434
        %v1436 = vsub.f32 %v1428, %v1435
        %v1437 = vmul.f32 %v1436, %v1436
        %v1438 = vsel %vm427, %v1437, 0.0
        %1439 = vadd.xlane.f32.xlu0 %v1438
        %v1440 = vpop.xlane.xlu0 %1439
        %v1441 = vmul.f32 %v1440, %v1434
        %v1442 = vadd.f32 %v1441, 1e-05
        %v1443 = vrsqrt.pop %v1442
        %v1444 = vmul.f32 %v1436, %v1443
        %v1445 = vlaneseq
        %v1446 = vshrl.u32 %v1445, 7
        %v1447 = vsub.s32 2, %v1446
        %v1448 = vrot.slane %v1349, %v1447
        %v1449 = vmul.f32 %v1444, %v1448
        %v1450 = vlaneseq
        %v1451 = vshrl.u32 %v1450, 7
        %v1452 = vsub.s32 3, %v1451
        %v1453 = vrot.slane %v1349, %v1452
        %v1454 = vadd.f32 %v1449, %v1453
        %v1455 = vadd.f32 %v1428, %v1454
        %v1456 = vld [vmem:[#allocation8] sm:$0xff]
        %v1457 = vld [vmem:[#allocation8 + $0x8] sm:$0xff]
        %v1458 = vld [vmem:[#allocation8 + $0x10] sm:$0xff]
        %v1459 = vld [vmem:[#allocation8 + $0x18] sm:$0xff]
        %v1460 = vld [vmem:[%s7] sm:$0x1]
        %v1462 = vlaneseq
        %v1463 = vshrl.u32 %v1462, 7
        %v1464 = vsub.s32 0, %v1463
        %v1465 = vrot.slane %v1460, %v1464
        %v1468 = vsel %vm427, %v1455, 0
        %1470 = vmatprep.subr.mxu0 0.0
        %1471 = vmatpush1.msra.mxu0 %v1456
        %1472 = vmatprep.subr.mxu0 0.0
        %1473 = vmatpush1.msra.mxu0 %v1457
        %1474 = vmatprep.subr.mxu0 0.0
        %1475 = vmatpush1.msra.mxu0 %v1458
        %1476 = vmatprep.subr.mxu0 0.0
        %1477 = vmatpush1.msra.mxu0 %v1459
        %1478 = vmatprep.subr.mxu0 0.0
        %1479 = vmatpush1.msra.mxu0 0.0
        %1480 = vmatprep.subr.mxu0 0.0
        %1481 = vmatpush1.msra.mxu0 0.0
        %1482 = vmatprep.subr.mxu0 0.0
        %1483 = vmatpush1.msra.mxu0 0.0
        %1484 = vmatprep.subr.mxu0 0.0
        %1485 = vmatpush1.msra.mxu0 0.0
        %1486 = vmatprep.subr.mxu0 0.0
        %1487 = vmatpush1.msra.mxu0 0.0
        %1488 = vmatprep.subr.mxu0 0.0
        %1489 = vmatpush1.msra.mxu0 0.0
        %1490 = vmatprep.subr.mxu0 0.0
        %1491 = vmatpush1.msra.mxu0 0.0
        %1492 = vmatprep.subr.mxu0 0.0
        %1493 = vmatpush1.msra.mxu0 0.0
        %1494 = vmatprep.subr.mxu0 0.0
        %1495 = vmatpush1.msra.mxu0 0.0
        %1496 = vmatprep.subr.mxu0 0.0
        %1497 = vmatpush1.msra.mxu0 0.0
        %1498 = vmatprep.subr.mxu0 0.0
        %1499 = vmatpush1.msra.mxu0 0.0
        %1500 = vmatprep.subr.mxu0 0.0
        %1501 = vmatpush1.msra.mxu0 0.0
        %1502 = vmatprep.subr.mxu0 0.0
        %1503 = vmatpush1.msra.mxu0 0.0
        %1504 = vmatprep.subr.mxu0 0.0
        %1505 = vmatpush1.msra.mxu0 0.0
        %1506 = vmatprep.subr.mxu0 0.0
        %1507 = vmatpush1.msra.mxu0 0.0
        %1508 = vmatprep.subr.mxu0 0.0
        %1509 = vmatpush1.msra.mxu0 0.0
        %1510 = vmatprep.subr.mxu0 0.0
        %1511 = vmatpush1.msra.mxu0 0.0
        %1512 = vmatprep.subr.mxu0 0.0
        %1513 = vmatpush1.msra.mxu0 0.0
        %1514 = vmatprep.subr.mxu0 0.0
        %1515 = vmatpush1.msra.mxu0 0.0
        %1516 = vmatprep.subr.mxu0 0.0
        %1517 = vmatpush1.msra.mxu0 0.0
        %1518 = vmatprep.subr.mxu0 0.0
        %1519 = vmatpush1.msra.mxu0 0.0
        %1520 = vmatprep.subr.mxu0 0.0
        %1521 = vmatpush1.msra.mxu0 0.0
        %1522 = vmatprep.subr.mxu0 0.0
        %1523 = vmatpush1.msra.mxu0 0.0
        %1524 = vmatprep.subr.mxu0 0.0
        %1525 = vmatpush1.msra.mxu0 0.0
        %1526 = vmatprep.subr.mxu0 0.0
        %1527 = vmatpush1.msra.mxu0 0.0
        %1528 = vmatprep.subr.mxu0 0.0
        %1529 = vmatpush1.msra.mxu0 0.0
        %1530 = vmatprep.subr.mxu0 0.0
        %1531 = vmatpush1.msra.mxu0 0.0
        %1532 = vmatprep.subr.mxu0 0.0
        %1533 = vmatpush1.msra.mxu0 0.0
        %1534 = vmatprep.mubr.f32.mxu0 0.0
        %1535 = vmatmul.mubr.f32.gmra.mrb[0].mxu0 %v1468
        %v1536 = vpop.f32.mrb[0].mxu0
        %v1537 = vadd.f32 %v1465, %v1536
        %v1538 = vpop.f32.mrb[0].mxu0
        %1539 = vdwg.mxu0
        %v1540 = vmul.f32 %v1537, 0.5
        %v1541 = vmul.f32 %v1537, 0.70710677
        %v1542 = verf.f32.pop %v1541
        %v1543 = vadd.f32 %v1542, 1.0
        %v1544 = vmul.f32 %v1540, %v1543
        %v1545 = vld [vmem:[%s8] sm:$0xff]
        %v1546 = vld [vmem:[%s8 + $0x8] sm:$0xff]
        %v1547 = vld [vmem:[%s8 + $0x10] sm:$0xff]
        %v1548 = vld [vmem:[%s8 + $0x18] sm:$0xff]
        %v1549 = vld [vmem:[%s8 + $0x20] sm:$0xff]
        %v1550 = vld [vmem:[%s8 + $0x28] sm:$0xff]
        %v1551 = vld [vmem:[%s8 + $0x30] sm:$0xff]
        %v1552 = vld [vmem:[%s8 + $0x38] sm:$0xff]
        %vm1553 = vcmask 523264
        %v1555 = vsel %vm1553, %v1544, 0
        %1557 = vmatprep.subr.mxu0 0.0
        %1558 = vmatpush1.msra.mxu0 %v1545
        %1559 = vmatprep.subr.mxu0 0.0
        %1560 = vmatpush1.msra.mxu0 %v1546
        %1561 = vmatprep.subr.mxu0 0.0
        %1562 = vmatpush1.msra.mxu0 %v1547
        %1563 = vmatprep.subr.mxu0 0.0
        %1564 = vmatpush1.msra.mxu0 %v1548
        %1565 = vmatprep.subr.mxu0 0.0
        %1566 = vmatpush1.msra.mxu0 %v1549
        %1567 = vmatprep.subr.mxu0 0.0
        %1568 = vmatpush1.msra.mxu0 %v1550
        %1569 = vmatprep.subr.mxu0 0.0
        %1570 = vmatpush1.msra.mxu0 %v1551
        %1571 = vmatprep.subr.mxu0 0.0
        %1572 = vmatpush1.msra.mxu0 %v1552
        %1573 = vmatprep.subr.mxu0 0.0
        %1574 = vmatpush1.msra.mxu0 0.0
        %1575 = vmatprep.subr.mxu0 0.0
        %1576 = vmatpush1.msra.mxu0 0.0
        %1577 = vmatprep.subr.mxu0 0.0
        %1578 = vmatpush1.msra.mxu0 0.0
        %1579 = vmatprep.subr.mxu0 0.0
        %1580 = vmatpush1.msra.mxu0 0.0
        %1581 = vmatprep.subr.mxu0 0.0
        %1582 = vmatpush1.msra.mxu0 0.0
        %1583 = vmatprep.subr.mxu0 0.0
        %1584 = vmatpush1.msra.mxu0 0.0
        %1585 = vmatprep.subr.mxu0 0.0
        %1586 = vmatpush1.msra.mxu0 0.0
        %1587 = vmatprep.subr.mxu0 0.0
        %1588 = vmatpush1.msra.mxu0 0.0
        %1589 = vmatprep.subr.mxu0 0.0
        %1590 = vmatpush1.msra.mxu0 0.0
        %1591 = vmatprep.subr.mxu0 0.0
        %1592 = vmatpush1.msra.mxu0 0.0
        %1593 = vmatprep.subr.mxu0 0.0
        %1594 = vmatpush1.msra.mxu0 0.0
        %1595 = vmatprep.subr.mxu0 0.0
        %1596 = vmatpush1.msra.mxu0 0.0
        %1597 = vmatprep.subr.mxu0 0.0
        %1598 = vmatpush1.msra.mxu0 0.0
        %1599 = vmatprep.subr.mxu0 0.0
        %1600 = vmatpush1.msra.mxu0 0.0
        %1601 = vmatprep.subr.mxu0 0.0
        %1602 = vmatpush1.msra.mxu0 0.0
        %1603 = vmatprep.subr.mxu0 0.0
        %1604 = vmatpush1.msra.mxu0 0.0
        %1605 = vmatprep.subr.mxu0 0.0
        %1606 = vmatpush1.msra.mxu0 0.0
        %1607 = vmatprep.subr.mxu0 0.0
        %1608 = vmatpush1.msra.mxu0 0.0
        %1609 = vmatprep.subr.mxu0 0.0
        %1610 = vmatpush1.msra.mxu0 0.0
        %1611 = vmatprep.subr.mxu0 0.0
        %1612 = vmatpush1.msra.mxu0 0.0
        %1613 = vmatprep.subr.mxu0 0.0
        %1614 = vmatpush1.msra.mxu0 0.0
        %1615 = vmatprep.subr.mxu0 0.0
        %1616 = vmatpush1.msra.mxu0 0.0
        %1617 = vmatprep.subr.mxu0 0.0
        %1618 = vmatpush1.msra.mxu0 0.0
        %1619 = vmatprep.subr.mxu0 0.0
        %1620 = vmatpush1.msra.mxu0 0.0
        %1621 = vmatprep.mubr.f32.mxu0 0.0
        %1622 = vmatmul.mubr.f32.gmra.mrb[0].mxu0 %v1555
        %v1623 = vpop.f32.mrb[0].mxu0
        %v1624 = vadd.f32 0.0, %v1623
        %v1625 = vpop.f32.mrb[0].mxu0
        %1626 = vdwg.mxu0
        %v1627 = vadd.f32 %v1455, %v1624
        %v1628 = vlaneseq
        %v1629 = vshrl.u32 %v1628, 7
        %v1630 = vsub.s32 1, %v1629
        %v1631 = vrot.slane %v1349, %v1630
        %v1632 = vadd.f32 %v1627, %v1631
        %v1633 = vsel %vm427, %v1632, 0.0
        %1634 = vadd.xlane.f32.xlu0 %v1633
        %v1635 = vpop.xlane.xlu0 %1634
        %v1636 = vmul.f32 %v1635, %v1434
        %v1637 = vsub.f32 %v1632, %v1636
        %v1638 = vmul.f32 %v1637, %v1637
        %v1639 = vsel %vm427, %v1638, 0.0
        %1640 = vadd.xlane.f32.xlu0 %v1639
        %v1641 = vpop.xlane.xlu0 %1640
        %v1642 = vmul.f32 %v1641, %v1434
        %v1643 = vadd.f32 %v1642, 1e-05
        %v1644 = vrsqrt.pop %v1643
        %v1645 = vmul.f32 %v1637, %v1644
        %v1646 = vlaneseq
        %v1647 = vshrl.u32 %v1646, 7
        %v1648 = vsub.s32 4, %v1647
        %v1649 = vrot.slane %v1349, %v1648
        %v1650 = vmul.f32 %v1645, %v1649
        %v1651 = vlaneseq
        %v1652 = vshrl.u32 %v1651, 7
        %v1653 = vsub.s32 5, %v1652
        %v1654 = vrot.slane %v1349, %v1653
        %v1655 = vadd.f32 %v1650, %v1654
        %1656 = vst.msk [vmem:[%s416] sm:$0xff] %vm427, %v1655
        %s1657 = sand.u32 %s252, 1
        %s1658 = scalar_lea.sflag [#allocation4], %s1657
        %s1659 = sand.u32 %s252, 1
        %s1660 = smul.addr %s1659, 8
        %s1661 = scalar_lea.vmem [#allocation10], %s1660
        // Predicated region
        $region77: #{tpu_custom_call.1} parent=59 // pred_check
          %p1662 = pneg %p262
        $region78: #{tpu_custom_call.1} parent=59 // pred_check_branch
          %1664 = sbr.rel (%p1662) target = $region80
        $region79: #{tpu_custom_call.1} parent=59 // pred_region
          %s1666 = ssub.s32 128, 128
          %1667 = vsyncadd %s1658, %s1666
          %s1668 = smul.addr %s29, 128
          %s1669 = scalar_lea.hbm %s10, %s1668
          %s1671 = sshll.u32 %s1661, 4
          %s1672 = int_to_ptr.vmem [resolvable:$true] %s1671
          %1674 = dma.vmem_to_hbm [thread:$0]  %s1672, 128, %s1669, %s1658
        $region80: #{tpu_custom_call.1} parent=59 // pred_fallthru
          _
      $region60: #{tpu_custom_call.1} parent=5 // pred_fallthru
        _
      %p1675 = scmp.le.s32.totalorder 2, %s24
      // Predicated region
      $region81: #{tpu_custom_call.1} parent=5 // pred_check
        %p1676 = pneg %p1675
      $region82: #{tpu_custom_call.1} parent=5 // pred_check_branch
        %1678 = sbr.rel (%p1676) target = $region84
      $region83: #{tpu_custom_call.1} parent=5 // pred_region
        %s1679 = ssub.s32 %s24, 2
        // Predicated region
        $region85: #{tpu_custom_call.1} parent=83 // pred_check
          %p1680 = pneg %p268
        $region86: #{tpu_custom_call.1} parent=83 // pred_check_branch
          %1682 = sbr.rel (%p1680) target = $region88
        $region87: #{tpu_custom_call.1} parent=83 // pred_region
          %s1683 = sand.u32 %s253, 1
          %s1684 = scalar_lea.sflag [#allocation4], %s1683
          %s1685 = sand.u32 %s253, 1
          %s1686 = smul.addr %s1685, 8
          %s1687 = scalar_lea.vmem [#allocation10], %s1686
          %1688 = dma.done %s1684, 128
        $region88: #{tpu_custom_call.1} parent=83 // pred_fallthru
          _
      $region84: #{tpu_custom_call.1} parent=5 // pred_fallthru
        _
    $region6: #{tpu_custom_call.1} parent=1 // loop_footer
      %s28 = sadd.s32 1, %s24
    $region7: #{tpu_custom_call.1} parent=1 // loop_footer_branch
      %23 = sbr.rel target = $region3
    $region8: #{tpu_custom_call.1} parent=1 // loop_exit
      _
    %1689 = vsyncpa [#allocation3], 1
    %s1690 = scalar_lea.sflag [#allocation3], 1
    %1691 = vsyncpa %s1690, 1
    %1692 = vsyncpa [#allocation6], 1
    %1693 = vsyncpa [#allocation9], 1
    %1694 = vsyncpa [#allocation4], 1
    %s1695 = scalar_lea.sflag [#allocation4], 1
    %1696 = vsyncpa %s1695, 1

// kernel: tpu_custom_call.1
$region0: #{tpu_custom_call.1}
  #allocation0 [shape = 'u32[]', space=smem, size = 0x4, offset = 0x4, fixed_abs, tag = 'smem constant byte address 0x4 - core index']
  #allocation1 [shape = 'u32[144,128]{1,0:T(1,128)}', space=vmem, size = 0x12000, scoped, tag = 'internal scratch']
  %s0 = inlined_call_operand.hbm [shape: f32[2,8,32], index: 0, kind: input, shape index: {}]
  %s1 = inlined_call_operand.vmem [shape: f32[2,8], index: 1, kind: input, shape index: {}]
  %s2 = inlined_call_operand.vmem [shape: f32[3,32,32], index: 2, kind: input, shape index: {}]
  %s3 = inlined_call_operand.hbm [shape: f32[3,32], index: 3, kind: input, shape index: {}]
  %s4 = inlined_call_operand.vmem [shape: f32[4,32], index: 4, kind: input, shape index: {}]
  %s5 = inlined_call_operand.hbm [shape: f32[32,32], index: 5, kind: input, shape index: {}]
  %s6 = inlined_call_operand.hbm [shape: f32[32,64], index: 6, kind: input, shape index: {}]
  %s7 = inlined_call_operand.vmem [shape: f32[1,64], index: 7, kind: input, shape index: {}]
  %s8 = inlined_call_operand.vmem [shape: f32[64,32], index: 8, kind: input, shape index: {}]
  %s9 = inlined_call_operand.vmem [shape: f32[6,32], index: 9, kind: input, shape index: {}]
  %s10 = inlined_call_operand.hbm [shape: f32[2,8,32], index: 10, kind: output, shape index: {}]
  %s11 = sld [smem:[#allocation0]]
  $region89: #{tpu_custom_call.1} parent=0
    _
  %s13 = ssub.s32 1, %s11
  %s14 = scalar_select 0, %s13, %s11
  $region1: #{tpu_custom_call.1} parent=0
    #allocation2 [shape = 'u8[8192]{0}', space=vmem, size = 0x2000, scoped, tag = 'input window, operand 0']
    #allocation3 [shape = 's32[2]{0}', space=sflag, size = 0x8, scoped, tag = 'scoped memory for tpu_custom_call.1']
    #allocation4 [shape = 's32[2]{0}', space=sflag, size = 0x8, scoped, tag = 'scoped memory for tpu_custom_call.1']
    #allocation5 [shape = 'u8[2048]{0}', space=vmem, size = 0x800, scoped, tag = 'input window, operand 3, single buffered']
    #allocation6 [shape = 's32[1]{0}', space=sflag, size = 0x4, scoped, tag = 'scoped memory for tpu_custom_call.1']
    #allocation7 [shape = 'u8[16384]{0}', space=vmem, size = 0x4000, scoped, tag = 'input window, operand 5, single buffered']
    #allocation8 [shape = 'u8[16384]{0}', space=vmem, size = 0x4000, scoped, tag = 'input window, operand 6, single buffered']
    #allocation9 [shape = 's32[1]{0}', space=sflag, size = 0x4, scoped, tag = 'scoped memory for tpu_custom_call.1']
    #allocation10 [shape = 'u8[8192]{0}', space=vmem, size = 0x2000, scoped, tag = 'output window, operand 0']
    %15 = vsyncpa [#allocation3], 0
    %s16 = scalar_lea.sflag [#allocation3], 1
    %17 = vsyncpa %s16, 0
    %18 = vsyncpa [#allocation6], 0
    %19 = vsyncpa [#allocation9], 0
    %20 = vsyncpa [#allocation4], 0
    %s21 = scalar_lea.sflag [#allocation4], 1
    %22 = vsyncpa %s21, 0
    loop: start=0, step=1, limit=4
    $region2: #{tpu_custom_call.1} parent=1 // loop_pre_header
      _
    $region3: #{tpu_custom_call.1} parent=1 // loop_header
      %s24 = sphi 0, %s28
      %p25 = scmp.ge.s32.totalorder %s24, 4
      %s34 = sphi 0, %s36
      %s37 = sphi 0, %s34
      %s38 = sphi 0, %s37
      %s54 = sphi 0, %s38
      %s58 = sphi 0, %s58
      %s60 = sphi 0, %s58
      %s61 = sphi 0, %s60
      %s75 = sphi 0, %s61
      %s79 = sphi 0, %s79
      %s81 = sphi 0, %s79
      %s82 = sphi 0, %s81
      %s96 = sphi 0, %s82
      %s100 = sphi 0, %s100
      %s102 = sphi 0, %s100
      %s103 = sphi 0, %s102
      %s117 = sphi 0, %s103
      %s121 = sphi 0, %s121
      %s123 = sphi 0, %s121
      %s124 = sphi 0, %s123
      %s138 = sphi 0, %s124
      %s142 = sphi 0, %s142
      %s144 = sphi 0, %s142
      %s145 = sphi 0, %s144
      %s159 = sphi 0, %s145
      %s163 = sphi 0, %s163
      %s165 = sphi 0, %s163
      %s166 = sphi 0, %s165
      %s180 = sphi 0, %s166
      %s184 = sphi 0, %s184
      %s186 = sphi 0, %s184
      %s187 = sphi 0, %s186
      %s201 = sphi 0, %s187
      %s205 = sphi 0, %s205
      %s207 = sphi 0, %s205
      %s208 = sphi 0, %s207
      %s222 = sphi 0, %s208
      %s226 = sphi 0, %s226
      %s228 = sphi 0, %s226
      %s229 = sphi 0, %s228
      %s243 = sphi 0, %s229
      %s249 = sphi 0, %s251
      %s252 = sphi 0, %s249
      %s253 = sphi 0, %s252
      %s269 = sphi 0, %s253
    $region4: #{tpu_custom_call.1} parent=1 // loop_header_branch
      %27 = sbr.rel (%p25) target = $region8
    $region5: #{tpu_custom_call.1} parent=1 // loop_body
      %s29 = ssub.s32 %s24, 1
      %s30 = ssub.s32 %s24, 2
      %s31 = sadd.s32 %s24, 1
      %s32 = ssub.s32 %s24, %s31
      %p33 = scmp.eq.s32.totalorder %s32, 0
      %s35 = sadd.s32 %s34, 1
      %s36 = scalar_select %p33, %s34, %s35
      %p39 = pneg %p33
      %p40 = scmp.eq.s32.totalorder %s24, 1
      %p41 = por %p39, %p40
      %p42 = scmp.ne.s32.totalorder %s34, %s37
      %p43 = scmp.eq.s32.totalorder %s24, 0
      %p44 = por %p42, %p43
      %p45 = scmp.ne.s32.totalorder %s34, %s37
      %p46 = scmp.eq.s32.totalorder %s29, 1
      %p47 = por %p45, %p46
      %p48 = scmp.ne.s32.totalorder %s37, %s38
      %p49 = scmp.eq.s32.totalorder %s29, 0
      %p50 = por %p48, %p49
      %p51 = scmp.ne.s32.totalorder %s37, %s38
      %p52 = scmp.eq.s32.totalorder %s30, 1
      %p53 = por %p51, %p52
      %p55 = scmp.ne.s32.totalorder %s38, %s54
      %p56 = scmp.eq.s32.totalorder %s30, 0
      %p57 = por %p55, %p56
      %s59 = sadd.s32 %s58, 1
      %p62 = scmp.eq.s32.totalorder %s24, 1
      %p63 = scmp.ne.s32.totalorder %s58, %s60
      %p64 = scmp.eq.s32.totalorder %s24, 0
      %p65 = por %p63, %p64
      %p66 = scmp.ne.s32.totalorder %s58, %s60
      %p67 = scmp.eq.s32.totalorder %s29, 1
      %p68 = por %p66, %p67
      %p69 = scmp.ne.s32.totalorder %s60, %s61
      %p70 = scmp.eq.s32.totalorder %s29, 0
      %p71 = por %p69, %p70
      %p72 = scmp.ne.s32.totalorder %s60, %s61
      %p73 = scmp.eq.s32.totalorder %s30, 1
      %p74 = por %p72, %p73
      %p76 = scmp.ne.s32.totalorder %s61, %s75
      %p77 = scmp.eq.s32.totalorder %s30, 0
      %p78 = por %p76, %p77
      %s80 = sadd.s32 %s79, 1
      %p83 = scmp.eq.s32.totalorder %s24, 1
      %p84 = scmp.ne.s32.totalorder %s79, %s81
      %p85 = scmp.eq.s32.totalorder %s24, 0
      %p86 = por %p84, %p85
      %p87 = scmp.ne.s32.totalorder %s79, %s81
      %p88 = scmp.eq.s32.totalorder %s29, 1
      %p89 = por %p87, %p88
      %p90 = scmp.ne.s32.totalorder %s81, %s82
      %p91 = scmp.eq.s32.totalorder %s29, 0
      %p92 = por %p90, %p91
      %p93 = scmp.ne.s32.totalorder %s81, %s82
      %p94 = scmp.eq.s32.totalorder %s30, 1
      %p95 = por %p93, %p94
      %p97 = scmp.ne.s32.totalorder %s82, %s96
      %p98 = scmp.eq.s32.totalorder %s30, 0
      %p99 = por %p97, %p98
      %s101 = sadd.s32 %s100, 1
      %p104 = scmp.eq.s32.totalorder %s24, 1
      %p105 = scmp.ne.s32.totalorder %s100, %s102
      %p106 = scmp.eq.s32.totalorder %s24, 0
      %p107 = por %p105, %p106
      %p108 = scmp.ne.s32.totalorder %s100, %s102
      %p109 = scmp.eq.s32.totalorder %s29, 1
      %p110 = por %p108, %p109
      %p111 = scmp.ne.s32.totalorder %s102, %s103
      %p112 = scmp.eq.s32.totalorder %s29, 0
      %p113 = por %p111, %p112
      %p114 = scmp.ne.s32.totalorder %s102, %s103
      %p115 = scmp.eq.s32.totalorder %s30, 1
      %p116 = por %p114, %p115
      %p118 = scmp.ne.s32.totalorder %s103, %s117
      %p119 = scmp.eq.s32.totalorder %s30, 0
      %p120 = por %p118, %p119
      %s122 = sadd.s32 %s121, 1
      %p125 = scmp.eq.s32.totalorder %s24, 1
      %p126 = scmp.ne.s32.totalorder %s121, %s123
      %p127 = scmp.eq.s32.totalorder %s24, 0
      %p128 = por %p126, %p127
      %p129 = scmp.ne.s32.totalorder %s121, %s123
      %p130 = scmp.eq.s32.totalorder %s29, 1
      %p131 = por %p129, %p130
      %p132 = scmp.ne.s32.totalorder %s123, %s124
      %p133 = scmp.eq.s32.totalorder %s29, 0
      %p134 = por %p132, %p133
      %p135 = scmp.ne.s32.totalorder %s123, %s124
      %p136 = scmp.eq.s32.totalorder %s30, 1
      %p137 = por %p135, %p136
      %p139 = scmp.ne.s32.totalorder %s124, %s138
      %p140 = scmp.eq.s32.totalorder %s30, 0
      %p141 = por %p139, %p140
      %s143 = sadd.s32 %s142, 1
      %p146 = scmp.eq.s32.totalorder %s24, 1
      %p147 = scmp.ne.s32.totalorder %s142, %s144
      %p148 = scmp.eq.s32.totalorder %s24, 0
      %p149 = por %p147, %p148
      %p150 = scmp.ne.s32.totalorder %s142, %s144
      %p151 = scmp.eq.s32.totalorder %s29, 1
      %p152 = por %p150, %p151
      %p153 = scmp.ne.s32.totalorder %s144, %s145
      %p154 = scmp.eq.s32.totalorder %s29, 0
      %p155 = por %p153, %p154
      %p156 = scmp.ne.s32.totalorder %s144, %s145
      %p157 = scmp.eq.s32.totalorder %s30, 1
      %p158 = por %p156, %p157
      %p160 = scmp.ne.s32.totalorder %s145, %s159
      %p161 = scmp.eq.s32.totalorder %s30, 0
      %p162 = por %p160, %p161
      %s164 = sadd.s32 %s163, 1
      %p167 = scmp.eq.s32.totalorder %s24, 1
      %p168 = scmp.ne.s32.totalorder %s163, %s165
      %p169 = scmp.eq.s32.totalorder %s24, 0
      %p170 = por %p168, %p169
      %p171 = scmp.ne.s32.totalorder %s163, %s165
      %p172 = scmp.eq.s32.totalorder %s29, 1
      %p173 = por %p171, %p172
      %p174 = scmp.ne.s32.totalorder %s165, %s166
      %p175 = scmp.eq.s32.totalorder %s29, 0
      %p176 = por %p174, %p175
      %p177 = scmp.ne.s32.totalorder %s165, %s166
      %p178 = scmp.eq.s32.totalorder %s30, 1
      %p179 = por %p177, %p178
      %p181 = scmp.ne.s32.totalorder %s166, %s180
      %p182 = scmp.eq.s32.totalorder %s30, 0
      %p183 = por %p181, %p182
      %s185 = sadd.s32 %s184, 1
      %p188 = scmp.eq.s32.totalorder %s24, 1
      %p189 = scmp.ne.s32.totalorder %s184, %s186
      %p190 = scmp.eq.s32.totalorder %s24, 0
      %p191 = por %p189, %p190
      %p192 = scmp.ne.s32.totalorder %s184, %s186
      %p193 = scmp.eq.s32.totalorder %s29, 1
      %p194 = por %p192, %p193
      %p195 = scmp.ne.s32.totalorder %s186, %s187
      %p196 = scmp.eq.s32.totalorder %s29, 0
      %p197 = por %p195, %p196
      %p198 = scmp.ne.s32.totalorder %s186, %s187
      %p199 = scmp.eq.s32.totalorder %s30, 1
      %p200 = por %p198, %p199
      %p202 = scmp.ne.s32.totalorder %s187, %s201
      %p203 = scmp.eq.s32.totalorder %s30, 0
      %p204 = por %p202, %p203
      %s206 = sadd.s32 %s205, 1
      %p209 = scmp.eq.s32.totalorder %s24, 1
      %p210 = scmp.ne.s32.totalorder %s205, %s207
      %p211 = scmp.eq.s32.totalorder %s24, 0
      %p212 = por %p210, %p211
      %p213 = scmp.ne.s32.totalorder %s205, %s207
      %p214 = scmp.eq.s32.totalorder %s29, 1
      %p215 = por %p213, %p214
      %p216 = scmp.ne.s32.totalorder %s207, %s208
      %p217 = scmp.eq.s32.totalorder %s29, 0
      %p218 = por %p216, %p217
      %p219 = scmp.ne.s32.totalorder %s207, %s208
      %p220 = scmp.eq.s32.totalorder %s30, 1
      %p221 = por %p219, %p220
      %p223 = scmp.ne.s32.totalorder %s208, %s222
      %p224 = scmp.eq.s32.totalorder %s30, 0
      %p225 = por %p223, %p224
      %s227 = sadd.s32 %s226, 1
      %p230 = scmp.eq.s32.totalorder %s24, 1
      %p231 = scmp.ne.s32.totalorder %s226, %s228
      %p232 = scmp.eq.s32.totalorder %s24, 0
      %p233 = por %p231, %p232
      %p234 = scmp.ne.s32.totalorder %s226, %s228
      %p235 = scmp.eq.s32.totalorder %s29, 1
      %p236 = por %p234, %p235
      %p237 = scmp.ne.s32.totalorder %s228, %s229
      %p238 = scmp.eq.s32.totalorder %s29, 0
      %p239 = por %p237, %p238
      %p240 = scmp.ne.s32.totalorder %s228, %s229
      %p241 = scmp.eq.s32.totalorder %s30, 1
      %p242 = por %p240, %p241
      %p244 = scmp.ne.s32.totalorder %s229, %s243
      %p245 = scmp.eq.s32.totalorder %s30, 0
      %p246 = por %p244, %p245
      %s247 = ssub.s32 %s24, %s31
      %p248 = scmp.eq.s32.totalorder %s247, 0
      %s250 = sadd.s32 %s249, 1
      %s251 = scalar_select %p248, %s249, %s250
      %p254 = pneg %p248
      %p255 = scmp.eq.s32.totalorder %s24, 1
      %p256 = por %p254, %p255
      %p257 = scmp.ne.s32.totalorder %s249, %s252
      %p258 = scmp.eq.s32.totalorder %s24, 0
      %p259 = por %p257, %p258
      %p260 = scmp.ne.s32.totalorder %s249, %s252
      %p261 = scmp.eq.s32.totalorder %s29, 1
      %p262 = por %p260, %p261
      %p263 = scmp.ne.s32.totalorder %s252, %s253
      %p264 = scmp.eq.s32.totalorder %s29, 0
      %p265 = por %p263, %p264
      %p266 = scmp.ne.s32.totalorder %s252, %s253
      %p267 = scmp.eq.s32.totalorder %s30, 1
      %p268 = por %p266, %p267
      %p270 = scmp.ne.s32.totalorder %s253, %s269
      %p271 = scmp.eq.s32.totalorder %s30, 0
      %p272 = por %p270, %p271
      %p273 = scmp.le.s32.totalorder 1, %s24
      %p274 = scmp.lt.s32.totalorder %s24, 3
      %p275 = pnand %p273, %p274
      %p276 = pneg %p275
      // Predicated region
      $region9: #{tpu_custom_call.1} parent=5 // pred_check
        _
      $region10: #{tpu_custom_call.1} parent=5 // pred_check_branch
        %278 = sbr.rel (%p275) target = $region12
      $region11: #{tpu_custom_call.1} parent=5 // pred_region
        %s279 = ssub.s32 %s24, 1
        // Predicated region
        $region13: #{tpu_custom_call.1} parent=11 // pred_check
          %p280 = pneg %p71
        $region14: #{tpu_custom_call.1} parent=11 // pred_check_branch
          %282 = sbr.rel (%p280) target = $region16
        $region15: #{tpu_custom_call.1} parent=11 // pred_region
          _
        $region16: #{tpu_custom_call.1} parent=11 // pred_fallthru
          _
        // Predicated region
        $region17: #{tpu_custom_call.1} parent=11 // pred_check
          %p283 = pneg %p92
        $region18: #{tpu_custom_call.1} parent=11 // pred_check_branch
          %285 = sbr.rel (%p283) target = $region20
        $region19: #{tpu_custom_call.1} parent=11 // pred_region
          _
        $region20: #{tpu_custom_call.1} parent=11 // pred_fallthru
          _
        // Predicated region
        $region21: #{tpu_custom_call.1} parent=11 // pred_check
          %p286 = pneg %p113
        $region22: #{tpu_custom_call.1} parent=11 // pred_check_branch
          %288 = sbr.rel (%p286) target = $region24
        $region23: #{tpu_custom_call.1} parent=11 // pred_region
          %s290 = ssub.s32 64, 64
          %291 = vsyncadd [#allocation6], %s290
          %s293 = sshll.u32 [#allocation5], 4
          %s294 = int_to_ptr.vmem [resolvable:$true] %s293
          %296 = dma.hbm_to_vmem [thread:$0]  %s3, 64, %s294, [#allocation6]
        $region24: #{tpu_custom_call.1} parent=11 // pred_fallthru
          _
        // Predicated region
        $region25: #{tpu_custom_call.1} parent=11 // pred_check
          %p297 = pneg %p134
        $region26: #{tpu_custom_call.1} parent=11 // pred_check_branch
          %299 = sbr.rel (%p297) target = $region28
        $region27: #{tpu_custom_call.1} parent=11 // pred_region
          _
        $region28: #{tpu_custom_call.1} parent=11 // pred_fallthru
          _
        // Predicated region
        $region29: #{tpu_custom_call.1} parent=11 // pred_check
          %p300 = pneg %p155
        $region30: #{tpu_custom_call.1} parent=11 // pred_check_branch
          %302 = sbr.rel (%p300) target = $region32
        $region31: #{tpu_custom_call.1} parent=11 // pred_region
          %s304 = ssub.s32 512, 512
          %305 = vsyncadd [#allocation6], %s304
          %s306 = sshll.u32 [#allocation7], 4
          %s307 = int_to_ptr.vmem [resolvable:$true] %s306
          %312 = dma.hbm_to_vmem [thread:$0]  %s5, 512, %s307, [#allocation6], 128, 128, 8
        $region32: #{tpu_custom_call.1} parent=11 // pred_fallthru
          _
        // Predicated region
        $region33: #{tpu_custom_call.1} parent=11 // pred_check
          %p313 = pneg %p176
        $region34: #{tpu_custom_call.1} parent=11 // pred_check_branch
          %315 = sbr.rel (%p313) target = $region36
        $region35: #{tpu_custom_call.1} parent=11 // pred_region
          %s317 = ssub.s32 512, 512
          %318 = vsyncadd [#allocation9], %s317
          %s319 = sshll.u32 [#allocation8], 4
          %s320 = int_to_ptr.vmem [resolvable:$true] %s319
          %325 = dma.hbm_to_vmem [thread:$0]  %s6, 512, %s320, [#allocation9], 128, 128, 8
        $region36: #{tpu_custom_call.1} parent=11 // pred_fallthru
          _
        // Predicated region
        $region37: #{tpu_custom_call.1} parent=11 // pred_check
          %p326 = pneg %p197
        $region38: #{tpu_custom_call.1} parent=11 // pred_check_branch
          %328 = sbr.rel (%p326) target = $region40
        $region39: #{tpu_custom_call.1} parent=11 // pred_region
          _
        $region40: #{tpu_custom_call.1} parent=11 // pred_fallthru
          _
        // Predicated region
        $region41: #{tpu_custom_call.1} parent=11 // pred_check
          %p329 = pneg %p218
        $region42: #{tpu_custom_call.1} parent=11 // pred_check_branch
          %331 = sbr.rel (%p329) target = $region44
        $region43: #{tpu_custom_call.1} parent=11 // pred_region
          _
        $region44: #{tpu_custom_call.1} parent=11 // pred_fallthru
          _
        // Predicated region
        $region45: #{tpu_custom_call.1} parent=11 // pred_check
          %p332 = pneg %p239
        $region46: #{tpu_custom_call.1} parent=11 // pred_check_branch
          %334 = sbr.rel (%p332) target = $region48
        $region47: #{tpu_custom_call.1} parent=11 // pred_region
          _
        $region48: #{tpu_custom_call.1} parent=11 // pred_fallthru
          _
      $region12: #{tpu_custom_call.1} parent=5 // pred_fallthru
        _
      %p335 = scmp.lt.s32.totalorder %s24, 2
      // Predicated region
      $region49: #{tpu_custom_call.1} parent=5 // pred_check
        %p336 = pneg %p335
      $region50: #{tpu_custom_call.1} parent=5 // pred_check_branch
        %338 = sbr.rel (%p336) target = $region52
      $region51: #{tpu_custom_call.1} parent=5 // pred_region
        // Predicated region
        $region53: #{tpu_custom_call.1} parent=51 // pred_check
          %p339 = pneg %p44
        $region54: #{tpu_custom_call.1} parent=51 // pred_check_branch
          %341 = sbr.rel (%p339) target = $region56
        $region55: #{tpu_custom_call.1} parent=51 // pred_region
          %s342 = sand.u32 %s34, 1
          %s343 = scalar_lea.sflag [#allocation3], %s342
          %s344 = sand.u32 %s34, 1
          %s345 = smul.addr %s344, 8
          %s346 = scalar_lea.vmem [#allocation2], %s345
          %s348 = ssub.s32 128, 128
          %349 = vsyncadd %s343, %s348
          %s350 = smul.addr %s24, 128
          %s351 = scalar_lea.hbm %s0, %s350
          %s353 = sshll.u32 %s346, 4
          %s354 = int_to_ptr.vmem [resolvable:$true] %s353
          %356 = dma.hbm_to_vmem [thread:$0]  %s351, 128, %s354, %s343
        $region56: #{tpu_custom_call.1} parent=51 // pred_fallthru
          _
      $region52: #{tpu_custom_call.1} parent=5 // pred_fallthru
        _
      %p357 = scmp.le.s32.totalorder 1, %s24
      %p358 = scmp.lt.s32.totalorder %s24, 3
      %p359 = pnand %p357, %p358
      %p360 = pneg %p359
      // Predicated region
      $region57: #{tpu_custom_call.1} parent=5 // pred_check
        _
      $region58: #{tpu_custom_call.1} parent=5 // pred_check_branch
        %362 = sbr.rel (%p359) target = $region60
      $region59: #{tpu_custom_call.1} parent=5 // pred_region
        %s363 = ssub.s32 %s24, 1
        %s364 = sand.u32 %s37, 1
        %s365 = scalar_lea.sflag [#allocation3], %s364
        %s366 = sand.u32 %s37, 1
        %s367 = smul.addr %s366, 8
        %s368 = scalar_lea.vmem [#allocation2], %s367
        // Predicated region
        $region61: #{tpu_custom_call.1} parent=59 // pred_check
          %p369 = pneg %p50
        $region62: #{tpu_custom_call.1} parent=59 // pred_check_branch
          %371 = sbr.rel (%p369) target = $region64
        $region63: #{tpu_custom_call.1} parent=59 // pred_region
          %372 = dma.done %s365, 128
        $region64: #{tpu_custom_call.1} parent=59 // pred_fallthru
          _
        // Predicated region
        $region65: #{tpu_custom_call.1} parent=59 // pred_check
          %p373 = pneg %p113
        $region66: #{tpu_custom_call.1} parent=59 // pred_check_branch
          %375 = sbr.rel (%p373) target = $region68
        $region67: #{tpu_custom_call.1} parent=59 // pred_region
          %376 = dma.done [#allocation6], 64
        $region68: #{tpu_custom_call.1} parent=59 // pred_fallthru
          _
        // Predicated region
        $region69: #{tpu_custom_call.1} parent=59 // pred_check
          %p377 = pneg %p155
        $region70: #{tpu_custom_call.1} parent=59 // pred_check_branch
          %379 = sbr.rel (%p377) target = $region72
        $region71: #{tpu_custom_call.1} parent=59 // pred_region
          %380 = dma.done [#allocation6], 512
        $region72: #{tpu_custom_call.1} parent=59 // pred_fallthru
          _
        // Predicated region
        $region73: #{tpu_custom_call.1} parent=59 // pred_check
          %p381 = pneg %p176
        $region74: #{tpu_custom_call.1} parent=59 // pred_check_branch
          %383 = sbr.rel (%p381) target = $region76
        $region75: #{tpu_custom_call.1} parent=59 // pred_region
          %384 = dma.done [#allocation9], 512
        $region76: #{tpu_custom_call.1} parent=59 // pred_fallthru
          _
        %s385 = sand.u32 %s37, 1
        %s386 = scalar_lea.sflag [#allocation3], %s385
        %s387 = sand.u32 %s37, 1
        %s388 = smul.addr %s387, 8
        %s389 = scalar_lea.vmem [#allocation2], %s388
        %p390 = pneg %p50
        %p391 = pneg %p47
        %p392 = pneg %p71
        %p393 = pneg %p68
        %p394 = pneg %p92
        %p395 = pneg %p89
        %p396 = pneg %p113
        %p397 = pneg %p110
        %p398 = pneg %p134
        %p399 = pneg %p131
        %p400 = pneg %p155
        %p401 = pneg %p152
        %p402 = pneg %p176
        %p403 = pneg %p173
        %p404 = pneg %p197
        %p405 = pneg %p194
        %p406 = pneg %p218
        %p407 = pneg %p215
        %p408 = pneg %p239
        %p409 = pneg %p236
        %p410 = pneg %p265
        %p411 = pneg %p262
        %s412 = sand.u32 %s252, 1
        %s413 = scalar_lea.sflag [#allocation4], %s412
        %s414 = sand.u32 %s252, 1
        %s415 = smul.addr %s414, 8
        %s416 = scalar_lea.vmem [#allocation10], %s415
        %v417 = vld [vmem:[%s368] sm:$0xff]
        %v418 = vld [vmem:[#allocation5] sm:$0x7]
        %v419 = vld [vmem:[%s2] sm:$0xff]
        %v420 = vld [vmem:[%s2 + $0x8] sm:$0xff]
        %v421 = vld [vmem:[%s2 + $0x10] sm:$0xff]
        %v422 = vld [vmem:[%s2 + $0x18] sm:$0xff]
        %v423 = vlaneseq
        %v424 = vshrl.u32 %v423, 7
        %v425 = vsub.s32 0, %v424
        %v426 = vrot.slane %v418, %v425
        %vm427 = vcmask 261120
        %v429 = vsel %vm427, %v417, 0
        %431 = vmatprep.subr.mxu0 0.0
        %432 = vmatpush1.msra.mxu0 %v419
        %433 = vmatprep.subr.mxu0 0.0
        %434 = vmatpush1.msra.mxu0 %v420
        %435 = vmatprep.subr.mxu0 0.0
        %436 = vmatpush1.msra.mxu0 %v421
        %437 = vmatprep.subr.mxu0 0.0
        %438 = vmatpush1.msra.mxu0 %v422
        %439 = vmatprep.subr.mxu0 0.0
        %440 = vmatpush1.msra.mxu0 0.0
        %441 = vmatprep.subr.mxu0 0.0
        %442 = vmatpush1.msra.mxu0 0.0
        %443 = vmatprep.subr.mxu0 0.0
        %444 = vmatpush1.msra.mxu0 0.0
        %445 = vmatprep.subr.mxu0 0.0
        %446 = vmatpush1.msra.mxu0 0.0
        %447 = vmatprep.subr.mxu0 0.0
        %448 = vmatpush1.msra.mxu0 0.0
        %449 = vmatprep.subr.mxu0 0.0
        %450 = vmatpush1.msra.mxu0 0.0
        %451 = vmatprep.subr.mxu0 0.0
        %452 = vmatpush1.msra.mxu0 0.0
        %453 = vmatprep.subr.mxu0 0.0
        %454 = vmatpush1.msra.mxu0 0.0
        %455 = vmatprep.subr.mxu0 0.0
        %456 = vmatpush1.msra.mxu0 0.0
        %457 = vmatprep.subr.mxu0 0.0
        %458 = vmatpush1.msra.mxu0 0.0
        %459 = vmatprep.subr.mxu0 0.0
        %460 = vmatpush1.msra.mxu0 0.0
        %461 = vmatprep.subr.mxu0 0.0
        %462 = vmatpush1.msra.mxu0 0.0
        %463 = vmatprep.subr.mxu0 0.0
        %464 = vmatpush1.msra.mxu0 0.0
        %465 = vmatprep.subr.mxu0 0.0
        %466 = vmatpush1.msra.mxu0 0.0
        %467 = vmatprep.subr.mxu0 0.0
        %468 = vmatpush1.msra.mxu0 0.0
        %469 = vmatprep.subr.mxu0 0.0
        %470 = vmatpush1.msra.mxu0 0.0
        %471 = vmatprep.subr.mxu0 0.0
        %472 = vmatpush1.msra.mxu0 0.0
        %473 = vmatprep.subr.mxu0 0.0
        %474 = vmatpush1.msra.mxu0 0.0
        %475 = vmatprep.subr.mxu0 0.0
        %476 = vmatpush1.msra.mxu0 0.0
        %477 = vmatprep.subr.mxu0 0.0
        %478 = vmatpush1.msra.mxu0 0.0
        %479 = vmatprep.subr.mxu0 0.0
        %480 = vmatpush1.msra.mxu0 0.0
        %481 = vmatprep.subr.mxu0 0.0
        %482 = vmatpush1.msra.mxu0 0.0
        %483 = vmatprep.subr.mxu0 0.0
        %484 = vmatpush1.msra.mxu0 0.0
        %485 = vmatprep.subr.mxu0 0.0
        %486 = vmatpush1.msra.mxu0 0.0
        %487 = vmatprep.subr.mxu0 0.0
        %488 = vmatpush1.msra.mxu0 0.0
        %489 = vmatprep.subr.mxu0 0.0
        %490 = vmatpush1.msra.mxu0 0.0
        %491 = vmatprep.subr.mxu0 0.0
        %492 = vmatpush1.msra.mxu0 0.0
        %493 = vmatprep.subr.mxu0 0.0
        %494 = vmatpush1.msra.mxu0 0.0
        %495 = vmatprep.mubr.f32.mxu0 0.0
        %496 = vmatmul.mubr.f32.gmra.mrb[0].mxu0 %v429
        %v497 = vpop.f32.mrb[0].mxu0
        %v498 = vadd.f32 %v426, %v497
        %v499 = vpop.f32.mrb[0].mxu0
        %500 = vdwg.mxu0
        %s501 = scalar_lea.vmem %s2, 32
        %v502 = vld [vmem:[%s501] sm:$0xff]
        %v503 = vld [vmem:[%s501 + $0x8] sm:$0xff]
        %v504 = vld [vmem:[%s501 + $0x10] sm:$0xff]
        %v505 = vld [vmem:[%s501 + $0x18] sm:$0xff]
        %v506 = vlaneseq
        %v507 = vshrl.u32 %v506, 7
        %v508 = vsub.s32 1, %v507
        %v509 = vrot.slane %v418, %v508
        %510 = vmatprep.subr.mxu0 0.0
        %511 = vmatpush1.msra.mxu0 %v502
        %512 = vmatprep.subr.mxu0 0.0
        %513 = vmatpush1.msra.mxu0 %v503
        %514 = vmatprep.subr.mxu0 0.0
        %515 = vmatpush1.msra.mxu0 %v504
        %516 = vmatprep.subr.mxu0 0.0
        %517 = vmatpush1.msra.mxu0 %v505
        %518 = vmatprep.subr.mxu0 0.0
        %519 = vmatpush1.msra.mxu0 0.0
        %520 = vmatprep.subr.mxu0 0.0
        %521 = vmatpush1.msra.mxu0 0.0
        %522 = vmatprep.subr.mxu0 0.0
        %523 = vmatpush1.msra.mxu0 0.0
        %524 = vmatprep.subr.mxu0 0.0
        %525 = vmatpush1.msra.mxu0 0.0
        %526 = vmatprep.subr.mxu0 0.0
        %527 = vmatpush1.msra.mxu0 0.0
        %528 = vmatprep.subr.mxu0 0.0
        %529 = vmatpush1.msra.mxu0 0.0
        %530 = vmatprep.subr.mxu0 0.0
        %531 = vmatpush1.msra.mxu0 0.0
        %532 = vmatprep.subr.mxu0 0.0
        %533 = vmatpush1.msra.mxu0 0.0
        %534 = vmatprep.subr.mxu0 0.0
        %535 = vmatpush1.msra.mxu0 0.0
        %536 = vmatprep.subr.mxu0 0.0
        %537 = vmatpush1.msra.mxu0 0.0
        %538 = vmatprep.subr.mxu0 0.0
        %539 = vmatpush1.msra.mxu0 0.0
        %540 = vmatprep.subr.mxu0 0.0
        %541 = vmatpush1.msra.mxu0 0.0
        %542 = vmatprep.subr.mxu0 0.0
        %543 = vmatpush1.msra.mxu0 0.0
        %544 = vmatprep.subr.mxu0 0.0
        %545 = vmatpush1.msra.mxu0 0.0
        %546 = vmatprep.subr.mxu0 0.0
        %547 = vmatpush1.msra.mxu0 0.0
        %548 = vmatprep.subr.mxu0 0.0
        %549 = vmatpush1.msra.mxu0 0.0
        %550 = vmatprep.subr.mxu0 0.0
        %551 = vmatpush1.msra.mxu0 0.0
        %552 = vmatprep.subr.mxu0 0.0
        %553 = vmatpush1.msra.mxu0 0.0
        %554 = vmatprep.subr.mxu0 0.0
        %555 = vmatpush1.msra.mxu0 0.0
        %556 = vmatprep.subr.mxu0 0.0
        %557 = vmatpush1.msra.mxu0 0.0
        %558 = vmatprep.subr.mxu0 0.0
        %559 = vmatpush1.msra.mxu0 0.0
        %560 = vmatprep.subr.mxu0 0.0
        %561 = vmatpush1.msra.mxu0 0.0
        %562 = vmatprep.subr.mxu0 0.0
        %563 = vmatpush1.msra.mxu0 0.0
        %564 = vmatprep.subr.mxu0 0.0
        %565 = vmatpush1.msra.mxu0 0.0
        %566 = vmatprep.subr.mxu0 0.0
        %567 = vmatpush1.msra.mxu0 0.0
        %568 = vmatprep.subr.mxu0 0.0
        %569 = vmatpush1.msra.mxu0 0.0
        %570 = vmatprep.subr.mxu0 0.0
        %571 = vmatpush1.msra.mxu0 0.0
        %572 = vmatprep.subr.mxu0 0.0
        %573 = vmatpush1.msra.mxu0 0.0
        %574 = vmatprep.mubr.f32.mxu0 0.0
        %575 = vmatmul.mubr.f32.gmra.mrb[0].mxu0 %v429
        %v576 = vpop.f32.mrb[0].mxu0
        %v577 = vadd.f32 %v509, %v576
        %v578 = vpop.f32.mrb[0].mxu0
        %579 = vdwg.mxu0
        %s580 = scalar_lea.vmem %s2, 64
        %v581 = vld [vmem:[%s580] sm:$0xff]
        %v582 = vld [vmem:[%s580 + $0x8] sm:$0xff]
        %v583 = vld [vmem:[%s580 + $0x10] sm:$0xff]
        %v584 = vld [vmem:[%s580 + $0x18] sm:$0xff]
        %v585 = vlaneseq
        %v586 = vshrl.u32 %v585, 7
        %v587 = vsub.s32 2, %v586
        %v588 = vrot.slane %v418, %v587
        %589 = vmatprep.subr.mxu0 0.0
        %590 = vmatpush1.msra.mxu0 %v581
        %591 = vmatprep.subr.mxu0 0.0
        %592 = vmatpush1.msra.mxu0 %v582
        %593 = vmatprep.subr.mxu0 0.0
        %594 = vmatpush1.msra.mxu0 %v583
        %595 = vmatprep.subr.mxu0 0.0
        %596 = vmatpush1.msra.mxu0 %v584
        %597 = vmatprep.subr.mxu0 0.0
        %598 = vmatpush1.msra.mxu0 0.0
        %599 = vmatprep.subr.mxu0 0.0
        %600 = vmatpush1.msra.mxu0 0.0
        %601 = vmatprep.subr.mxu0 0.0
        %602 = vmatpush1.msra.mxu0 0.0
        %603 = vmatprep.subr.mxu0 0.0
        %604 = vmatpush1.msra.mxu0 0.0
        %605 = vmatprep.subr.mxu0 0.0
        %606 = vmatpush1.msra.mxu0 0.0
        %607 = vmatprep.subr.mxu0 0.0
        %608 = vmatpush1.msra.mxu0 0.0
        %609 = vmatprep.subr.mxu0 0.0
        %610 = vmatpush1.msra.mxu0 0.0
        %611 = vmatprep.subr.mxu0 0.0
        %612 = vmatpush1.msra.mxu0 0.0
        %613 = vmatprep.subr.mxu0 0.0
        %614 = vmatpush1.msra.mxu0 0.0
        %615 = vmatprep.subr.mxu0 0.0
        %616 = vmatpush1.msra.mxu0 0.0
        %617 = vmatprep.subr.mxu0 0.0
        %618 = vmatpush1.msra.mxu0 0.0
        %619 = vmatprep.subr.mxu0 0.0
        %620 = vmatpush1.msra.mxu0 0.0
        %621 = vmatprep.subr.mxu0 0.0
        %622 = vmatpush1.msra.mxu0 0.0
        %623 = vmatprep.subr.mxu0 0.0
        %624 = vmatpush1.msra.mxu0 0.0
        %625 = vmatprep.subr.mxu0 0.0
        %626 = vmatpush1.msra.mxu0 0.0
        %627 = vmatprep.subr.mxu0 0.0
        %628 = vmatpush1.msra.mxu0 0.0
        %629 = vmatprep.subr.mxu0 0.0
        %630 = vmatpush1.msra.mxu0 0.0
        %631 = vmatprep.subr.mxu0 0.0
        %632 = vmatpush1.msra.mxu0 0.0
        %633 = vmatprep.subr.mxu0 0.0
        %634 = vmatpush1.msra.mxu0 0.0
        %635 = vmatprep.subr.mxu0 0.0
        %636 = vmatpush1.msra.mxu0 0.0
        %637 = vmatprep.subr.mxu0 0.0
        %638 = vmatpush1.msra.mxu0 0.0
        %639 = vmatprep.subr.mxu0 0.0
        %640 = vmatpush1.msra.mxu0 0.0
        %641 = vmatprep.subr.mxu0 0.0
        %642 = vmatpush1.msra.mxu0 0.0
        %643 = vmatprep.subr.mxu0 0.0
        %644 = vmatpush1.msra.mxu0 0.0
        %645 = vmatprep.subr.mxu0 0.0
        %646 = vmatpush1.msra.mxu0 0.0
        %647 = vmatprep.subr.mxu0 0.0
        %648 = vmatpush1.msra.mxu0 0.0
        %649 = vmatprep.subr.mxu0 0.0
        %650 = vmatpush1.msra.mxu0 0.0
        %651 = vmatprep.subr.mxu0 0.0
        %652 = vmatpush1.msra.mxu0 0.0
        %653 = vmatprep.mubr.f32.mxu0 0.0
        %654 = vmatmul.mubr.f32.gmra.mrb[0].mxu0 %v429
        %v655 = vpop.f32.mrb[0].mxu0
        %v656 = vadd.f32 %v588, %v655
        %v657 = vpop.f32.mrb[0].mxu0
        %658 = vdwg.mxu0
        %s659 = scalar_lea.vmem %s1, %s29
        %v660 = vld [vmem:[%s659] sm:$0x1]
        %v661 = vlaneseq
        %v662 = vshrl.u32 %v661, 7
        %v663 = vsub.s32 0, %v662
        %v664 = vrot.slane %v660, %v663
        %666 = vbcast.lane.b32.xlu0 %v664, 256
        %v667 = vpop.permute.xlu0 %666
        %v668 = vmul.f32 %v667, %v664
        %v669 = vsub.f32 1.0, %v667
        %v670 = vsub.f32 1.0, %v660
        %v671 = vlaneseq
        %v672 = vshrl.u32 %v671, 7
        %v673 = vsub.s32 0, %v672
        %v674 = vrot.slane %v670, %v673
        %v675 = vmul.f32 %v669, %v674
        %v676 = vsub.f32 1.0, %v668
        %v677 = vsub.f32 %v676, %v675
        %v678 = vmul.f32 %v677, -100000.0
        %v679 = vld [vmem:[%s4] sm:$0x1]
        %v680 = vlaneseq
        %v681 = vshrl.u32 %v680, 7
        %v682 = vsub.s32 0, %v681
        %v683 = vrot.slane %v679, %v682
        %v684 = vmul.f32 %v498, %v683
        %v686 = vsel %vm427, %v684, 0
        %v689 = vsel %vm427, %v577, 0
        %691 = vmatprep.subr.mxu0 0.0
        %692 = vmatpush1.xpose.msra.mxu0 %v689
        %693 = vmatprep.subr.mxu0 0.0
        %694 = vmatpush1.xpose.msra.mxu0 0.0
        %695 = vmatprep.subr.mxu0 0.0
        %696 = vmatpush1.xpose.msra.mxu0 0.0
        %697 = vmatprep.subr.mxu0 0.0
        %698 = vmatpush1.xpose.msra.mxu0 0.0
        %699 = vmatprep.subr.mxu0 0.0
        %700 = vmatpush1.xpose.msra.mxu0 0.0
        %701 = vmatprep.subr.mxu0 0.0
        %702 = vmatpush1.xpose.msra.mxu0 0.0
        %703 = vmatprep.subr.mxu0 0.0
        %704 = vmatpush1.xpose.msra.mxu0 0.0
        %705 = vmatprep.subr.mxu0 0.0
        %706 = vmatpush1.xpose.msra.mxu0 0.0
        %707 = vmatprep.subr.mxu0 0.0
        %708 = vmatpush1.xpose.msra.mxu0 0.0
        %709 = vmatprep.subr.mxu0 0.0
        %710 = vmatpush1.xpose.msra.mxu0 0.0
        %711 = vmatprep.subr.mxu0 0.0
        %712 = vmatpush1.xpose.msra.mxu0 0.0
        %713 = vmatprep.subr.mxu0 0.0
        %714 = vmatpush1.xpose.msra.mxu0 0.0
        %715 = vmatprep.subr.mxu0 0.0
        %716 = vmatpush1.xpose.msra.mxu0 0.0
        %717 = vmatprep.subr.mxu0 0.0
        %718 = vmatpush1.xpose.msra.mxu0 0.0
        %719 = vmatprep.subr.mxu0 0.0
        %720 = vmatpush1.xpose.msra.mxu0 0.0
        %721 = vmatprep.subr.mxu0 0.0
        %722 = vmatpush1.xpose.msra.mxu0 0.0
        %723 = vmatprep.subr.mxu0 0.0
        %724 = vmatpush1.xpose.msra.mxu0 0.0
        %725 = vmatprep.subr.mxu0 0.0
        %726 = vmatpush1.xpose.msra.mxu0 0.0
        %727 = vmatprep.subr.mxu0 0.0
        %728 = vmatpush1.xpose.msra.mxu0 0.0
        %729 = vmatprep.subr.mxu0 0.0
        %730 = vmatpush1.xpose.msra.mxu0 0.0
        %731 = vmatprep.subr.mxu0 0.0
        %732 = vmatpush1.xpose.msra.mxu0 0.0
        %733 = vmatprep.subr.mxu0 0.0
        %734 = vmatpush1.xpose.msra.mxu0 0.0
        %735 = vmatprep.subr.mxu0 0.0
        %736 = vmatpush1.xpose.msra.mxu0 0.0
        %737 = vmatprep.subr.mxu0 0.0
        %738 = vmatpush1.xpose.msra.mxu0 0.0
        %739 = vmatprep.subr.mxu0 0.0
        %740 = vmatpush1.xpose.msra.mxu0 0.0
        %741 = vmatprep.subr.mxu0 0.0
        %742 = vmatpush1.xpose.msra.mxu0 0.0
        %743 = vmatprep.subr.mxu0 0.0
        %744 = vmatpush1.xpose.msra.mxu0 0.0
        %745 = vmatprep.subr.mxu0 0.0
        %746 = vmatpush1.xpose.msra.mxu0 0.0
        %747 = vmatprep.subr.mxu0 0.0
        %748 = vmatpush1.xpose.msra.mxu0 0.0
        %749 = vmatprep.subr.mxu0 0.0
        %750 = vmatpush1.xpose.msra.mxu0 0.0
        %751 = vmatprep.subr.mxu0 0.0
        %752 = vmatpush1.xpose.msra.mxu0 0.0
        %753 = vmatprep.subr.mxu0 0.0
        %754 = vmatpush1.xpose.msra.mxu0 0.0
        %755 = vmatprep.mubr.f32.mxu0 0.0
        %756 = vmatmul.mubr.f32.gmra.mrb[0].mxu0 %v686
        %v757 = vpop.f32.mrb[0].mxu0
        %v758 = vadd.f32 0.0, %v757
        %v759 = vpop.f32.mrb[0].mxu0
        %760 = vdwg.mxu0
        %v761 = vmul.f32 %v758, 0.35355338
        %v762 = vadd.f32 %v761, %v678
        %vm763 = vcmask 64512
        %v764 = vsel %vm763, %v762, -inf
        %765 = vmax.xlane.f32.xlu0 %v764
        %v766 = vpop.xlane.xlu0 %765
        %v767 = vsub.f32 %v762, %v766
        %v768 = vmul.f32 %v767, 1.442695
        %v769 = vpow.pop %v768
        %v770 = vsel %vm763, %v769, 0.0
        %771 = vadd.xlane.f32.xlu0 %v770
        %v772 = vpop.xlane.xlu0 %771
        %v773 = vrcp.pop %v772
        %v774 = vmul.f32 %v769, %v773
        %v775 = vmul.f32 %v656, %v683
        %v776 = vld [vmem:[%s4 + $0x1] sm:$0x1]
        %v777 = vlaneseq
        %v778 = vshrl.u32 %v777, 7
        %v779 = vsub.s32 0, %v778
        %v780 = vrot.slane %v776, %v779
        %v781 = vmul.f32 %v498, %v780
        %v783 = vsel %vm427, %v781, 0
        %785 = vmatprep.subr.mxu0 0.0
        %786 = vmatpush1.xpose.msra.mxu0 %v689
        %787 = vmatprep.subr.mxu0 0.0
        %788 = vmatpush1.xpose.msra.mxu0 0.0
        %789 = vmatprep.subr.mxu0 0.0
        %790 = vmatpush1.xpose.msra.mxu0 0.0
        %791 = vmatprep.subr.mxu0 0.0
        %792 = vmatpush1.xpose.msra.mxu0 0.0
        %793 = vmatprep.subr.mxu0 0.0
        %794 = vmatpush1.xpose.msra.mxu0 0.0
        %795 = vmatprep.subr.mxu0 0.0
        %796 = vmatpush1.xpose.msra.mxu0 0.0
        %797 = vmatprep.subr.mxu0 0.0
        %798 = vmatpush1.xpose.msra.mxu0 0.0
        %799 = vmatprep.subr.mxu0 0.0
        %800 = vmatpush1.xpose.msra.mxu0 0.0
        %801 = vmatprep.subr.mxu0 0.0
        %802 = vmatpush1.xpose.msra.mxu0 0.0
        %803 = vmatprep.subr.mxu0 0.0
        %804 = vmatpush1.xpose.msra.mxu0 0.0
        %805 = vmatprep.subr.mxu0 0.0
        %806 = vmatpush1.xpose.msra.mxu0 0.0
        %807 = vmatprep.subr.mxu0 0.0
        %808 = vmatpush1.xpose.msra.mxu0 0.0
        %809 = vmatprep.subr.mxu0 0.0
        %810 = vmatpush1.xpose.msra.mxu0 0.0
        %811 = vmatprep.subr.mxu0 0.0
        %812 = vmatpush1.xpose.msra.mxu0 0.0
        %813 = vmatprep.subr.mxu0 0.0
        %814 = vmatpush1.xpose.msra.mxu0 0.0
        %815 = vmatprep.subr.mxu0 0.0
        %816 = vmatpush1.xpose.msra.mxu0 0.0
        %817 = vmatprep.subr.mxu0 0.0
        %818 = vmatpush1.xpose.msra.mxu0 0.0
        %819 = vmatprep.subr.mxu0 0.0
        %820 = vmatpush1.xpose.msra.mxu0 0.0
        %821 = vmatprep.subr.mxu0 0.0
        %822 = vmatpush1.xpose.msra.mxu0 0.0
        %823 = vmatprep.subr.mxu0 0.0
        %824 = vmatpush1.xpose.msra.mxu0 0.0
        %825 = vmatprep.subr.mxu0 0.0
        %826 = vmatpush1.xpose.msra.mxu0 0.0
        %827 = vmatprep.subr.mxu0 0.0
        %828 = vmatpush1.xpose.msra.mxu0 0.0
        %829 = vmatprep.subr.mxu0 0.0
        %830 = vmatpush1.xpose.msra.mxu0 0.0
        %831 = vmatprep.subr.mxu0 0.0
        %832 = vmatpush1.xpose.msra.mxu0 0.0
        %833 = vmatprep.subr.mxu0 0.0
        %834 = vmatpush1.xpose.msra.mxu0 0.0
        %835 = vmatprep.subr.mxu0 0.0
        %836 = vmatpush1.xpose.msra.mxu0 0.0
        %837 = vmatprep.subr.mxu0 0.0
        %838 = vmatpush1.xpose.msra.mxu0 0.0
        %839 = vmatprep.subr.mxu0 0.0
        %840 = vmatpush1.xpose.msra.mxu0 0.0
        %841 = vmatprep.subr.mxu0 0.0
        %842 = vmatpush1.xpose.msra.mxu0 0.0
        %843 = vmatprep.subr.mxu0 0.0
        %844 = vmatpush1.xpose.msra.mxu0 0.0
        %845 = vmatprep.subr.mxu0 0.0
        %846 = vmatpush1.xpose.msra.mxu0 0.0
        %847 = vmatprep.subr.mxu0 0.0
        %848 = vmatpush1.xpose.msra.mxu0 0.0
        %849 = vmatprep.mubr.f32.mxu0 0.0
        %850 = vmatmul.mubr.f32.gmra.mrb[0].mxu0 %v783
        %v851 = vpop.f32.mrb[0].mxu0
        %v852 = vadd.f32 0.0, %v851
        %v853 = vpop.f32.mrb[0].mxu0
        %854 = vdwg.mxu0
        %v855 = vmul.f32 %v852, 0.35355338
        %v856 = vadd.f32 %v855, %v678
        %v857 = vsel %vm763, %v856, -inf
        %858 = vmax.xlane.f32.xlu0 %v857
        %v859 = vpop.xlane.xlu0 %858
        %v860 = vsub.f32 %v856, %v859
        %v861 = vmul.f32 %v860, 1.442695
        %v862 = vpow.pop %v861
        %v863 = vsel %vm763, %v862, 0.0
        %864 = vadd.xlane.f32.xlu0 %v863
        %v865 = vpop.xlane.xlu0 %864
        %v866 = vrcp.pop %v865
        %v867 = vmul.f32 %v862, %v866
        %v868 = vmul.f32 %v656, %v780
        %v870 = vsel %vm763, %v867, 0
        %872 = vmatprep.subr.mxu0 0.0
        %873 = vmatpush1.msra.mxu0 %v868
        %874 = vmatprep.subr.mxu0 0.0
        %875 = vmatpush1.msra.mxu0 0.0
        %876 = vmatprep.subr.mxu0 0.0
        %877 = vmatpush1.msra.mxu0 0.0
        %878 = vmatprep.subr.mxu0 0.0
        %879 = vmatpush1.msra.mxu0 0.0
        %880 = vmatprep.subr.mxu0 0.0
        %881 = vmatpush1.msra.mxu0 0.0
        %882 = vmatprep.subr.mxu0 0.0
        %883 = vmatpush1.msra.mxu0 0.0
        %884 = vmatprep.subr.mxu0 0.0
        %885 = vmatpush1.msra.mxu0 0.0
        %886 = vmatprep.subr.mxu0 0.0
        %887 = vmatpush1.msra.mxu0 0.0
        %888 = vmatprep.subr.mxu0 0.0
        %889 = vmatpush1.msra.mxu0 0.0
        %890 = vmatprep.subr.mxu0 0.0
        %891 = vmatpush1.msra.mxu0 0.0
        %892 = vmatprep.subr.mxu0 0.0
        %893 = vmatpush1.msra.mxu0 0.0
        %894 = vmatprep.subr.mxu0 0.0
        %895 = vmatpush1.msra.mxu0 0.0
        %896 = vmatprep.subr.mxu0 0.0
        %897 = vmatpush1.msra.mxu0 0.0
        %898 = vmatprep.subr.mxu0 0.0
        %899 = vmatpush1.msra.mxu0 0.0
        %900 = vmatprep.subr.mxu0 0.0
        %901 = vmatpush1.msra.mxu0 0.0
        %902 = vmatprep.subr.mxu0 0.0
        %903 = vmatpush1.msra.mxu0 0.0
        %904 = vmatprep.subr.mxu0 0.0
        %905 = vmatpush1.msra.mxu0 0.0
        %906 = vmatprep.subr.mxu0 0.0
        %907 = vmatpush1.msra.mxu0 0.0
        %908 = vmatprep.subr.mxu0 0.0
        %909 = vmatpush1.msra.mxu0 0.0
        %910 = vmatprep.subr.mxu0 0.0
        %911 = vmatpush1.msra.mxu0 0.0
        %912 = vmatprep.subr.mxu0 0.0
        %913 = vmatpush1.msra.mxu0 0.0
        %914 = vmatprep.subr.mxu0 0.0
        %915 = vmatpush1.msra.mxu0 0.0
        %916 = vmatprep.subr.mxu0 0.0
        %917 = vmatpush1.msra.mxu0 0.0
        %918 = vmatprep.subr.mxu0 0.0
        %919 = vmatpush1.msra.mxu0 0.0
        %920 = vmatprep.subr.mxu0 0.0
        %921 = vmatpush1.msra.mxu0 0.0
        %922 = vmatprep.subr.mxu0 0.0
        %923 = vmatpush1.msra.mxu0 0.0
        %924 = vmatprep.subr.mxu0 0.0
        %925 = vmatpush1.msra.mxu0 0.0
        %926 = vmatprep.subr.mxu0 0.0
        %927 = vmatpush1.msra.mxu0 0.0
        %928 = vmatprep.subr.mxu0 0.0
        %929 = vmatpush1.msra.mxu0 0.0
        %930 = vmatprep.subr.mxu0 0.0
        %931 = vmatpush1.msra.mxu0 0.0
        %932 = vmatprep.subr.mxu0 0.0
        %933 = vmatpush1.msra.mxu0 0.0
        %934 = vmatprep.subr.mxu0 0.0
        %935 = vmatpush1.msra.mxu0 0.0
        %936 = vmatprep.mubr.f32.mxu0 0.0
        %937 = vmatmul.mubr.f32.gmra.mrb[0].mxu0 %v870
        %v938 = vpop.f32.mrb[0].mxu0
        %v939 = vadd.f32 0.0, %v938
        %v940 = vpop.f32.mrb[0].mxu0
        %941 = vdwg.mxu0
        %v943 = vsel %vm763, %v774, 0
        %945 = vmatprep.subr.mxu0 0.0
        %946 = vmatpush1.msra.mxu0 %v775
        %947 = vmatprep.subr.mxu0 0.0
        %948 = vmatpush1.msra.mxu0 0.0
        %949 = vmatprep.subr.mxu0 0.0
        %950 = vmatpush1.msra.mxu0 0.0
        %951 = vmatprep.subr.mxu0 0.0
        %952 = vmatpush1.msra.mxu0 0.0
        %953 = vmatprep.subr.mxu0 0.0
        %954 = vmatpush1.msra.mxu0 0.0
        %955 = vmatprep.subr.mxu0 0.0
        %956 = vmatpush1.msra.mxu0 0.0
        %957 = vmatprep.subr.mxu0 0.0
        %958 = vmatpush1.msra.mxu0 0.0
        %959 = vmatprep.subr.mxu0 0.0
        %960 = vmatpush1.msra.mxu0 0.0
        %961 = vmatprep.subr.mxu0 0.0
        %962 = vmatpush1.msra.mxu0 0.0
        %963 = vmatprep.subr.mxu0 0.0
        %964 = vmatpush1.msra.mxu0 0.0
        %965 = vmatprep.subr.mxu0 0.0
        %966 = vmatpush1.msra.mxu0 0.0
        %967 = vmatprep.subr.mxu0 0.0
        %968 = vmatpush1.msra.mxu0 0.0
        %969 = vmatprep.subr.mxu0 0.0
        %970 = vmatpush1.msra.mxu0 0.0
        %971 = vmatprep.subr.mxu0 0.0
        %972 = vmatpush1.msra.mxu0 0.0
        %973 = vmatprep.subr.mxu0 0.0
        %974 = vmatpush1.msra.mxu0 0.0
        %975 = vmatprep.subr.mxu0 0.0
        %976 = vmatpush1.msra.mxu0 0.0
        %977 = vmatprep.subr.mxu0 0.0
        %978 = vmatpush1.msra.mxu0 0.0
        %979 = vmatprep.subr.mxu0 0.0
        %980 = vmatpush1.msra.mxu0 0.0
        %981 = vmatprep.subr.mxu0 0.0
        %982 = vmatpush1.msra.mxu0 0.0
        %983 = vmatprep.subr.mxu0 0.0
        %984 = vmatpush1.msra.mxu0 0.0
        %985 = vmatprep.subr.mxu0 0.0
        %986 = vmatpush1.msra.mxu0 0.0
        %987 = vmatprep.subr.mxu0 0.0
        %988 = vmatpush1.msra.mxu0 0.0
        %989 = vmatprep.subr.mxu0 0.0
        %990 = vmatpush1.msra.mxu0 0.0
        %991 = vmatprep.subr.mxu0 0.0
        %992 = vmatpush1.msra.mxu0 0.0
        %993 = vmatprep.subr.mxu0 0.0
        %994 = vmatpush1.msra.mxu0 0.0
        %995 = vmatprep.subr.mxu0 0.0
        %996 = vmatpush1.msra.mxu0 0.0
        %997 = vmatprep.subr.mxu0 0.0
        %998 = vmatpush1.msra.mxu0 0.0
        %999 = vmatprep.subr.mxu0 0.0
        %1000 = vmatpush1.msra.mxu0 0.0
        %1001 = vmatprep.subr.mxu0 0.0
        %1002 = vmatpush1.msra.mxu0 0.0
        %1003 = vmatprep.subr.mxu0 0.0
        %1004 = vmatpush1.msra.mxu0 0.0
        %1005 = vmatprep.subr.mxu0 0.0
        %1006 = vmatpush1.msra.mxu0 0.0
        %1007 = vmatprep.subr.mxu0 0.0
        %1008 = vmatpush1.msra.mxu0 0.0
        %1009 = vmatprep.mubr.f32.mxu0 0.0
        %1010 = vmatmul.mubr.f32.gmra.mrb[0].mxu0 %v943
        %v1011 = vpop.f32.mrb[0].mxu0
        %v1012 = vadd.f32 %v939, %v1011
        %v1013 = vpop.f32.mrb[0].mxu0
        %1014 = vdwg.mxu0
        %v1015 = vld [vmem:[%s4 + $0x2] sm:$0x1]
        %v1016 = vlaneseq
        %v1017 = vshrl.u32 %v1016, 7
        %v1018 = vsub.s32 0, %v1017
        %v1019 = vrot.slane %v1015, %v1018
        %v1020 = vmul.f32 %v498, %v1019
        %v1022 = vsel %vm427, %v1020, 0
        %1024 = vmatprep.subr.mxu0 0.0
        %1025 = vmatpush1.xpose.msra.mxu0 %v689
        %1026 = vmatprep.subr.mxu0 0.0
        %1027 = vmatpush1.xpose.msra.mxu0 0.0
        %1028 = vmatprep.subr.mxu0 0.0
        %1029 = vmatpush1.xpose.msra.mxu0 0.0
        %1030 = vmatprep.subr.mxu0 0.0
        %1031 = vmatpush1.xpose.msra.mxu0 0.0
        %1032 = vmatprep.subr.mxu0 0.0
        %1033 = vmatpush1.xpose.msra.mxu0 0.0
        %1034 = vmatprep.subr.mxu0 0.0
        %1035 = vmatpush1.xpose.msra.mxu0 0.0
        %1036 = vmatprep.subr.mxu0 0.0
        %1037 = vmatpush1.xpose.msra.mxu0 0.0
        %1038 = vmatprep.subr.mxu0 0.0
        %1039 = vmatpush1.xpose.msra.mxu0 0.0
        %1040 = vmatprep.subr.mxu0 0.0
        %1041 = vmatpush1.xpose.msra.mxu0 0.0
        %1042 = vmatprep.subr.mxu0 0.0
        %1043 = vmatpush1.xpose.msra.mxu0 0.0
        %1044 = vmatprep.subr.mxu0 0.0
        %1045 = vmatpush1.xpose.msra.mxu0 0.0
        %1046 = vmatprep.subr.mxu0 0.0
        %1047 = vmatpush1.xpose.msra.mxu0 0.0
        %1048 = vmatprep.subr.mxu0 0.0
        %1049 = vmatpush1.xpose.msra.mxu0 0.0
        %1050 = vmatprep.subr.mxu0 0.0
        %1051 = vmatpush1.xpose.msra.mxu0 0.0
        %1052 = vmatprep.subr.mxu0 0.0
        %1053 = vmatpush1.xpose.msra.mxu0 0.0
        %1054 = vmatprep.subr.mxu0 0.0
        %1055 = vmatpush1.xpose.msra.mxu0 0.0
        %1056 = vmatprep.subr.mxu0 0.0
        %1057 = vmatpush1.xpose.msra.mxu0 0.0
        %1058 = vmatprep.subr.mxu0 0.0
        %1059 = vmatpush1.xpose.msra.mxu0 0.0
        %1060 = vmatprep.subr.mxu0 0.0
        %1061 = vmatpush1.xpose.msra.mxu0 0.0
        %1062 = vmatprep.subr.mxu0 0.0
        %1063 = vmatpush1.xpose.msra.mxu0 0.0
        %1064 = vmatprep.subr.mxu0 0.0
        %1065 = vmatpush1.xpose.msra.mxu0 0.0
        %1066 = vmatprep.subr.mxu0 0.0
        %1067 = vmatpush1.xpose.msra.mxu0 0.0
        %1068 = vmatprep.subr.mxu0 0.0
        %1069 = vmatpush1.xpose.msra.mxu0 0.0
        %1070 = vmatprep.subr.mxu0 0.0
        %1071 = vmatpush1.xpose.msra.mxu0 0.0
        %1072 = vmatprep.subr.mxu0 0.0
        %1073 = vmatpush1.xpose.msra.mxu0 0.0
        %1074 = vmatprep.subr.mxu0 0.0
        %1075 = vmatpush1.xpose.msra.mxu0 0.0
        %1076 = vmatprep.subr.mxu0 0.0
        %1077 = vmatpush1.xpose.msra.mxu0 0.0
        %1078 = vmatprep.subr.mxu0 0.0
        %1079 = vmatpush1.xpose.msra.mxu0 0.0
        %1080 = vmatprep.subr.mxu0 0.0
        %1081 = vmatpush1.xpose.msra.mxu0 0.0
        %1082 = vmatprep.subr.mxu0 0.0
        %1083 = vmatpush1.xpose.msra.mxu0 0.0
        %1084 = vmatprep.subr.mxu0 0.0
        %1085 = vmatpush1.xpose.msra.mxu0 0.0
        %1086 = vmatprep.subr.mxu0 0.0
        %1087 = vmatpush1.xpose.msra.mxu0 0.0
        %1088 = vmatprep.mubr.f32.mxu0 0.0
        %1089 = vmatmul.mubr.f32.gmra.mrb[0].mxu0 %v1022
        %v1090 = vpop.f32.mrb[0].mxu0
        %v1091 = vadd.f32 0.0, %v1090
        %v1092 = vpop.f32.mrb[0].mxu0
        %1093 = vdwg.mxu0
        %v1094 = vmul.f32 %v1091, 0.35355338
        %v1095 = vadd.f32 %v1094, %v678
        %v1096 = vsel %vm763, %v1095, -inf
        %1097 = vmax.xlane.f32.xlu0 %v1096
        %v1098 = vpop.xlane.xlu0 %1097
        %v1099 = vsub.f32 %v1095, %v1098
        %v1100 = vmul.f32 %v1099, 1.442695
        %v1101 = vpow.pop %v1100
        %v1102 = vsel %vm763, %v1101, 0.0
        %1103 = vadd.xlane.f32.xlu0 %v1102
        %v1104 = vpop.xlane.xlu0 %1103
        %v1105 = vrcp.pop %v1104
        %v1106 = vmul.f32 %v1101, %v1105
        %v1107 = vmul.f32 %v656, %v1019
        %v1109 = vsel %vm763, %v1106, 0
        %1111 = vmatprep.subr.mxu0 0.0
        %1112 = vmatpush1.msra.mxu0 %v1107
        %1113 = vmatprep.subr.mxu0 0.0
        %1114 = vmatpush1.msra.mxu0 0.0
        %1115 = vmatprep.subr.mxu0 0.0
        %1116 = vmatpush1.msra.mxu0 0.0
        %1117 = vmatprep.subr.mxu0 0.0
        %1118 = vmatpush1.msra.mxu0 0.0
        %1119 = vmatprep.subr.mxu0 0.0
        %1120 = vmatpush1.msra.mxu0 0.0
        %1121 = vmatprep.subr.mxu0 0.0
        %1122 = vmatpush1.msra.mxu0 0.0
        %1123 = vmatprep.subr.mxu0 0.0
        %1124 = vmatpush1.msra.mxu0 0.0
        %1125 = vmatprep.subr.mxu0 0.0
        %1126 = vmatpush1.msra.mxu0 0.0
        %1127 = vmatprep.subr.mxu0 0.0
        %1128 = vmatpush1.msra.mxu0 0.0
        %1129 = vmatprep.subr.mxu0 0.0
        %1130 = vmatpush1.msra.mxu0 0.0
        %1131 = vmatprep.subr.mxu0 0.0
        %1132 = vmatpush1.msra.mxu0 0.0
        %1133 = vmatprep.subr.mxu0 0.0
        %1134 = vmatpush1.msra.mxu0 0.0
        %1135 = vmatprep.subr.mxu0 0.0
        %1136 = vmatpush1.msra.mxu0 0.0
        %1137 = vmatprep.subr.mxu0 0.0
        %1138 = vmatpush1.msra.mxu0 0.0
        %1139 = vmatprep.subr.mxu0 0.0
        %1140 = vmatpush1.msra.mxu0 0.0
        %1141 = vmatprep.subr.mxu0 0.0
        %1142 = vmatpush1.msra.mxu0 0.0
        %1143 = vmatprep.subr.mxu0 0.0
        %1144 = vmatpush1.msra.mxu0 0.0
        %1145 = vmatprep.subr.mxu0 0.0
        %1146 = vmatpush1.msra.mxu0 0.0
        %1147 = vmatprep.subr.mxu0 0.0
        %1148 = vmatpush1.msra.mxu0 0.0
        %1149 = vmatprep.subr.mxu0 0.0
        %1150 = vmatpush1.msra.mxu0 0.0
        %1151 = vmatprep.subr.mxu0 0.0
        %1152 = vmatpush1.msra.mxu0 0.0
        %1153 = vmatprep.subr.mxu0 0.0
        %1154 = vmatpush1.msra.mxu0 0.0
        %1155 = vmatprep.subr.mxu0 0.0
        %1156 = vmatpush1.msra.mxu0 0.0
        %1157 = vmatprep.subr.mxu0 0.0
        %1158 = vmatpush1.msra.mxu0 0.0
        %1159 = vmatprep.subr.mxu0 0.0
        %1160 = vmatpush1.msra.mxu0 0.0
        %1161 = vmatprep.subr.mxu0 0.0
        %1162 = vmatpush1.msra.mxu0 0.0
        %1163 = vmatprep.subr.mxu0 0.0
        %1164 = vmatpush1.msra.mxu0 0.0
        %1165 = vmatprep.subr.mxu0 0.0
        %1166 = vmatpush1.msra.mxu0 0.0
        %1167 = vmatprep.subr.mxu0 0.0
        %1168 = vmatpush1.msra.mxu0 0.0
        %1169 = vmatprep.subr.mxu0 0.0
        %1170 = vmatpush1.msra.mxu0 0.0
        %1171 = vmatprep.subr.mxu0 0.0
        %1172 = vmatpush1.msra.mxu0 0.0
        %1173 = vmatprep.subr.mxu0 0.0
        %1174 = vmatpush1.msra.mxu0 0.0
        %1175 = vmatprep.mubr.f32.mxu0 0.0
        %1176 = vmatmul.mubr.f32.gmra.mrb[0].mxu0 %v1109
        %v1177 = vpop.f32.mrb[0].mxu0
        %v1178 = vadd.f32 0.0, %v1177
        %v1179 = vpop.f32.mrb[0].mxu0
        %1180 = vdwg.mxu0
        %v1181 = vadd.f32 %v1012, %v1178
        %v1182 = vld [vmem:[%s4 + $0x3] sm:$0x1]
        %v1183 = vlaneseq
        %v1184 = vshrl.u32 %v1183, 7
        %v1185 = vsub.s32 0, %v1184
        %v1186 = vrot.slane %v1182, %v1185
        %v1187 = vmul.f32 %v498, %v1186
        %v1189 = vsel %vm427, %v1187, 0
        %1191 = vmatprep.subr.mxu0 0.0
        %1192 = vmatpush1.xpose.msra.mxu0 %v689
        %1193 = vmatprep.subr.mxu0 0.0
        %1194 = vmatpush1.xpose.msra.mxu0 0.0
        %1195 = vmatprep.subr.mxu0 0.0
        %1196 = vmatpush1.xpose.msra.mxu0 0.0
        %1197 = vmatprep.subr.mxu0 0.0
        %1198 = vmatpush1.xpose.msra.mxu0 0.0
        %1199 = vmatprep.subr.mxu0 0.0
        %1200 = vmatpush1.xpose.msra.mxu0 0.0
        %1201 = vmatprep.subr.mxu0 0.0
        %1202 = vmatpush1.xpose.msra.mxu0 0.0
        %1203 = vmatprep.subr.mxu0 0.0
        %1204 = vmatpush1.xpose.msra.mxu0 0.0
        %1205 = vmatprep.subr.mxu0 0.0
        %1206 = vmatpush1.xpose.msra.mxu0 0.0
        %1207 = vmatprep.subr.mxu0 0.0
        %1208 = vmatpush1.xpose.msra.mxu0 0.0
        %1209 = vmatprep.subr.mxu0 0.0
        %1210 = vmatpush1.xpose.msra.mxu0 0.0
        %1211 = vmatprep.subr.mxu0 0.0
        %1212 = vmatpush1.xpose.msra.mxu0 0.0
        %1213 = vmatprep.subr.mxu0 0.0
        %1214 = vmatpush1.xpose.msra.mxu0 0.0
        %1215 = vmatprep.subr.mxu0 0.0
        %1216 = vmatpush1.xpose.msra.mxu0 0.0
        %1217 = vmatprep.subr.mxu0 0.0
        %1218 = vmatpush1.xpose.msra.mxu0 0.0
        %1219 = vmatprep.subr.mxu0 0.0
        %1220 = vmatpush1.xpose.msra.mxu0 0.0
        %1221 = vmatprep.subr.mxu0 0.0
        %1222 = vmatpush1.xpose.msra.mxu0 0.0
        %1223 = vmatprep.subr.mxu0 0.0
        %1224 = vmatpush1.xpose.msra.mxu0 0.0
        %1225 = vmatprep.subr.mxu0 0.0
        %1226 = vmatpush1.xpose.msra.mxu0 0.0
        %1227 = vmatprep.subr.mxu0 0.0
        %1228 = vmatpush1.xpose.msra.mxu0 0.0
        %1229 = vmatprep.subr.mxu0 0.0
        %1230 = vmatpush1.xpose.msra.mxu0 0.0
        %1231 = vmatprep.subr.mxu0 0.0
        %1232 = vmatpush1.xpose.msra.mxu0 0.0
        %1233 = vmatprep.subr.mxu0 0.0
        %1234 = vmatpush1.xpose.msra.mxu0 0.0
        %1235 = vmatprep.subr.mxu0 0.0
        %1236 = vmatpush1.xpose.msra.mxu0 0.0
        %1237 = vmatprep.subr.mxu0 0.0
        %1238 = vmatpush1.xpose.msra.mxu0 0.0
        %1239 = vmatprep.subr.mxu0 0.0
        %1240 = vmatpush1.xpose.msra.mxu0 0.0
        %1241 = vmatprep.subr.mxu0 0.0
        %1242 = vmatpush1.xpose.msra.mxu0 0.0
        %1243 = vmatprep.subr.mxu0 0.0
        %1244 = vmatpush1.xpose.msra.mxu0 0.0
        %1245 = vmatprep.subr.mxu0 0.0
        %1246 = vmatpush1.xpose.msra.mxu0 0.0
        %1247 = vmatprep.subr.mxu0 0.0
        %1248 = vmatpush1.xpose.msra.mxu0 0.0
        %1249 = vmatprep.subr.mxu0 0.0
        %1250 = vmatpush1.xpose.msra.mxu0 0.0
        %1251 = vmatprep.subr.mxu0 0.0
        %1252 = vmatpush1.xpose.msra.mxu0 0.0
        %1253 = vmatprep.subr.mxu0 0.0
        %1254 = vmatpush1.xpose.msra.mxu0 0.0
        %1255 = vmatprep.mubr.f32.mxu0 0.0
        %1256 = vmatmul.mubr.f32.gmra.mrb[0].mxu0 %v1189
        %v1257 = vpop.f32.mrb[0].mxu0
        %v1258 = vadd.f32 0.0, %v1257
        %v1259 = vpop.f32.mrb[0].mxu0
        %1260 = vdwg.mxu0
        %v1261 = vmul.f32 %v1258, 0.35355338
        %v1262 = vadd.f32 %v1261, %v678
        %v1263 = vsel %vm763, %v1262, -inf
        %1264 = vmax.xlane.f32.xlu0 %v1263
        %v1265 = vpop.xlane.xlu0 %1264
        %v1266 = vsub.f32 %v1262, %v1265
        %v1267 = vmul.f32 %v1266, 1.442695
        %v1268 = vpow.pop %v1267
        %v1269 = vsel %vm763, %v1268, 0.0
        %1270 = vadd.xlane.f32.xlu0 %v1269
        %v1271 = vpop.xlane.xlu0 %1270
        %v1272 = vrcp.pop %v1271
        %v1273 = vmul.f32 %v1268, %v1272
        %v1274 = vmul.f32 %v656, %v1186
        %v1276 = vsel %vm763, %v1273, 0
        %1278 = vmatprep.subr.mxu0 0.0
        %1279 = vmatpush1.msra.mxu0 %v1274
        %1280 = vmatprep.subr.mxu0 0.0
        %1281 = vmatpush1.msra.mxu0 0.0
        %1282 = vmatprep.subr.mxu0 0.0
        %1283 = vmatpush1.msra.mxu0 0.0
        %1284 = vmatprep.subr.mxu0 0.0
        %1285 = vmatpush1.msra.mxu0 0.0
        %1286 = vmatprep.subr.mxu0 0.0
        %1287 = vmatpush1.msra.mxu0 0.0
        %1288 = vmatprep.subr.mxu0 0.0
        %1289 = vmatpush1.msra.mxu0 0.0
        %1290 = vmatprep.subr.mxu0 0.0
        %1291 = vmatpush1.msra.mxu0 0.0
        %1292 = vmatprep.subr.mxu0 0.0
        %1293 = vmatpush1.msra.mxu0 0.0
        %1294 = vmatprep.subr.mxu0 0.0
        %1295 = vmatpush1.msra.mxu0 0.0
        %1296 = vmatprep.subr.mxu0 0.0
        %1297 = vmatpush1.msra.mxu0 0.0
        %1298 = vmatprep.subr.mxu0 0.0
        %1299 = vmatpush1.msra.mxu0 0.0
        %1300 = vmatprep.subr.mxu0 0.0
        %1301 = vmatpush1.msra.mxu0 0.0
        %1302 = vmatprep.subr.mxu0 0.0
        %1303 = vmatpush1.msra.mxu0 0.0
        %1304 = vmatprep.subr.mxu0 0.0
        %1305 = vmatpush1.msra.mxu0 0.0
        %1306 = vmatprep.subr.mxu0 0.0
        %1307 = vmatpush1.msra.mxu0 0.0
        %1308 = vmatprep.subr.mxu0 0.0
        %1309 = vmatpush1.msra.mxu0 0.0
        %1310 = vmatprep.subr.mxu0 0.0
        %1311 = vmatpush1.msra.mxu0 0.0
        %1312 = vmatprep.subr.mxu0 0.0
        %1313 = vmatpush1.msra.mxu0 0.0
        %1314 = vmatprep.subr.mxu0 0.0
        %1315 = vmatpush1.msra.mxu0 0.0
        %1316 = vmatprep.subr.mxu0 0.0
        %1317 = vmatpush1.msra.mxu0 0.0
        %1318 = vmatprep.subr.mxu0 0.0
        %1319 = vmatpush1.msra.mxu0 0.0
        %1320 = vmatprep.subr.mxu0 0.0
        %1321 = vmatpush1.msra.mxu0 0.0
        %1322 = vmatprep.subr.mxu0 0.0
        %1323 = vmatpush1.msra.mxu0 0.0
        %1324 = vmatprep.subr.mxu0 0.0
        %1325 = vmatpush1.msra.mxu0 0.0
        %1326 = vmatprep.subr.mxu0 0.0
        %1327 = vmatpush1.msra.mxu0 0.0
        %1328 = vmatprep.subr.mxu0 0.0
        %1329 = vmatpush1.msra.mxu0 0.0
        %1330 = vmatprep.subr.mxu0 0.0
        %1331 = vmatpush1.msra.mxu0 0.0
        %1332 = vmatprep.subr.mxu0 0.0
        %1333 = vmatpush1.msra.mxu0 0.0
        %1334 = vmatprep.subr.mxu0 0.0
        %1335 = vmatpush1.msra.mxu0 0.0
        %1336 = vmatprep.subr.mxu0 0.0
        %1337 = vmatpush1.msra.mxu0 0.0
        %1338 = vmatprep.subr.mxu0 0.0
        %1339 = vmatpush1.msra.mxu0 0.0
        %1340 = vmatprep.subr.mxu0 0.0
        %1341 = vmatpush1.msra.mxu0 0.0
        %1342 = vmatprep.mubr.f32.mxu0 0.0
        %1343 = vmatmul.mubr.f32.gmra.mrb[0].mxu0 %v1276
        %v1344 = vpop.f32.mrb[0].mxu0
        %v1345 = vadd.f32 0.0, %v1344
        %v1346 = vpop.f32.mrb[0].mxu0
        %1347 = vdwg.mxu0
        %v1348 = vadd.f32 %v1181, %v1345
        %v1349 = vld [vmem:[%s9] sm:$0x3f]
        %v1350 = vld [vmem:[#allocation7] sm:$0xff]
        %v1351 = vld [vmem:[#allocation7 + $0x8] sm:$0xff]
        %v1352 = vld [vmem:[#allocation7 + $0x10] sm:$0xff]
        %v1353 = vld [vmem:[#allocation7 + $0x18] sm:$0xff]
        %v1354 = vlaneseq
        %v1355 = vshrl.u32 %v1354, 7
        %v1356 = vsub.s32 0, %v1355
        %v1357 = vrot.slane %v1349, %v1356
        %v1359 = vsel %vm427, %v1348, 0
        %1361 = vmatprep.subr.mxu0 0.0
        %1362 = vmatpush1.msra.mxu0 %v1350
        %1363 = vmatprep.subr.mxu0 0.0
        %1364 = vmatpush1.msra.mxu0 %v1351
        %1365 = vmatprep.subr.mxu0 0.0
        %1366 = vmatpush1.msra.mxu0 %v1352
        %1367 = vmatprep.subr.mxu0 0.0
        %1368 = vmatpush1.msra.mxu0 %v1353
        %1369 = vmatprep.subr.mxu0 0.0
        %1370 = vmatpush1.msra.mxu0 0.0
        %1371 = vmatprep.subr.mxu0 0.0
        %1372 = vmatpush1.msra.mxu0 0.0
        %1373 = vmatprep.subr.mxu0 0.0
        %1374 = vmatpush1.msra.mxu0 0.0
        %1375 = vmatprep.subr.mxu0 0.0
        %1376 = vmatpush1.msra.mxu0 0.0
        %1377 = vmatprep.subr.mxu0 0.0
        %1378 = vmatpush1.msra.mxu0 0.0
        %1379 = vmatprep.subr.mxu0 0.0
        %1380 = vmatpush1.msra.mxu0 0.0
        %1381 = vmatprep.subr.mxu0 0.0
        %1382 = vmatpush1.msra.mxu0 0.0
        %1383 = vmatprep.subr.mxu0 0.0
        %1384 = vmatpush1.msra.mxu0 0.0
        %1385 = vmatprep.subr.mxu0 0.0
        %1386 = vmatpush1.msra.mxu0 0.0
        %1387 = vmatprep.subr.mxu0 0.0
        %1388 = vmatpush1.msra.mxu0 0.0
        %1389 = vmatprep.subr.mxu0 0.0
        %1390 = vmatpush1.msra.mxu0 0.0
        %1391 = vmatprep.subr.mxu0 0.0
        %1392 = vmatpush1.msra.mxu0 0.0
        %1393 = vmatprep.subr.mxu0 0.0
        %1394 = vmatpush1.msra.mxu0 0.0
        %1395 = vmatprep.subr.mxu0 0.0
        %1396 = vmatpush1.msra.mxu0 0.0
        %1397 = vmatprep.subr.mxu0 0.0
        %1398 = vmatpush1.msra.mxu0 0.0
        %1399 = vmatprep.subr.mxu0 0.0
        %1400 = vmatpush1.msra.mxu0 0.0
        %1401 = vmatprep.subr.mxu0 0.0
        %1402 = vmatpush1.msra.mxu0 0.0
        %1403 = vmatprep.subr.mxu0 0.0
        %1404 = vmatpush1.msra.mxu0 0.0
        %1405 = vmatprep.subr.mxu0 0.0
        %1406 = vmatpush1.msra.mxu0 0.0
        %1407 = vmatprep.subr.mxu0 0.0
        %1408 = vmatpush1.msra.mxu0 0.0
        %1409 = vmatprep.subr.mxu0 0.0
        %1410 = vmatpush1.msra.mxu0 0.0
        %1411 = vmatprep.subr.mxu0 0.0
        %1412 = vmatpush1.msra.mxu0 0.0
        %1413 = vmatprep.subr.mxu0 0.0
        %1414 = vmatpush1.msra.mxu0 0.0
        %1415 = vmatprep.subr.mxu0 0.0
        %1416 = vmatpush1.msra.mxu0 0.0
        %1417 = vmatprep.subr.mxu0 0.0
        %1418 = vmatpush1.msra.mxu0 0.0
        %1419 = vmatprep.subr.mxu0 0.0
        %1420 = vmatpush1.msra.mxu0 0.0
        %1421 = vmatprep.subr.mxu0 0.0
        %1422 = vmatpush1.msra.mxu0 0.0
        %1423 = vmatprep.subr.mxu0 0.0
        %1424 = vmatpush1.msra.mxu0 0.0
        %1425 = vmatprep.mubr.f32.mxu0 0.0
        %1426 = vmatmul.mubr.f32.gmra.mrb[0].mxu0 %v1359
        %v1427 = vpop.f32.mrb[0].mxu0
        %v1428 = vadd.f32 %v1357, %v1427
        %v1429 = vpop.f32.mrb[0].mxu0
        %1430 = vdwg.mxu0
        %v1431 = vsel %vm427, %v1428, 0.0
        %1432 = vadd.xlane.f32.xlu0 %v1431
        %v1433 = vpop.xlane.xlu0 %1432
        %v1434 = vrcp.pop 32.0
        %v1435 = vmul.f32 %v1433, %v1434
        %v1436 = vsub.f32 %v1428, %v1435
        %v1437 = vmul.f32 %v1436, %v1436
        %v1438 = vsel %vm427, %v1437, 0.0
        %1439 = vadd.xlane.f32.xlu0 %v1438
        %v1440 = vpop.xlane.xlu0 %1439
        %v1441 = vmul.f32 %v1440, %v1434
        %v1442 = vadd.f32 %v1441, 1e-05
        %v1443 = vrsqrt.pop %v1442
        %v1444 = vmul.f32 %v1436, %v1443
        %v1445 = vlaneseq
        %v1446 = vshrl.u32 %v1445, 7
        %v1447 = vsub.s32 2, %v1446
        %v1448 = vrot.slane %v1349, %v1447
        %v1449 = vmul.f32 %v1444, %v1448
        %v1450 = vlaneseq
        %v1451 = vshrl.u32 %v1450, 7
        %v1452 = vsub.s32 3, %v1451
        %v1453 = vrot.slane %v1349, %v1452
        %v1454 = vadd.f32 %v1449, %v1453
        %v1455 = vadd.f32 %v1428, %v1454
        %v1456 = vld [vmem:[#allocation8] sm:$0xff]
        %v1457 = vld [vmem:[#allocation8 + $0x8] sm:$0xff]
        %v1458 = vld [vmem:[#allocation8 + $0x10] sm:$0xff]
        %v1459 = vld [vmem:[#allocation8 + $0x18] sm:$0xff]
        %v1460 = vld [vmem:[%s7] sm:$0x1]
        %v1462 = vlaneseq
        %v1463 = vshrl.u32 %v1462, 7
        %v1464 = vsub.s32 0, %v1463
        %v1465 = vrot.slane %v1460, %v1464
        %v1468 = vsel %vm427, %v1455, 0
        %1470 = vmatprep.subr.mxu0 0.0
        %1471 = vmatpush1.msra.mxu0 %v1456
        %1472 = vmatprep.subr.mxu0 0.0
        %1473 = vmatpush1.msra.mxu0 %v1457
        %1474 = vmatprep.subr.mxu0 0.0
        %1475 = vmatpush1.msra.mxu0 %v1458
        %1476 = vmatprep.subr.mxu0 0.0
        %1477 = vmatpush1.msra.mxu0 %v1459
        %1478 = vmatprep.subr.mxu0 0.0
        %1479 = vmatpush1.msra.mxu0 0.0
        %1480 = vmatprep.subr.mxu0 0.0
        %1481 = vmatpush1.msra.mxu0 0.0
        %1482 = vmatprep.subr.mxu0 0.0
        %1483 = vmatpush1.msra.mxu0 0.0
        %1484 = vmatprep.subr.mxu0 0.0
        %1485 = vmatpush1.msra.mxu0 0.0
        %1486 = vmatprep.subr.mxu0 0.0
        %1487 = vmatpush1.msra.mxu0 0.0
        %1488 = vmatprep.subr.mxu0 0.0
        %1489 = vmatpush1.msra.mxu0 0.0
        %1490 = vmatprep.subr.mxu0 0.0
        %1491 = vmatpush1.msra.mxu0 0.0
        %1492 = vmatprep.subr.mxu0 0.0
        %1493 = vmatpush1.msra.mxu0 0.0
        %1494 = vmatprep.subr.mxu0 0.0
        %1495 = vmatpush1.msra.mxu0 0.0
        %1496 = vmatprep.subr.mxu0 0.0
        %1497 = vmatpush1.msra.mxu0 0.0
        %1498 = vmatprep.subr.mxu0 0.0
        %1499 = vmatpush1.msra.mxu0 0.0
        %1500 = vmatprep.subr.mxu0 0.0
        %1501 = vmatpush1.msra.mxu0 0.0
        %1502 = vmatprep.subr.mxu0 0.0
        %1503 = vmatpush1.msra.mxu0 0.0
        %1504 = vmatprep.subr.mxu0 0.0
        %1505 = vmatpush1.msra.mxu0 0.0
        %1506 = vmatprep.subr.mxu0 0.0
        %1507 = vmatpush1.msra.mxu0 0.0
        %1508 = vmatprep.subr.mxu0 0.0
        %1509 = vmatpush1.msra.mxu0 0.0
        %1510 = vmatprep.subr.mxu0 0.0
        %1511 = vmatpush1.msra.mxu0 0.0
        %1512 = vmatprep.subr.mxu0 0.0
        %1513 = vmatpush1.msra.mxu0 0.0
        %1514 = vmatprep.subr.mxu0 0.0
        %1515 = vmatpush1.msra.mxu0 0.0
        %1516 = vmatprep.subr.mxu0 0.0
        %1517 = vmatpush1.msra.mxu0 0.0
        %1518 = vmatprep.subr.mxu0 0.0
        %1519 = vmatpush1.msra.mxu0 0.0
        %1520 = vmatprep.subr.mxu0 0.0
        %1521 = vmatpush1.msra.mxu0 0.0
        %1522 = vmatprep.subr.mxu0 0.0
        %1523 = vmatpush1.msra.mxu0 0.0
        %1524 = vmatprep.subr.mxu0 0.0
        %1525 = vmatpush1.msra.mxu0 0.0
        %1526 = vmatprep.subr.mxu0 0.0
        %1527 = vmatpush1.msra.mxu0 0.0
        %1528 = vmatprep.subr.mxu0 0.0
        %1529 = vmatpush1.msra.mxu0 0.0
        %1530 = vmatprep.subr.mxu0 0.0
        %1531 = vmatpush1.msra.mxu0 0.0
        %1532 = vmatprep.subr.mxu0 0.0
        %1533 = vmatpush1.msra.mxu0 0.0
        %1534 = vmatprep.mubr.f32.mxu0 0.0
        %1535 = vmatmul.mubr.f32.gmra.mrb[0].mxu0 %v1468
        %v1536 = vpop.f32.mrb[0].mxu0
        %v1537 = vadd.f32 %v1465, %v1536
        %v1538 = vpop.f32.mrb[0].mxu0
        %1539 = vdwg.mxu0
        %v1540 = vmul.f32 %v1537, 0.5
        %v1541 = vmul.f32 %v1537, 0.70710677
        %v1542 = verf.f32.pop %v1541
        %v1543 = vadd.f32 %v1542, 1.0
        %v1544 = vmul.f32 %v1540, %v1543
        %v1545 = vld [vmem:[%s8] sm:$0xff]
        %v1546 = vld [vmem:[%s8 + $0x8] sm:$0xff]
        %v1547 = vld [vmem:[%s8 + $0x10] sm:$0xff]
        %v1548 = vld [vmem:[%s8 + $0x18] sm:$0xff]
        %v1549 = vld [vmem:[%s8 + $0x20] sm:$0xff]
        %v1550 = vld [vmem:[%s8 + $0x28] sm:$0xff]
        %v1551 = vld [vmem:[%s8 + $0x30] sm:$0xff]
        %v1552 = vld [vmem:[%s8 + $0x38] sm:$0xff]
        %vm1553 = vcmask 523264
        %v1555 = vsel %vm1553, %v1544, 0
        %1557 = vmatprep.subr.mxu0 0.0
        %1558 = vmatpush1.msra.mxu0 %v1545
        %1559 = vmatprep.subr.mxu0 0.0
        %1560 = vmatpush1.msra.mxu0 %v1546
        %1561 = vmatprep.subr.mxu0 0.0
        %1562 = vmatpush1.msra.mxu0 %v1547
        %1563 = vmatprep.subr.mxu0 0.0
        %1564 = vmatpush1.msra.mxu0 %v1548
        %1565 = vmatprep.subr.mxu0 0.0
        %1566 = vmatpush1.msra.mxu0 %v1549
        %1567 = vmatprep.subr.mxu0 0.0
        %1568 = vmatpush1.msra.mxu0 %v1550
        %1569 = vmatprep.subr.mxu0 0.0
        %1570 = vmatpush1.msra.mxu0 %v1551
        %1571 = vmatprep.subr.mxu0 0.0
        %1572 = vmatpush1.msra.mxu0 %v1552
        %1573 = vmatprep.subr.mxu0 0.0
        %1574 = vmatpush1.msra.mxu0 0.0
        %1575 = vmatprep.subr.mxu0 0.0
        %1576 = vmatpush1.msra.mxu0 0.0
        %1577 = vmatprep.subr.mxu0 0.0
        %1578 = vmatpush1.msra.mxu0 0.0
        %1579 = vmatprep.subr.mxu0 0.0
        %1580 = vmatpush1.msra.mxu0 0.0
        %1581 = vmatprep.subr.mxu0 0.0
        %1582 = vmatpush1.msra.mxu0 0.0
        %1583 = vmatprep.subr.mxu0 0.0
        %1584 = vmatpush1.msra.mxu0 0.0
        %1585 = vmatprep.subr.mxu0 0.0
        %1586 = vmatpush1.msra.mxu0 0.0
        %1587 = vmatprep.subr.mxu0 0.0
        %1588 = vmatpush1.msra.mxu0 0.0
        %1589 = vmatprep.subr.mxu0 0.0
        %1590 = vmatpush1.msra.mxu0 0.0
        %1591 = vmatprep.subr.mxu0 0.0
        %1592 = vmatpush1.msra.mxu0 0.0
        %1593 = vmatprep.subr.mxu0 0.0
        %1594 = vmatpush1.msra.mxu0 0.0
        %1595 = vmatprep.subr.mxu0 0.0
        %1596 = vmatpush1.msra.mxu0 0.0
        %1597 = vmatprep.subr.mxu0 0.0
        %1598 = vmatpush1.msra.mxu0 0.0
        %1599 = vmatprep.subr.mxu0 0.0
        %1600 = vmatpush1.msra.mxu0 0.0
        %1601 = vmatprep.subr.mxu0 0.0
        %1602 = vmatpush1.msra.mxu0 0.0
        %1603 = vmatprep.subr.mxu0 0.0
        %1604 = vmatpush1.msra.mxu0 0.0
        %1605 = vmatprep.subr.mxu0 0.0
        %1606 = vmatpush1.msra.mxu0 0.0
        %1607 = vmatprep.subr.mxu0 0.0
        %1608 = vmatpush1.msra.mxu0 0.0
        %1609 = vmatprep.subr.mxu0 0.0
        %1610 = vmatpush1.msra.mxu0 0.0
        %1611 = vmatprep.subr.mxu0 0.0
        %1612 = vmatpush1.msra.mxu0 0.0
        %1613 = vmatprep.subr.mxu0 0.0
        %1614 = vmatpush1.msra.mxu0 0.0
        %1615 = vmatprep.subr.mxu0 0.0
        %1616 = vmatpush1.msra.mxu0 0.0
        %1617 = vmatprep.subr.mxu0 0.0
        %1618 = vmatpush1.msra.mxu0 0.0
        %1619 = vmatprep.subr.mxu0 0.0
        %1620 = vmatpush1.msra.mxu0 0.0
        %1621 = vmatprep.mubr.f32.mxu0 0.0
        %1622 = vmatmul.mubr.f32.gmra.mrb[0].mxu0 %v1555
        %v1623 = vpop.f32.mrb[0].mxu0
        %v1624 = vadd.f32 0.0, %v1623
        %v1625 = vpop.f32.mrb[0].mxu0
        %1626 = vdwg.mxu0
        %v1627 = vadd.f32 %v1455, %v1624
        %v1628 = vlaneseq
        %v1629 = vshrl.u32 %v1628, 7
        %v1630 = vsub.s32 1, %v1629
        %v1631 = vrot.slane %v1349, %v1630
        %v1632 = vadd.f32 %v1627, %v1631
        %v1633 = vsel %vm427, %v1632, 0.0
        %1634 = vadd.xlane.f32.xlu0 %v1633
        %v1635 = vpop.xlane.xlu0 %1634
        %v1636 = vmul.f32 %v1635, %v1434
        %v1637 = vsub.f32 %v1632, %v1636
        %v1638 = vmul.f32 %v1637, %v1637
        %v1639 = vsel %vm427, %v1638, 0.0
        %1640 = vadd.xlane.f32.xlu0 %v1639
        %v1641 = vpop.xlane.xlu0 %1640
        %v1642 = vmul.f32 %v1641, %v1434
        %v1643 = vadd.f32 %v1642, 1e-05
        %v1644 = vrsqrt.pop %v1643
        %v1645 = vmul.f32 %v1637, %v1644
        %v1646 = vlaneseq
        %v1647 = vshrl.u32 %v1646, 7
        %v1648 = vsub.s32 4, %v1647
        %v1649 = vrot.slane %v1349, %v1648
        %v1650 = vmul.f32 %v1645, %v1649
        %v1651 = vlaneseq
        %v1652 = vshrl.u32 %v1651, 7
        %v1653 = vsub.s32 5, %v1652
        %v1654 = vrot.slane %v1349, %v1653
        %v1655 = vadd.f32 %v1650, %v1654
        %1656 = vst.msk [vmem:[%s416] sm:$0xff] %vm427, %v1655
        %s1657 = sand.u32 %s252, 1
        %s1658 = scalar_lea.sflag [#allocation4], %s1657
        %s1659 = sand.u32 %s252, 1
        %s1660 = smul.addr %s1659, 8
        %s1661 = scalar_lea.vmem [#allocation10], %s1660
        // Predicated region
        $region77: #{tpu_custom_call.1} parent=59 // pred_check
          %p1662 = pneg %p262
        $region78: #{tpu_custom_call.1} parent=59 // pred_check_branch
          %1664 = sbr.rel (%p1662) target = $region80
        $region79: #{tpu_custom_call.1} parent=59 // pred_region
          %s1666 = ssub.s32 128, 128
          %1667 = vsyncadd %s1658, %s1666
          %s1668 = smul.addr %s29, 128
          %s1669 = scalar_lea.hbm %s10, %s1668
          %s1671 = sshll.u32 %s1661, 4
          %s1672 = int_to_ptr.vmem [resolvable:$true] %s1671
          %1674 = dma.vmem_to_hbm [thread:$0]  %s1672, 128, %s1669, %s1658
        $region80: #{tpu_custom_call.1} parent=59 // pred_fallthru
          _
      $region60: #{tpu_custom_call.1} parent=5 // pred_fallthru
        _
      %p1675 = scmp.le.s32.totalorder 2, %s24
      // Predicated region
      $region81: #{tpu_custom_call.1} parent=5 // pred_check
        %p1676 = pneg %p1675
      $region82: #{tpu_custom_call.1} parent=5 // pred_check_branch
        %1678 = sbr.rel (%p1676) target = $region84
      $region83: #{tpu_custom_call.1} parent=5 // pred_region
        %s1679 = ssub.s32 %s24, 2
        // Predicated region
        $region85: #{tpu_custom_call.1} parent=83 // pred_check
          %p1680 = pneg %p268
        $region86: #{tpu_custom_call.1} parent=83 // pred_check_branch
          %1682 = sbr.rel (%p1680) target = $region88
        $region87: #{tpu_custom_call.1} parent=83 // pred_region
          %s1683 = sand.u32 %s253, 1
          %s1684 = scalar_lea.sflag [#allocation4], %s1683
          %s1685 = sand.u32 %s253, 1
          %s1686 = smul.addr %s1685, 8
          %s1687 = scalar_lea.vmem [#allocation10], %s1686
          %1688 = dma.done %s1684, 128
        $region88: #{tpu_custom_call.1} parent=83 // pred_fallthru
          _
      $region84: #{tpu_custom_call.1} parent=5 // pred_fallthru
        _
    $region6: #{tpu_custom_call.1} parent=1 // loop_footer
      %s28 = sadd.s32 1, %s24
    $region7: #{tpu_custom_call.1} parent=1 // loop_footer_branch
      %23 = sbr.rel target = $region3
    $region8: #{tpu_custom_call.1} parent=1 // loop_exit
      _
    %1689 = vsyncpa [#allocation3], 1
    %s1690 = scalar_lea.sflag [#allocation3], 1
    %1691 = vsyncpa %s1690, 1
    %1692 = vsyncpa [#allocation6], 1
    %1693 = vsyncpa [#allocation9], 1
    %1694 = vsyncpa [#allocation4], 1
    %s1695 = scalar_lea.sflag [#allocation4], 1
    %1696 = vsyncpa %s1695, 1

</llo_original>
